<compile_context>
chip_gen: v6e
topology: v6e:2x2x1
jax: 0.10.0
libtpu: 0.0.40
codegen_flags: <defaults>
</compile_context>

<pallas_src>
import jax
import jax.numpy as jnp
from jax.experimental import pallas as pl
from jax.experimental.pallas import tpu as pltpu


# ---------------------------------------------------------------------------
# Host-side weight re-layout: conv weight -> "banded" GEMM matrices
# ---------------------------------------------------------------------------
def banded_conv_mats(w, in_cols):
    """w: (Cout, Cin, KH, KW) conv weight.

    Input lanes pack (col, ci) as col*Cin + ci; output lanes pack (pw, co) as
    pw*Cout + co.  Returns (Be, Bo), each (KH, in_cols*Cin, PW*Cout) f32, where
    Be produces even conv-output columns (ow = 2*pw) and Bo odd ones (ow = 2*pw+1):
        conv_out[oh, ow, co] = sum_kh ( x_rows[kh:kh+OH] @ B[kh] )[oh, pw*Cout+co]
    """
    Cout, Cin, KH, KW = w.shape
    OW = in_cols - KW + 1
    PW = OW // 2
    rows = in_cols * Cin
    cols = PW * Cout

    r = jnp.arange(rows)
    iw = r // Cin                      # input column of this lane
    ci = r % Cin                       # input channel of this lane
    c = jnp.arange(cols)
    pw = c // Cout                     # pooled output column
    co = c % Cout                      # output channel

    def build(dw):
        off = iw[:, None] - (2 * pw + dw)[None, :]          # = kw  (rows, cols)
        valid = (off >= 0) & (off < KW)
        offc = jnp.clip(off, 0, KW - 1)
        mats = []
        for kh in range(KH):
            vals = w[co[None, :], ci[:, None], kh, offc]     # (rows, cols)
            mats.append(jnp.where(valid, vals, 0.0))
        return jnp.stack(mats, axis=0).astype(jnp.float32)

    return build(0), build(1)


# ---------------------------------------------------------------------------
# The single fused Pallas kernel (one image per grid step)
# ---------------------------------------------------------------------------
def _make_kernel(H, W, C1, C2, KH):
    OH1, OW1 = H - KH + 1, W - KH + 1
    PH1, PW1 = OH1 // 2, OW1 // 2
    OH2, OW2 = PH1 - KH + 1, PW1 - KH + 1
    PH2, PW2 = OH2 // 2, OW2 // 2

    def kernel(x_ref, b1e_ref, b1o_ref, bias1_ref,
               b2e_ref, b2o_ref, bias2_ref, wfc_ref, bfc_ref, out_ref):
        x = x_ref[0]                                            # (H, W) f32

        # ---- conv1 as banded GEMMs, split by output-column parity -----------
        ye = jnp.zeros((OH1, PW1 * C1), jnp.float32)
        yo = jnp.zeros((OH1, PW1 * C1), jnp.float32)
        for kh in range(KH):
            xs = x[kh:kh + OH1, :]                              # (OH1, W)
            ye = ye + jnp.dot(xs, b1e_ref[kh], preferred_element_type=jnp.float32)
            yo = yo + jnp.dot(xs, b1o_ref[kh], preferred_element_type=jnp.float32)
        # W-direction max-pool (= max over column parity) + bias
        yw = jnp.maximum(ye, yo) + bias1_ref[...]               # (OH1, PW1*C1)
        # H-direction max-pool: shifted row-max, then keep even rows
        hm = jnp.maximum(yw[:OH1 - 1, :], yw[1:, :])            # hm[i] = max(row i, i+1)
        x2 = jnp.concatenate([hm[2 * i:2 * i + 1, :] for i in range(PH1)], axis=0)
        x2 = jnp.maximum(x2, 0.0)                               # ReLU; (PH1, PW1*C1)

        # ---- conv2, same scheme ---------------------------------------------
        ye2 = jnp.zeros((OH2, PW2 * C2), jnp.float32)
        yo2 = jnp.zeros((OH2, PW2 * C2), jnp.float32)
        for kh in range(KH):
            xs2 = x2[kh:kh + OH2, :]                            # (OH2, PW1*C1)
            ye2 = ye2 + jnp.dot(xs2, b2e_ref[kh], preferred_element_type=jnp.float32)
            yo2 = yo2 + jnp.dot(xs2, b2o_ref[kh], preferred_element_type=jnp.float32)
        yw2 = jnp.maximum(ye2, yo2) + bias2_ref[...]            # (OH2, PW2*C2)
        hm2 = jnp.maximum(yw2[:OH2 - 1, :], yw2[1:, :])
        p2 = jnp.concatenate([hm2[2 * i:2 * i + 1, :] for i in range(PH2)], axis=0)
        p2 = jnp.maximum(p2, 0.0)                               # (PH2, PW2*C2)

        # ---- fc epilogue (weights pre-permuted to the (h, w*C+c) layout) -----
        acc = bfc_ref[...]                                      # (1, n_classes)
        for h in range(PH2):
            acc = acc + jnp.dot(p2[h:h + 1, :], wfc_ref[h],
                                preferred_element_type=jnp.float32)
        out_ref[0] = acc

    return kernel


# ---------------------------------------------------------------------------
# Forward wrapper
# ---------------------------------------------------------------------------
def cnet_forward(x_nchw, params):
    w1, b1, w2, b2, wfc, bfc = params
    N, Cin, H, W = x_nchw.shape
    C1, _, KH, _ = w1.shape
    C2 = w2.shape[0]
    OH1, OW1 = H - KH + 1, W - KH + 1
    PH1, PW1 = OH1 // 2, OW1 // 2
    OH2, OW2 = PH1 - KH + 1, PW1 - KH + 1
    PH2, PW2 = OH2 // 2, OW2 // 2
    n_cls = wfc.shape[0]
    assert Cin == 1 and wfc.shape[1] == C2 * PH2 * PW2

    x2d = x_nchw[:, 0].astype(jnp.float32)                      # (N, H, W)
    B1e, B1o = banded_conv_mats(w1.astype(jnp.float32), in_cols=W)
    B2e, B2o = banded_conv_mats(w2.astype(jnp.float32), in_cols=PW1)
    b1p = jnp.tile(b1.astype(jnp.float32), PW1).reshape(1, PW1 * C1)
    b2p = jnp.tile(b2.astype(jnp.float32), PW2).reshape(1, PW2 * C2)
    # PyTorch flattens NCHW -> feature = c*PH2*PW2 + h*PW2 + w; re-lay to (h, w*C2+c, o)
    wfc_r = (wfc.astype(jnp.float32)
             .reshape(n_cls, C2, PH2, PW2)
             .transpose(2, 3, 1, 0)
             .reshape(PH2, PW2 * C2, n_cls))
    bfc_r = bfc.astype(jnp.float32).reshape(1, n_cls)

    def const_spec(shape):
        return pl.BlockSpec(shape, lambda n: (0,) * len(shape))

    kernel = _make_kernel(H, W, C1, C2, KH)
    out = pl.pallas_call(
        kernel,
        out_shape=jax.ShapeDtypeStruct((N, 1, n_cls), jnp.float32),
        grid=(N,),
        in_specs=[
            pl.BlockSpec((1, H, W), lambda n: (n, 0, 0)),        # image n
            const_spec(B1e.shape), const_spec(B1o.shape), const_spec(b1p.shape),
            const_spec(B2e.shape), const_spec(B2o.shape), const_spec(b2p.shape),
            const_spec(wfc_r.shape), const_spec(bfc_r.shape),
        ],
        out_specs=pl.BlockSpec((1, 1, n_cls), lambda n: (n, 0, 0)),
        compiler_params=pltpu.CompilerParams(
            dimension_semantics=("parallel",)),                  # shard batch over TCs (v7x)
    )(x2d, B1e, B1o, b1p, B2e, B2o, b2p, wfc_r, bfc_r)
    return out.reshape(N, n_cls)


# ---------------------------------------------------------------------------
# Pure-JAX reference (NCHW, matches PyTorch semantics)
# ---------------------------------------------------------------------------
def ref_forward(x_nchw, params):
    w1, b1, w2, b2, wfc, bfc = params
    hp = jax.lax.Precision.HIGHEST

    def conv(x, w, b):
        y = jax.lax.conv_general_dilated(
            x, w, (1, 1), "VALID",
            dimension_numbers=("NCHW", "OIHW", "NCHW"), precision=hp)
        return y + b.reshape(1, -1, 1, 1)

    def pool(x):
        return jax.lax.reduce_window(
            x, -jnp.inf, jax.lax.max, (1, 1, 2, 2), (1, 1, 2, 2), "VALID")

    h = pool(jnp.maximum(conv(x_nchw, w1, b1), 0.0))
    h = pool(jnp.maximum(conv(h, w2, b2), 0.0))
    h = h.reshape(h.shape[0], -1)
    return jnp.dot(h, wfc.T, precision=hp) + bfc


# ---------------------------------------------------------------------------
if __name__ == "__main__":
    key = jax.random.PRNGKey(0)
    k_x, k_w1, k_b1, k_w2, k_b2, k_wf, k_bf = jax.random.split(key, 7)

    # Input: (N=2, C=1, H=28, W=44) -> final pooled spatial 4x8 -> 320 features
    x = jax.random.normal(k_x, (2, 1, 28, 44), dtype=jnp.float32)

    params = (
        jax.random.normal(k_w1, (10, 1, 5, 5), dtype=jnp.float32) * 0.1,   # conv1.weight
        jax.random.normal(k_b1, (10,), dtype=jnp.float32) * 0.1,           # conv1.bias
        jax.random.normal(k_w2, (10, 10, 5, 5), dtype=jnp.float32) * 0.1,  # conv2.weight
        jax.random.normal(k_b2, (10,), dtype=jnp.float32) * 0.1,           # conv2.bias
        jax.random.normal(k_wf, (10, 320), dtype=jnp.float32) * 0.05,      # fc.weight
        jax.random.normal(k_bf, (10,), dtype=jnp.float32) * 0.05,          # fc.bias
    )

    fwd = jax.jit(cnet_forward)
    out = jax.block_until_ready(fwd(x, params))
    ref = jax.block_until_ready(ref_forward(x, params))

    assert out.shape == (2, 10), out.shape
    err = float(jnp.max(jnp.abs(out - ref)))
    assert jnp.allclose(out, ref, atol=2e-3, rtol=2e-3), ("mismatch", err)
    print("KERNEL_OK")
</pallas_src>

<mosaic_0001>
module attributes {stable_mosaic.version = 11 : i64} {
  func.func @kernel(%arg0: i32, %arg1: memref<1x28x44xf32, #tpu.memory_space<vmem>>, %arg2: memref<5x44x200xf32, #tpu.memory_space<vmem>>, %arg3: memref<5x44x200xf32, #tpu.memory_space<vmem>>, %arg4: memref<1x200xf32, #tpu.memory_space<vmem>>, %arg5: memref<5x200x80xf32, #tpu.memory_space<vmem>>, %arg6: memref<5x200x80xf32, #tpu.memory_space<vmem>>, %arg7: memref<1x80xf32, #tpu.memory_space<vmem>>, %arg8: memref<4x80x10xf32, #tpu.memory_space<vmem>>, %arg9: memref<1x10xf32, #tpu.memory_space<vmem>>, %arg10: memref<1x1x10xf32, #tpu.memory_space<vmem>>) attributes {dimension_semantics = [#tpu.dimension_semantics<parallel>], iteration_bounds = array<i64: 2>, scalar_prefetch = 0 : i64, scratch_operands = 0 : i64, tpu.core_type = #tpu.core_type<tc>, window_params = [{transform_indices = @transform_0, window_bounds = array<i64: 1, 28, 44>}, {pipeline_mode = #tpu.pipeline_mode<synchronous>, transform_indices = @transform_1, window_bounds = array<i64: 5, 44, 200>}, {pipeline_mode = #tpu.pipeline_mode<synchronous>, transform_indices = @transform_2, window_bounds = array<i64: 5, 44, 200>}, {pipeline_mode = #tpu.pipeline_mode<synchronous>, transform_indices = @transform_3, window_bounds = array<i64: 1, 200>}, {pipeline_mode = #tpu.pipeline_mode<synchronous>, transform_indices = @transform_4, window_bounds = array<i64: 5, 200, 80>}, {pipeline_mode = #tpu.pipeline_mode<synchronous>, transform_indices = @transform_5, window_bounds = array<i64: 5, 200, 80>}, {pipeline_mode = #tpu.pipeline_mode<synchronous>, transform_indices = @transform_6, window_bounds = array<i64: 1, 80>}, {pipeline_mode = #tpu.pipeline_mode<synchronous>, transform_indices = @transform_7, window_bounds = array<i64: 4, 80, 10>}, {pipeline_mode = #tpu.pipeline_mode<synchronous>, transform_indices = @transform_8, window_bounds = array<i64: 1, 10>}, {transform_indices = @transform_9, window_bounds = array<i64: 1, 1, 10>}]} {
    %c0 = arith.constant 0 : index
    %c0_0 = arith.constant 0 : index
    %c0_1 = arith.constant 0 : index
    %0 = vector.load %arg1[%c0, %c0_0, %c0_1] : memref<1x28x44xf32, #tpu.memory_space<vmem>>, vector<1x28x44xf32>
    %1 = vector.shape_cast %0 : vector<1x28x44xf32> to vector<28x44xf32>
    %cst = arith.constant 0.000000e+00 : f32
    %2 = vector.broadcast %cst : f32 to vector<24x200xf32>
    %cst_2 = arith.constant 0.000000e+00 : f32
    %3 = vector.broadcast %cst_2 : f32 to vector<24x200xf32>
    %4 = vector.extract_strided_slice %1 {offsets = [0, 0], sizes = [24, 44], strides = [1, 1]} : vector<28x44xf32> to vector<24x44xf32>
    %c0_3 = arith.constant 0 : index
    %c0_4 = arith.constant 0 : index
    %c0_5 = arith.constant 0 : index
    %5 = vector.load %arg2[%c0_3, %c0_4, %c0_5] : memref<5x44x200xf32, #tpu.memory_space<vmem>>, vector<1x44x200xf32>
    %6 = vector.shape_cast %5 : vector<1x44x200xf32> to vector<44x200xf32>
    %cst_6 = arith.constant dense<0.000000e+00> : vector<24x200xf32>
    %7 = tpu.matmul %4, %6, %cst_6 {dimension_numbers = #tpu.dot_dimension_numbers<[1], [0], [0], [1], [0, 0, 1, 1], [], []>} : vector<24x44xf32>, vector<44x200xf32>, vector<24x200xf32> -> vector<24x200xf32>
    %8 = arith.addf %2, %7 : vector<24x200xf32>
    %c0_7 = arith.constant 0 : index
    %c0_8 = arith.constant 0 : index
    %c0_9 = arith.constant 0 : index
    %9 = vector.load %arg3[%c0_7, %c0_8, %c0_9] : memref<5x44x200xf32, #tpu.memory_space<vmem>>, vector<1x44x200xf32>
    %10 = vector.shape_cast %9 : vector<1x44x200xf32> to vector<44x200xf32>
    %cst_10 = arith.constant dense<0.000000e+00> : vector<24x200xf32>
    %11 = tpu.matmul %4, %10, %cst_10 {dimension_numbers = #tpu.dot_dimension_numbers<[1], [0], [0], [1], [0, 0, 1, 1], [], []>} : vector<24x44xf32>, vector<44x200xf32>, vector<24x200xf32> -> vector<24x200xf32>
    %12 = arith.addf %3, %11 : vector<24x200xf32>
    %13 = vector.extract_strided_slice %1 {offsets = [1, 0], sizes = [24, 44], strides = [1, 1]} : vector<28x44xf32> to vector<24x44xf32>
    %c1 = arith.constant 1 : index
    %c0_11 = arith.constant 0 : index
    %c0_12 = arith.constant 0 : index
    %14 = vector.load %arg2[%c1, %c0_11, %c0_12] : memref<5x44x200xf32, #tpu.memory_space<vmem>>, vector<1x44x200xf32>
    %15 = vector.shape_cast %14 : vector<1x44x200xf32> to vector<44x200xf32>
    %cst_13 = arith.constant dense<0.000000e+00> : vector<24x200xf32>
    %16 = tpu.matmul %13, %15, %cst_13 {dimension_numbers = #tpu.dot_dimension_numbers<[1], [0], [0], [1], [0, 0, 1, 1], [], []>} : vector<24x44xf32>, vector<44x200xf32>, vector<24x200xf32> -> vector<24x200xf32>
    %17 = arith.addf %8, %16 : vector<24x200xf32>
    %c1_14 = arith.constant 1 : index
    %c0_15 = arith.constant 0 : index
    %c0_16 = arith.constant 0 : index
    %18 = vector.load %arg3[%c1_14, %c0_15, %c0_16] : memref<5x44x200xf32, #tpu.memory_space<vmem>>, vector<1x44x200xf32>
    %19 = vector.shape_cast %18 : vector<1x44x200xf32> to vector<44x200xf32>
    %cst_17 = arith.constant dense<0.000000e+00> : vector<24x200xf32>
    %20 = tpu.matmul %13, %19, %cst_17 {dimension_numbers = #tpu.dot_dimension_numbers<[1], [0], [0], [1], [0, 0, 1, 1], [], []>} : vector<24x44xf32>, vector<44x200xf32>, vector<24x200xf32> -> vector<24x200xf32>
    %21 = arith.addf %12, %20 : vector<24x200xf32>
    %22 = vector.extract_strided_slice %1 {offsets = [2, 0], sizes = [24, 44], strides = [1, 1]} : vector<28x44xf32> to vector<24x44xf32>
    %c2 = arith.constant 2 : index
    %c0_18 = arith.constant 0 : index
    %c0_19 = arith.constant 0 : index
    %23 = vector.load %arg2[%c2, %c0_18, %c0_19] : memref<5x44x200xf32, #tpu.memory_space<vmem>>, vector<1x44x200xf32>
    %24 = vector.shape_cast %23 : vector<1x44x200xf32> to vector<44x200xf32>
    %cst_20 = arith.constant dense<0.000000e+00> : vector<24x200xf32>
    %25 = tpu.matmul %22, %24, %cst_20 {dimension_numbers = #tpu.dot_dimension_numbers<[1], [0], [0], [1], [0, 0, 1, 1], [], []>} : vector<24x44xf32>, vector<44x200xf32>, vector<24x200xf32> -> vector<24x200xf32>
    %26 = arith.addf %17, %25 : vector<24x200xf32>
    %c2_21 = arith.constant 2 : index
    %c0_22 = arith.constant 0 : index
    %c0_23 = arith.constant 0 : index
    %27 = vector.load %arg3[%c2_21, %c0_22, %c0_23] : memref<5x44x200xf32, #tpu.memory_space<vmem>>, vector<1x44x200xf32>
    %28 = vector.shape_cast %27 : vector<1x44x200xf32> to vector<44x200xf32>
    %cst_24 = arith.constant dense<0.000000e+00> : vector<24x200xf32>
    %29 = tpu.matmul %22, %28, %cst_24 {dimension_numbers = #tpu.dot_dimension_numbers<[1], [0], [0], [1], [0, 0, 1, 1], [], []>} : vector<24x44xf32>, vector<44x200xf32>, vector<24x200xf32> -> vector<24x200xf32>
    %30 = arith.addf %21, %29 : vector<24x200xf32>
    %31 = vector.extract_strided_slice %1 {offsets = [3, 0], sizes = [24, 44], strides = [1, 1]} : vector<28x44xf32> to vector<24x44xf32>
    %c3 = arith.constant 3 : index
    %c0_25 = arith.constant 0 : index
    %c0_26 = arith.constant 0 : index
    %32 = vector.load %arg2[%c3, %c0_25, %c0_26] : memref<5x44x200xf32, #tpu.memory_space<vmem>>, vector<1x44x200xf32>
    %33 = vector.shape_cast %32 : vector<1x44x200xf32> to vector<44x200xf32>
    %cst_27 = arith.constant dense<0.000000e+00> : vector<24x200xf32>
    %34 = tpu.matmul %31, %33, %cst_27 {dimension_numbers = #tpu.dot_dimension_numbers<[1], [0], [0], [1], [0, 0, 1, 1], [], []>} : vector<24x44xf32>, vector<44x200xf32>, vector<24x200xf32> -> vector<24x200xf32>
    %35 = arith.addf %26, %34 : vector<24x200xf32>
    %c3_28 = arith.constant 3 : index
    %c0_29 = arith.constant 0 : index
    %c0_30 = arith.constant 0 : index
    %36 = vector.load %arg3[%c3_28, %c0_29, %c0_30] : memref<5x44x200xf32, #tpu.memory_space<vmem>>, vector<1x44x200xf32>
    %37 = vector.shape_cast %36 : vector<1x44x200xf32> to vector<44x200xf32>
    %cst_31 = arith.constant dense<0.000000e+00> : vector<24x200xf32>
    %38 = tpu.matmul %31, %37, %cst_31 {dimension_numbers = #tpu.dot_dimension_numbers<[1], [0], [0], [1], [0, 0, 1, 1], [], []>} : vector<24x44xf32>, vector<44x200xf32>, vector<24x200xf32> -> vector<24x200xf32>
    %39 = arith.addf %30, %38 : vector<24x200xf32>
    %40 = vector.extract_strided_slice %1 {offsets = [4, 0], sizes = [24, 44], strides = [1, 1]} : vector<28x44xf32> to vector<24x44xf32>
    %c4 = arith.constant 4 : index
    %c0_32 = arith.constant 0 : index
    %c0_33 = arith.constant 0 : index
    %41 = vector.load %arg2[%c4, %c0_32, %c0_33] : memref<5x44x200xf32, #tpu.memory_space<vmem>>, vector<1x44x200xf32>
    %42 = vector.shape_cast %41 : vector<1x44x200xf32> to vector<44x200xf32>
    %cst_34 = arith.constant dense<0.000000e+00> : vector<24x200xf32>
    %43 = tpu.matmul %40, %42, %cst_34 {dimension_numbers = #tpu.dot_dimension_numbers<[1], [0], [0], [1], [0, 0, 1, 1], [], []>} : vector<24x44xf32>, vector<44x200xf32>, vector<24x200xf32> -> vector<24x200xf32>
    %44 = arith.addf %35, %43 : vector<24x200xf32>
    %c4_35 = arith.constant 4 : index
    %c0_36 = arith.constant 0 : index
    %c0_37 = arith.constant 0 : index
    %45 = vector.load %arg3[%c4_35, %c0_36, %c0_37] : memref<5x44x200xf32, #tpu.memory_space<vmem>>, vector<1x44x200xf32>
    %46 = vector.shape_cast %45 : vector<1x44x200xf32> to vector<44x200xf32>
    %cst_38 = arith.constant dense<0.000000e+00> : vector<24x200xf32>
    %47 = tpu.matmul %40, %46, %cst_38 {dimension_numbers = #tpu.dot_dimension_numbers<[1], [0], [0], [1], [0, 0, 1, 1], [], []>} : vector<24x44xf32>, vector<44x200xf32>, vector<24x200xf32> -> vector<24x200xf32>
    %48 = arith.addf %39, %47 : vector<24x200xf32>
    %49 = arith.maximumf %44, %48 : vector<24x200xf32>
    %c0_39 = arith.constant 0 : index
    %c0_40 = arith.constant 0 : index
    %50 = vector.load %arg4[%c0_39, %c0_40] : memref<1x200xf32, #tpu.memory_space<vmem>>, vector<1x200xf32>
    %51 = vector.broadcast %50 : vector<1x200xf32> to vector<24x200xf32>
    %52 = arith.addf %49, %51 : vector<24x200xf32>
    %53 = vector.extract_strided_slice %52 {offsets = [0, 0], sizes = [23, 200], strides = [1, 1]} : vector<24x200xf32> to vector<23x200xf32>
    %54 = vector.extract_strided_slice %52 {offsets = [1, 0], sizes = [23, 200], strides = [1, 1]} : vector<24x200xf32> to vector<23x200xf32>
    %55 = arith.maximumf %53, %54 : vector<23x200xf32>
    %56 = vector.extract_strided_slice %55 {offsets = [0, 0], sizes = [1, 200], strides = [1, 1]} : vector<23x200xf32> to vector<1x200xf32>
    %57 = vector.extract_strided_slice %55 {offsets = [2, 0], sizes = [1, 200], strides = [1, 1]} : vector<23x200xf32> to vector<1x200xf32>
    %58 = vector.extract_strided_slice %55 {offsets = [4, 0], sizes = [1, 200], strides = [1, 1]} : vector<23x200xf32> to vector<1x200xf32>
    %59 = vector.extract_strided_slice %55 {offsets = [6, 0], sizes = [1, 200], strides = [1, 1]} : vector<23x200xf32> to vector<1x200xf32>
    %60 = vector.extract_strided_slice %55 {offsets = [8, 0], sizes = [1, 200], strides = [1, 1]} : vector<23x200xf32> to vector<1x200xf32>
    %61 = vector.extract_strided_slice %55 {offsets = [10, 0], sizes = [1, 200], strides = [1, 1]} : vector<23x200xf32> to vector<1x200xf32>
    %62 = vector.extract_strided_slice %55 {offsets = [12, 0], sizes = [1, 200], strides = [1, 1]} : vector<23x200xf32> to vector<1x200xf32>
    %63 = vector.extract_strided_slice %55 {offsets = [14, 0], sizes = [1, 200], strides = [1, 1]} : vector<23x200xf32> to vector<1x200xf32>
    %64 = vector.extract_strided_slice %55 {offsets = [16, 0], sizes = [1, 200], strides = [1, 1]} : vector<23x200xf32> to vector<1x200xf32>
    %65 = vector.extract_strided_slice %55 {offsets = [18, 0], sizes = [1, 200], strides = [1, 1]} : vector<23x200xf32> to vector<1x200xf32>
    %66 = vector.extract_strided_slice %55 {offsets = [20, 0], sizes = [1, 200], strides = [1, 1]} : vector<23x200xf32> to vector<1x200xf32>
    %67 = vector.extract_strided_slice %55 {offsets = [22, 0], sizes = [1, 200], strides = [1, 1]} : vector<23x200xf32> to vector<1x200xf32>
    %68 = tpu.concatenate %56, %57, %58, %59, %60, %61, %62, %63, %64, %65, %66, %67 in 0 : vector<1x200xf32>, vector<1x200xf32>, vector<1x200xf32>, vector<1x200xf32>, vector<1x200xf32>, vector<1x200xf32>, vector<1x200xf32>, vector<1x200xf32>, vector<1x200xf32>, vector<1x200xf32>, vector<1x200xf32>, vector<1x200xf32> -> vector<12x200xf32>
    %cst_41 = arith.constant 0.000000e+00 : f32
    %69 = vector.broadcast %cst_41 : f32 to vector<12x200xf32>
    %70 = arith.maximumf %68, %69 : vector<12x200xf32>
    %cst_42 = arith.constant 0.000000e+00 : f32
    %71 = vector.broadcast %cst_42 : f32 to vector<8x80xf32>
    %cst_43 = arith.constant 0.000000e+00 : f32
    %72 = vector.broadcast %cst_43 : f32 to vector<8x80xf32>
    %73 = vector.extract_strided_slice %70 {offsets = [0, 0], sizes = [8, 200], strides = [1, 1]} : vector<12x200xf32> to vector<8x200xf32>
    %c0_44 = arith.constant 0 : index
    %c0_45 = arith.constant 0 : index
    %c0_46 = arith.constant 0 : index
    %74 = vector.load %arg5[%c0_44, %c0_45, %c0_46] : memref<5x200x80xf32, #tpu.memory_space<vmem>>, vector<1x200x80xf32>
    %75 = vector.shape_cast %74 : vector<1x200x80xf32> to vector<200x80xf32>
    %cst_47 = arith.constant dense<0.000000e+00> : vector<8x80xf32>
    %76 = tpu.matmul %73, %75, %cst_47 {dimension_numbers = #tpu.dot_dimension_numbers<[1], [0], [0], [1], [0, 0, 1, 1], [], []>} : vector<8x200xf32>, vector<200x80xf32>, vector<8x80xf32> -> vector<8x80xf32>
    %77 = arith.addf %71, %76 : vector<8x80xf32>
    %c0_48 = arith.constant 0 : index
    %c0_49 = arith.constant 0 : index
    %c0_50 = arith.constant 0 : index
    %78 = vector.load %arg6[%c0_48, %c0_49, %c0_50] : memref<5x200x80xf32, #tpu.memory_space<vmem>>, vector<1x200x80xf32>
    %79 = vector.shape_cast %78 : vector<1x200x80xf32> to vector<200x80xf32>
    %cst_51 = arith.constant dense<0.000000e+00> : vector<8x80xf32>
    %80 = tpu.matmul %73, %79, %cst_51 {dimension_numbers = #tpu.dot_dimension_numbers<[1], [0], [0], [1], [0, 0, 1, 1], [], []>} : vector<8x200xf32>, vector<200x80xf32>, vector<8x80xf32> -> vector<8x80xf32>
    %81 = arith.addf %72, %80 : vector<8x80xf32>
    %82 = vector.extract_strided_slice %70 {offsets = [1, 0], sizes = [8, 200], strides = [1, 1]} : vector<12x200xf32> to vector<8x200xf32>
    %c1_52 = arith.constant 1 : index
    %c0_53 = arith.constant 0 : index
    %c0_54 = arith.constant 0 : index
    %83 = vector.load %arg5[%c1_52, %c0_53, %c0_54] : memref<5x200x80xf32, #tpu.memory_space<vmem>>, vector<1x200x80xf32>
    %84 = vector.shape_cast %83 : vector<1x200x80xf32> to vector<200x80xf32>
    %cst_55 = arith.constant dense<0.000000e+00> : vector<8x80xf32>
    %85 = tpu.matmul %82, %84, %cst_55 {dimension_numbers = #tpu.dot_dimension_numbers<[1], [0], [0], [1], [0, 0, 1, 1], [], []>} : vector<8x200xf32>, vector<200x80xf32>, vector<8x80xf32> -> vector<8x80xf32>
    %86 = arith.addf %77, %85 : vector<8x80xf32>
    %c1_56 = arith.constant 1 : index
    %c0_57 = arith.constant 0 : index
    %c0_58 = arith.constant 0 : index
    %87 = vector.load %arg6[%c1_56, %c0_57, %c0_58] : memref<5x200x80xf32, #tpu.memory_space<vmem>>, vector<1x200x80xf32>
    %88 = vector.shape_cast %87 : vector<1x200x80xf32> to vector<200x80xf32>
    %cst_59 = arith.constant dense<0.000000e+00> : vector<8x80xf32>
    %89 = tpu.matmul %82, %88, %cst_59 {dimension_numbers = #tpu.dot_dimension_numbers<[1], [0], [0], [1], [0, 0, 1, 1], [], []>} : vector<8x200xf32>, vector<200x80xf32>, vector<8x80xf32> -> vector<8x80xf32>
    %90 = arith.addf %81, %89 : vector<8x80xf32>
    %91 = vector.extract_strided_slice %70 {offsets = [2, 0], sizes = [8, 200], strides = [1, 1]} : vector<12x200xf32> to vector<8x200xf32>
    %c2_60 = arith.constant 2 : index
    %c0_61 = arith.constant 0 : index
    %c0_62 = arith.constant 0 : index
    %92 = vector.load %arg5[%c2_60, %c0_61, %c0_62] : memref<5x200x80xf32, #tpu.memory_space<vmem>>, vector<1x200x80xf32>
    %93 = vector.shape_cast %92 : vector<1x200x80xf32> to vector<200x80xf32>
    %cst_63 = arith.constant dense<0.000000e+00> : vector<8x80xf32>
    %94 = tpu.matmul %91, %93, %cst_63 {dimension_numbers = #tpu.dot_dimension_numbers<[1], [0], [0], [1], [0, 0, 1, 1], [], []>} : vector<8x200xf32>, vector<200x80xf32>, vector<8x80xf32> -> vector<8x80xf32>
    %95 = arith.addf %86, %94 : vector<8x80xf32>
    %c2_64 = arith.constant 2 : index
    %c0_65 = arith.constant 0 : index
    %c0_66 = arith.constant 0 : index
    %96 = vector.load %arg6[%c2_64, %c0_65, %c0_66] : memref<5x200x80xf32, #tpu.memory_space<vmem>>, vector<1x200x80xf32>
    %97 = vector.shape_cast %96 : vector<1x200x80xf32> to vector<200x80xf32>
    %cst_67 = arith.constant dense<0.000000e+00> : vector<8x80xf32>
    %98 = tpu.matmul %91, %97, %cst_67 {dimension_numbers = #tpu.dot_dimension_numbers<[1], [0], [0], [1], [0, 0, 1, 1], [], []>} : vector<8x200xf32>, vector<200x80xf32>, vector<8x80xf32> -> vector<8x80xf32>
    %99 = arith.addf %90, %98 : vector<8x80xf32>
    %100 = vector.extract_strided_slice %70 {offsets = [3, 0], sizes = [8, 200], strides = [1, 1]} : vector<12x200xf32> to vector<8x200xf32>
    %c3_68 = arith.constant 3 : index
    %c0_69 = arith.constant 0 : index
    %c0_70 = arith.constant 0 : index
    %101 = vector.load %arg5[%c3_68, %c0_69, %c0_70] : memref<5x200x80xf32, #tpu.memory_space<vmem>>, vector<1x200x80xf32>
    %102 = vector.shape_cast %101 : vector<1x200x80xf32> to vector<200x80xf32>
    %cst_71 = arith.constant dense<0.000000e+00> : vector<8x80xf32>
    %103 = tpu.matmul %100, %102, %cst_71 {dimension_numbers = #tpu.dot_dimension_numbers<[1], [0], [0], [1], [0, 0, 1, 1], [], []>} : vector<8x200xf32>, vector<200x80xf32>, vector<8x80xf32> -> vector<8x80xf32>
    %104 = arith.addf %95, %103 : vector<8x80xf32>
    %c3_72 = arith.constant 3 : index
    %c0_73 = arith.constant 0 : index
    %c0_74 = arith.constant 0 : index
    %105 = vector.load %arg6[%c3_72, %c0_73, %c0_74] : memref<5x200x80xf32, #tpu.memory_space<vmem>>, vector<1x200x80xf32>
    %106 = vector.shape_cast %105 : vector<1x200x80xf32> to vector<200x80xf32>
    %cst_75 = arith.constant dense<0.000000e+00> : vector<8x80xf32>
    %107 = tpu.matmul %100, %106, %cst_75 {dimension_numbers = #tpu.dot_dimension_numbers<[1], [0], [0], [1], [0, 0, 1, 1], [], []>} : vector<8x200xf32>, vector<200x80xf32>, vector<8x80xf32> -> vector<8x80xf32>
    %108 = arith.addf %99, %107 : vector<8x80xf32>
    %109 = vector.extract_strided_slice %70 {offsets = [4, 0], sizes = [8, 200], strides = [1, 1]} : vector<12x200xf32> to vector<8x200xf32>
    %c4_76 = arith.constant 4 : index
    %c0_77 = arith.constant 0 : index
    %c0_78 = arith.constant 0 : index
    %110 = vector.load %arg5[%c4_76, %c0_77, %c0_78] : memref<5x200x80xf32, #tpu.memory_space<vmem>>, vector<1x200x80xf32>
    %111 = vector.shape_cast %110 : vector<1x200x80xf32> to vector<200x80xf32>
    %cst_79 = arith.constant dense<0.000000e+00> : vector<8x80xf32>
    %112 = tpu.matmul %109, %111, %cst_79 {dimension_numbers = #tpu.dot_dimension_numbers<[1], [0], [0], [1], [0, 0, 1, 1], [], []>} : vector<8x200xf32>, vector<200x80xf32>, vector<8x80xf32> -> vector<8x80xf32>
    %113 = arith.addf %104, %112 : vector<8x80xf32>
    %c4_80 = arith.constant 4 : index
    %c0_81 = arith.constant 0 : index
    %c0_82 = arith.constant 0 : index
    %114 = vector.load %arg6[%c4_80, %c0_81, %c0_82] : memref<5x200x80xf32, #tpu.memory_space<vmem>>, vector<1x200x80xf32>
    %115 = vector.shape_cast %114 : vector<1x200x80xf32> to vector<200x80xf32>
    %cst_83 = arith.constant dense<0.000000e+00> : vector<8x80xf32>
    %116 = tpu.matmul %109, %115, %cst_83 {dimension_numbers = #tpu.dot_dimension_numbers<[1], [0], [0], [1], [0, 0, 1, 1], [], []>} : vector<8x200xf32>, vector<200x80xf32>, vector<8x80xf32> -> vector<8x80xf32>
    %117 = arith.addf %108, %116 : vector<8x80xf32>
    %118 = arith.maximumf %113, %117 : vector<8x80xf32>
    %c0_84 = arith.constant 0 : index
    %c0_85 = arith.constant 0 : index
    %119 = vector.load %arg7[%c0_84, %c0_85] : memref<1x80xf32, #tpu.memory_space<vmem>>, vector<1x80xf32>
    %120 = vector.broadcast %119 : vector<1x80xf32> to vector<8x80xf32>
    %121 = arith.addf %118, %120 : vector<8x80xf32>
    %122 = vector.extract_strided_slice %121 {offsets = [0, 0], sizes = [7, 80], strides = [1, 1]} : vector<8x80xf32> to vector<7x80xf32>
    %123 = vector.extract_strided_slice %121 {offsets = [1, 0], sizes = [7, 80], strides = [1, 1]} : vector<8x80xf32> to vector<7x80xf32>
    %124 = arith.maximumf %122, %123 : vector<7x80xf32>
    %125 = vector.extract_strided_slice %124 {offsets = [0, 0], sizes = [1, 80], strides = [1, 1]} : vector<7x80xf32> to vector<1x80xf32>
    %126 = vector.extract_strided_slice %124 {offsets = [2, 0], sizes = [1, 80], strides = [1, 1]} : vector<7x80xf32> to vector<1x80xf32>
    %127 = vector.extract_strided_slice %124 {offsets = [4, 0], sizes = [1, 80], strides = [1, 1]} : vector<7x80xf32> to vector<1x80xf32>
    %128 = vector.extract_strided_slice %124 {offsets = [6, 0], sizes = [1, 80], strides = [1, 1]} : vector<7x80xf32> to vector<1x80xf32>
    %129 = tpu.concatenate %125, %126, %127, %128 in 0 : vector<1x80xf32>, vector<1x80xf32>, vector<1x80xf32>, vector<1x80xf32> -> vector<4x80xf32>
    %cst_86 = arith.constant 0.000000e+00 : f32
    %130 = vector.broadcast %cst_86 : f32 to vector<4x80xf32>
    %131 = arith.maximumf %129, %130 : vector<4x80xf32>
    %c0_87 = arith.constant 0 : index
    %c0_88 = arith.constant 0 : index
    %132 = vector.load %arg9[%c0_87, %c0_88] : memref<1x10xf32, #tpu.memory_space<vmem>>, vector<1x10xf32>
    %133 = vector.extract_strided_slice %131 {offsets = [0, 0], sizes = [1, 80], strides = [1, 1]} : vector<4x80xf32> to vector<1x80xf32>
    %c0_89 = arith.constant 0 : index
    %c0_90 = arith.constant 0 : index
    %c0_91 = arith.constant 0 : index
    %134 = vector.load %arg8[%c0_89, %c0_90, %c0_91] : memref<4x80x10xf32, #tpu.memory_space<vmem>>, vector<1x80x10xf32>
    %135 = vector.shape_cast %134 : vector<1x80x10xf32> to vector<80x10xf32>
    %cst_92 = arith.constant dense<0.000000e+00> : vector<1x10xf32>
    %136 = tpu.matmul %133, %135, %cst_92 {dimension_numbers = #tpu.dot_dimension_numbers<[1], [0], [0], [1], [0, 0, 1, 1], [], []>} : vector<1x80xf32>, vector<80x10xf32>, vector<1x10xf32> -> vector<1x10xf32>
    %137 = arith.addf %132, %136 : vector<1x10xf32>
    %138 = vector.extract_strided_slice %131 {offsets = [1, 0], sizes = [1, 80], strides = [1, 1]} : vector<4x80xf32> to vector<1x80xf32>
    %c1_93 = arith.constant 1 : index
    %c0_94 = arith.constant 0 : index
    %c0_95 = arith.constant 0 : index
    %139 = vector.load %arg8[%c1_93, %c0_94, %c0_95] : memref<4x80x10xf32, #tpu.memory_space<vmem>>, vector<1x80x10xf32>
    %140 = vector.shape_cast %139 : vector<1x80x10xf32> to vector<80x10xf32>
    %cst_96 = arith.constant dense<0.000000e+00> : vector<1x10xf32>
    %141 = tpu.matmul %138, %140, %cst_96 {dimension_numbers = #tpu.dot_dimension_numbers<[1], [0], [0], [1], [0, 0, 1, 1], [], []>} : vector<1x80xf32>, vector<80x10xf32>, vector<1x10xf32> -> vector<1x10xf32>
    %142 = arith.addf %137, %141 : vector<1x10xf32>
    %143 = vector.extract_strided_slice %131 {offsets = [2, 0], sizes = [1, 80], strides = [1, 1]} : vector<4x80xf32> to vector<1x80xf32>
    %c2_97 = arith.constant 2 : index
    %c0_98 = arith.constant 0 : index
    %c0_99 = arith.constant 0 : index
    %144 = vector.load %arg8[%c2_97, %c0_98, %c0_99] : memref<4x80x10xf32, #tpu.memory_space<vmem>>, vector<1x80x10xf32>
    %145 = vector.shape_cast %144 : vector<1x80x10xf32> to vector<80x10xf32>
    %cst_100 = arith.constant dense<0.000000e+00> : vector<1x10xf32>
    %146 = tpu.matmul %143, %145, %cst_100 {dimension_numbers = #tpu.dot_dimension_numbers<[1], [0], [0], [1], [0, 0, 1, 1], [], []>} : vector<1x80xf32>, vector<80x10xf32>, vector<1x10xf32> -> vector<1x10xf32>
    %147 = arith.addf %142, %146 : vector<1x10xf32>
    %148 = vector.extract_strided_slice %131 {offsets = [3, 0], sizes = [1, 80], strides = [1, 1]} : vector<4x80xf32> to vector<1x80xf32>
    %c3_101 = arith.constant 3 : index
    %c0_102 = arith.constant 0 : index
    %c0_103 = arith.constant 0 : index
    %149 = vector.load %arg8[%c3_101, %c0_102, %c0_103] : memref<4x80x10xf32, #tpu.memory_space<vmem>>, vector<1x80x10xf32>
    %150 = vector.shape_cast %149 : vector<1x80x10xf32> to vector<80x10xf32>
    %cst_104 = arith.constant dense<0.000000e+00> : vector<1x10xf32>
    %151 = tpu.matmul %148, %150, %cst_104 {dimension_numbers = #tpu.dot_dimension_numbers<[1], [0], [0], [1], [0, 0, 1, 1], [], []>} : vector<1x80xf32>, vector<80x10xf32>, vector<1x10xf32> -> vector<1x10xf32>
    %152 = arith.addf %147, %151 : vector<1x10xf32>
    %c0_105 = arith.constant 0 : index
    %c0_106 = arith.constant 0 : index
    %c0_107 = arith.constant 0 : index
    %153 = vector.load %arg10[%c0_105, %c0_106, %c0_107] : memref<1x1x10xf32, #tpu.memory_space<vmem>>, vector<1x1x10xf32>
    %154 = vector.shape_cast %153 : vector<1x1x10xf32> to vector<1x10xf32>
    %155 = vector.shape_cast %152 : vector<1x10xf32> to vector<1x1x10xf32>
    tpu.vector_store %arg10[%c0_105, %c0_106, %c0_107], %155 {strides = array<i32>} : memref<1x1x10xf32, #tpu.memory_space<vmem>>, vector<1x1x10xf32>,
    return
  }
  func.func @transform_0(%arg0: i32) -> (i32, i32, i32) {
    %c0_i32 = arith.constant 0 : i32
    %c0_i32_0 = arith.constant 0 : i32
    %c0_i32_1 = arith.constant 0 : i32
    return %arg0, %c0_i32, %c0_i32_0 : i32, i32, i32
  }
  func.func @transform_1(%arg0: i32) -> (i32, i32, i32) {
    %c0_i32 = arith.constant 0 : i32
    %c0_i32_0 = arith.constant 0 : i32
    %c0_i32_1 = arith.constant 0 : i32
    %c0_i32_2 = arith.constant 0 : i32
    return %c0_i32, %c0_i32_0, %c0_i32_1 : i32, i32, i32
  }
  func.func @transform_2(%arg0: i32) -> (i32, i32, i32) {
    %c0_i32 = arith.constant 0 : i32
    %c0_i32_0 = arith.constant 0 : i32
    %c0_i32_1 = arith.constant 0 : i32
    %c0_i32_2 = arith.constant 0 : i32
    return %c0_i32, %c0_i32_0, %c0_i32_1 : i32, i32, i32
  }
  func.func @transform_3(%arg0: i32) -> (i32, i32) {
    %c0_i32 = arith.constant 0 : i32
    %c0_i32_0 = arith.constant 0 : i32
    %c0_i32_1 = arith.constant 0 : i32
    return %c0_i32, %c0_i32_0 : i32, i32
  }
  func.func @transform_4(%arg0: i32) -> (i32, i32, i32) {
    %c0_i32 = arith.constant 0 : i32
    %c0_i32_0 = arith.constant 0 : i32
    %c0_i32_1 = arith.constant 0 : i32
    %c0_i32_2 = arith.constant 0 : i32
    return %c0_i32, %c0_i32_0, %c0_i32_1 : i32, i32, i32
  }
  func.func @transform_5(%arg0: i32) -> (i32, i32, i32) {
    %c0_i32 = arith.constant 0 : i32
    %c0_i32_0 = arith.constant 0 : i32
    %c0_i32_1 = arith.constant 0 : i32
    %c0_i32_2 = arith.constant 0 : i32
    return %c0_i32, %c0_i32_0, %c0_i32_1 : i32, i32, i32
  }
  func.func @transform_6(%arg0: i32) -> (i32, i32) {
    %c0_i32 = arith.constant 0 : i32
    %c0_i32_0 = arith.constant 0 : i32
    %c0_i32_1 = arith.constant 0 : i32
    return %c0_i32, %c0_i32_0 : i32, i32
  }
  func.func @transform_7(%arg0: i32) -> (i32, i32, i32) {
    %c0_i32 = arith.constant 0 : i32
    %c0_i32_0 = arith.constant 0 : i32
    %c0_i32_1 = arith.constant 0 : i32
    %c0_i32_2 = arith.constant 0 : i32
    return %c0_i32, %c0_i32_0, %c0_i32_1 : i32, i32, i32
  }
  func.func @transform_8(%arg0: i32) -> (i32, i32) {
    %c0_i32 = arith.constant 0 : i32
    %c0_i32_0 = arith.constant 0 : i32
    %c0_i32_1 = arith.constant 0 : i32
    return %c0_i32, %c0_i32_0 : i32, i32
  }
  func.func @transform_9(%arg0: i32) -> (i32, i32, i32) {
    %c0_i32 = arith.constant 0 : i32
    %c0_i32_0 = arith.constant 0 : i32
    %c0_i32_1 = arith.constant 0 : i32
    return %arg0, %c0_i32, %c0_i32_0 : i32, i32, i32
  }
}

</mosaic_0001>

<llo_original>
// kernel: tile.13
$region0: #{tile.13}
  #allocation0 [shape = 's32[1]{0}', space=sflag, size = 0x4, scoped, tag = 'scoped memory for tile.13']
  %s0 = inlined_call_operand.vmem [shape: f32[10], index: 0, kind: input, shape index: {}]
  %s1 = inlined_call_operand.vmem [shape: f32[20,10], index: 1, kind: output, shape index: {}]
  // Predicated region
  $region2: #{tile.13} parent=0 // pred_check
    _
  $region3: #{tile.13} parent=0 // pred_check_branch
    %3 = sbr.rel (0) target = $region5
  $region4: #{tile.13} parent=0 // pred_region
    _
  $region5: #{tile.13} parent=0 // pred_fallthru
    _
  %v4 = vld [vmem:[%s0] ss:$0 sm:$0xff]
  %5 = vst [vmem:[%s1] sm:$0xff] %v4
  %s6 = scalar_lea.vmem %s1, 8
  %7 = vst [vmem:[%s6] sm:$0xff] %v4
  %s8 = scalar_lea.vmem %s1, 16
  %9 = vst [vmem:[%s8] sm:$0xff] %v4

// kernel: tile.14
$region0: #{tile.14}
  %s0 = inlined_call_operand.vmem [shape: f32[20,10], index: 0, kind: input, shape index: {}]
  %s1 = inlined_call_operand.vmem [shape: f32[1,200], index: 1, kind: output, shape index: {}]
  $region1: #{tile.14} parent=0
    #allocation0 [shape = 'u8[8192]{0}', space=vmem, size = 0x2000, scoped, tag = 'scoped mem for output reshape']
    %v2 = vld [vmem:[%s0] sm:$0x1]
    %vm3 = vcmask 80896
    %4 = vst.msk [vmem:[#allocation0] sm:$0x1] %vm3, %v2
    %s5 = scalar_lea.vmem %s0, 12
    %v6 = vld [vmem:[%s5] sm:$0x1]
    %s7 = scalar_lea.vmem %s0, 12
    %v8 = vld [vmem:[%s7] sm:$0x1]
    %vm9 = vcmask 64512
    %v10 = vsel %vm9, %v8, %v6
    %11 = vrot.lane.b32.xlu0 %v10, 120
    %v12 = vpop.permute.xlu0 %11
    %vm13 = vcmask 15360
    %s14 = scalar_lea.vmem [#allocation0], 8
    %15 = vst.msk [vmem:[%s14] sm:$0x1] %vm13, %v12
    %vm16 = vcmask 1048512
    %17 = vst.msk [vmem:[#allocation0] sm:$0x1] %vm16, %v12
    %s18 = scalar_lea.vmem %s0, 11
    %v19 = vld [vmem:[%s18] sm:$0x1]
    %20 = vrot.lane.b32.xlu0 %v19, 110
    %v21 = vpop.permute.xlu0 %20
    %vm22 = vcmask 982896
    %23 = vst.msk [vmem:[#allocation0] sm:$0x1] %vm22, %v21
    %s24 = scalar_lea.vmem %s0, 10
    %v25 = vld [vmem:[%s24] sm:$0x1]
    %26 = vrot.lane.b32.xlu0 %v25, 100
    %v27 = vpop.permute.xlu0 %26
    %vm28 = vcmask 900896
    %29 = vst.msk [vmem:[#allocation0] sm:$0x1] %vm28, %v27
    %s30 = scalar_lea.vmem %s0, 9
    %v31 = vld [vmem:[%s30] sm:$0x1]
    %32 = vrot.lane.b32.xlu0 %v31, 90
    %v33 = vpop.permute.xlu0 %32
    %vm34 = vcmask 818896
    %35 = vst.msk [vmem:[#allocation0] sm:$0x1] %vm34, %v33
    %s36 = scalar_lea.vmem %s0, 8
    %v37 = vld [vmem:[%s36] sm:$0x1]
    %38 = vrot.lane.b32.xlu0 %v37, 80
    %v39 = vpop.permute.xlu0 %38
    %vm40 = vcmask 736896
    %41 = vst.msk [vmem:[#allocation0] sm:$0x1] %vm40, %v39
    %s42 = scalar_lea.vmem %s0, 7
    %v43 = vld [vmem:[%s42] sm:$0x1]
    %44 = vrot.lane.b32.xlu0 %v43, 70
    %v45 = vpop.permute.xlu0 %44
    %vm46 = vcmask 654896
    %47 = vst.msk [vmem:[#allocation0] sm:$0x1] %vm46, %v45
    %s48 = scalar_lea.vmem %s0, 19
    %v49 = vld [vmem:[%s48] sm:$0x1]
    %50 = vrot.lane.b32.xlu0 %v49, 62
    %v51 = vpop.permute.xlu0 %50
    %vm52 = vcmask 589296
    %s53 = scalar_lea.vmem [#allocation0], 8
    %54 = vst.msk [vmem:[%s53] sm:$0x1] %vm52, %v51
    %s55 = scalar_lea.vmem %s0, 6
    %v56 = vld [vmem:[%s55] sm:$0x1]
    %57 = vrot.lane.b32.xlu0 %v56, 60
    %v58 = vpop.permute.xlu0 %57
    %vm59 = vcmask 572896
    %60 = vst.msk [vmem:[#allocation0] sm:$0x1] %vm59, %v58
    %s61 = scalar_lea.vmem %s0, 18
    %v62 = vld [vmem:[%s61] sm:$0x1]
    %63 = vrot.lane.b32.xlu0 %v62, 52
    %v64 = vpop.permute.xlu0 %63
    %vm65 = vcmask 507296
    %s66 = scalar_lea.vmem [#allocation0], 8
    %67 = vst.msk [vmem:[%s66] sm:$0x1] %vm65, %v64
    %s68 = scalar_lea.vmem %s0, 5
    %v69 = vld [vmem:[%s68] sm:$0x1]
    %70 = vrot.lane.b32.xlu0 %v69, 50
    %v71 = vpop.permute.xlu0 %70
    %vm72 = vcmask 490896
    %73 = vst.msk [vmem:[#allocation0] sm:$0x1] %vm72, %v71
    %s74 = scalar_lea.vmem %s0, 17
    %v75 = vld [vmem:[%s74] sm:$0x1]
    %76 = vrot.lane.b32.xlu0 %v75, 42
    %v77 = vpop.permute.xlu0 %76
    %vm78 = vcmask 425296
    %s79 = scalar_lea.vmem [#allocation0], 8
    %80 = vst.msk [vmem:[%s79] sm:$0x1] %vm78, %v77
    %s81 = scalar_lea.vmem %s0, 4
    %v82 = vld [vmem:[%s81] sm:$0x1]
    %83 = vrot.lane.b32.xlu0 %v82, 40
    %v84 = vpop.permute.xlu0 %83
    %vm85 = vcmask 408896
    %86 = vst.msk [vmem:[#allocation0] sm:$0x1] %vm85, %v84
    %s87 = scalar_lea.vmem %s0, 16
    %v88 = vld [vmem:[%s87] sm:$0x1]
    %89 = vrot.lane.b32.xlu0 %v88, 32
    %v90 = vpop.permute.xlu0 %89
    %vm91 = vcmask 343296
    %s92 = scalar_lea.vmem [#allocation0], 8
    %93 = vst.msk [vmem:[%s92] sm:$0x1] %vm91, %v90
    %s94 = scalar_lea.vmem %s0, 3
    %v95 = vld [vmem:[%s94] sm:$0x1]
    %96 = vrot.lane.b32.xlu0 %v95, 30
    %v97 = vpop.permute.xlu0 %96
    %vm98 = vcmask 326896
    %99 = vst.msk [vmem:[#allocation0] sm:$0x1] %vm98, %v97
    %s100 = scalar_lea.vmem %s0, 15
    %v101 = vld [vmem:[%s100] sm:$0x1]
    %102 = vrot.lane.b32.xlu0 %v101, 22
    %v103 = vpop.permute.xlu0 %102
    %vm104 = vcmask 261296
    %s105 = scalar_lea.vmem [#allocation0], 8
    %106 = vst.msk [vmem:[%s105] sm:$0x1] %vm104, %v103
    %s107 = scalar_lea.vmem %s0, 2
    %v108 = vld [vmem:[%s107] sm:$0x1]
    %109 = vrot.lane.b32.xlu0 %v108, 20
    %v110 = vpop.permute.xlu0 %109
    %vm111 = vcmask 244896
    %112 = vst.msk [vmem:[#allocation0] sm:$0x1] %vm111, %v110
    %s113 = scalar_lea.vmem %s0, 14
    %v114 = vld [vmem:[%s113] sm:$0x1]
    %115 = vrot.lane.b32.xlu0 %v114, 12
    %v116 = vpop.permute.xlu0 %115
    %vm117 = vcmask 179296
    %s118 = scalar_lea.vmem [#allocation0], 8
    %119 = vst.msk [vmem:[%s118] sm:$0x1] %vm117, %v116
    %s120 = scalar_lea.vmem %s0, 1
    %v121 = vld [vmem:[%s120] sm:$0x1]
    %122 = vrot.lane.b32.xlu0 %v121, 10
    %v123 = vpop.permute.xlu0 %122
    %vm124 = vcmask 162896
    %125 = vst.msk [vmem:[#allocation0] sm:$0x1] %vm124, %v123
    %s126 = scalar_lea.vmem %s0, 13
    %v127 = vld [vmem:[%s126] sm:$0x1]
    %128 = vrot.lane.b32.xlu0 %v127, 2
    %v129 = vpop.permute.xlu0 %128
    %vm130 = vcmask 97296
    %s131 = scalar_lea.vmem [#allocation0], 8
    %132 = vst.msk [vmem:[%s131] sm:$0x1] %vm130, %v129
    %s134 = sshll.u32 1, 1
    %s135 = ssub.s32 %s134, 1
    %v137 = vld [vmem:[#allocation0] sm:%s135]
    %s138 = sshll.u32 1, 1
    %s139 = ssub.s32 %s138, 1
    %140 = vst [vmem:[%s1] sm:%s139] %v137
    %s141 = scalar_lea.vmem [#allocation0], 8
    %v142 = vld [vmem:[%s141] sm:%s135]
    %s143 = sshll.u32 1, 1
    %s144 = ssub.s32 %s143, 1
    %s145 = scalar_lea.vmem %s1, 1
    %146 = vst [vmem:[%s145] sm:%s144] %v142

// kernel: tile.18
$region0: #{tile.18}
  #allocation0 [shape = 's32[1]{0}', space=sflag, size = 0x4, scoped, tag = 'scoped memory for tile.18']
  %s0 = inlined_call_operand.vmem [shape: f32[10], index: 0, kind: input, shape index: {}]
  %s1 = inlined_call_operand.vmem [shape: f32[8,10], index: 1, kind: output, shape index: {}]
  // Predicated region
  $region2: #{tile.18} parent=0 // pred_check
    _
  $region3: #{tile.18} parent=0 // pred_check_branch
    %3 = sbr.rel (0) target = $region5
  $region4: #{tile.18} parent=0 // pred_region
    _
  $region5: #{tile.18} parent=0 // pred_fallthru
    _
  %v4 = vld [vmem:[%s0] ss:$0 sm:$0xff]
  %5 = vst [vmem:[%s1] sm:$0xff] %v4

// kernel: tile.19
$region0: #{tile.19}
  %s0 = inlined_call_operand.vmem [shape: f32[8,10], index: 0, kind: input, shape index: {}]
  %s1 = inlined_call_operand.vmem [shape: f32[1,80], index: 1, kind: output, shape index: {}]
  $region1: #{tile.19} parent=0
    #allocation0 [shape = 'u8[4096]{0}', space=vmem, size = 0x1000, scoped, tag = 'scoped mem for output reshape']
    %v2 = vld [vmem:[%s0] sm:$0x1]
    %vm3 = vcmask 80896
    %4 = vst.msk [vmem:[#allocation0] sm:$0x1] %vm3, %v2
    %s5 = scalar_lea.vmem %s0, 7
    %v6 = vld [vmem:[%s5] sm:$0x1]
    %7 = vrot.lane.b32.xlu0 %v6, 70
    %v8 = vpop.permute.xlu0 %7
    %vm9 = vcmask 654896
    %10 = vst.msk [vmem:[#allocation0] sm:$0x1] %vm9, %v8
    %s11 = scalar_lea.vmem %s0, 6
    %v12 = vld [vmem:[%s11] sm:$0x1]
    %13 = vrot.lane.b32.xlu0 %v12, 60
    %v14 = vpop.permute.xlu0 %13
    %vm15 = vcmask 572896
    %16 = vst.msk [vmem:[#allocation0] sm:$0x1] %vm15, %v14
    %s17 = scalar_lea.vmem %s0, 5
    %v18 = vld [vmem:[%s17] sm:$0x1]
    %19 = vrot.lane.b32.xlu0 %v18, 50
    %v20 = vpop.permute.xlu0 %19
    %vm21 = vcmask 490896
    %22 = vst.msk [vmem:[#allocation0] sm:$0x1] %vm21, %v20
    %s23 = scalar_lea.vmem %s0, 4
    %v24 = vld [vmem:[%s23] sm:$0x1]
    %25 = vrot.lane.b32.xlu0 %v24, 40
    %v26 = vpop.permute.xlu0 %25
    %vm27 = vcmask 408896
    %28 = vst.msk [vmem:[#allocation0] sm:$0x1] %vm27, %v26
    %s29 = scalar_lea.vmem %s0, 3
    %v30 = vld [vmem:[%s29] sm:$0x1]
    %31 = vrot.lane.b32.xlu0 %v30, 30
    %v32 = vpop.permute.xlu0 %31
    %vm33 = vcmask 326896
    %34 = vst.msk [vmem:[#allocation0] sm:$0x1] %vm33, %v32
    %s35 = scalar_lea.vmem %s0, 2
    %v36 = vld [vmem:[%s35] sm:$0x1]
    %37 = vrot.lane.b32.xlu0 %v36, 20
    %v38 = vpop.permute.xlu0 %37
    %vm39 = vcmask 244896
    %40 = vst.msk [vmem:[#allocation0] sm:$0x1] %vm39, %v38
    %s41 = scalar_lea.vmem %s0, 1
    %v42 = vld [vmem:[%s41] sm:$0x1]
    %43 = vrot.lane.b32.xlu0 %v42, 10
    %v44 = vpop.permute.xlu0 %43
    %vm45 = vcmask 162896
    %46 = vst.msk [vmem:[#allocation0] sm:$0x1] %vm45, %v44
    %s48 = sshll.u32 1, 1
    %s49 = ssub.s32 %s48, 1
    %v51 = vld [vmem:[#allocation0] sm:%s49]
    %s52 = sshll.u32 1, 1
    %s53 = ssub.s32 %s52, 1
    %54 = vst [vmem:[%s1] sm:%s53] %v51

// kernel: cnet_forward.1
$region0: #{cnet_forward.1}
  #allocation0 [shape = 'u32[]', space=smem, size = 0x4, offset = 0x4, fixed_abs, tag = 'smem constant byte address 0x4 - core index']
  #allocation1 [shape = 'u32[144,128]{1,0:T(1,128)}', space=vmem, size = 0x12000, scoped, tag = 'internal scratch']
  %s0 = inlined_call_operand.vmem [shape: f32[2,28,44], index: 0, kind: input, shape index: {}]
  %s1 = inlined_call_operand.vmem [shape: f32[5,44,200], index: 1, kind: input, shape index: {}]
  %s2 = inlined_call_operand.vmem [shape: f32[5,44,200], index: 2, kind: input, shape index: {}]
  %s3 = inlined_call_operand.vmem [shape: f32[1,200], index: 3, kind: input, shape index: {}]
  %s4 = inlined_call_operand.vmem [shape: f32[5,200,80], index: 4, kind: input, shape index: {}]
  %s5 = inlined_call_operand.vmem [shape: f32[5,200,80], index: 5, kind: input, shape index: {}]
  %s6 = inlined_call_operand.vmem [shape: f32[1,80], index: 6, kind: input, shape index: {}]
  %s7 = inlined_call_operand.vmem [shape: f32[4,80,10], index: 7, kind: input, shape index: {}]
  %s8 = inlined_call_operand.vmem [shape: f32[1,10], index: 8, kind: input, shape index: {}]
  %s9 = inlined_call_operand.hbm [shape: f32[2,1,10], index: 9, kind: output, shape index: {}]
  %s10 = sld [smem:[#allocation0]]
  $region69: #{cnet_forward.1} parent=0
    _
  %s12 = ssub.s32 1, %s10
  %s13 = scalar_select 0, %s12, %s10
  $region1: #{cnet_forward.1} parent=0
    #allocation2 [shape = 'u8[1024]{0}', space=vmem, size = 0x400, scoped, tag = 'output window, operand 0']
    #allocation3 [shape = 's32[2]{0}', space=sflag, size = 0x8, scoped, tag = 'scoped memory for cnet_forward.1']
    %14 = vsyncpa [#allocation3], 0
    %s15 = scalar_lea.sflag [#allocation3], 1
    %16 = vsyncpa %s15, 0
    loop: start=0, step=1, limit=4
    $region2: #{cnet_forward.1} parent=1 // loop_pre_header
      _
    $region3: #{cnet_forward.1} parent=1 // loop_header
      %s18 = sphi 0, %s22
      %p19 = scmp.ge.s32.totalorder %s18, 4
      %s28 = sphi 0, %s30
      %s31 = sphi 0, %s28
      %s32 = sphi 0, %s31
      %s48 = sphi 0, %s32
      %s52 = sphi 0, %s52
      %s54 = sphi 0, %s52
      %s55 = sphi 0, %s54
      %s69 = sphi 0, %s55
      %s73 = sphi 0, %s73
      %s75 = sphi 0, %s73
      %s76 = sphi 0, %s75
      %s90 = sphi 0, %s76
      %s94 = sphi 0, %s94
      %s96 = sphi 0, %s94
      %s97 = sphi 0, %s96
      %s111 = sphi 0, %s97
      %s115 = sphi 0, %s115
      %s117 = sphi 0, %s115
      %s118 = sphi 0, %s117
      %s132 = sphi 0, %s118
      %s136 = sphi 0, %s136
      %s138 = sphi 0, %s136
      %s139 = sphi 0, %s138
      %s153 = sphi 0, %s139
      %s157 = sphi 0, %s157
      %s159 = sphi 0, %s157
      %s160 = sphi 0, %s159
      %s174 = sphi 0, %s160
      %s178 = sphi 0, %s178
      %s180 = sphi 0, %s178
      %s181 = sphi 0, %s180
      %s195 = sphi 0, %s181
      %s199 = sphi 0, %s199
      %s201 = sphi 0, %s199
      %s202 = sphi 0, %s201
      %s216 = sphi 0, %s202
      %s222 = sphi 0, %s224
      %s225 = sphi 0, %s222
      %s226 = sphi 0, %s225
      %s242 = sphi 0, %s226
    $region4: #{cnet_forward.1} parent=1 // loop_header_branch
      %21 = sbr.rel (%p19) target = $region8
    $region5: #{cnet_forward.1} parent=1 // loop_body
      %s23 = ssub.s32 %s18, 1
      %s24 = ssub.s32 %s18, 2
      %s25 = sadd.s32 %s18, 1
      %s26 = ssub.s32 %s18, %s25
      %p27 = scmp.eq.s32.totalorder %s26, 0
      %s29 = sadd.s32 %s28, 1
      %s30 = scalar_select %p27, %s28, %s29
      %p33 = pneg %p27
      %p34 = scmp.eq.s32.totalorder %s18, 1
      %p35 = por %p33, %p34
      %p36 = scmp.ne.s32.totalorder %s28, %s31
      %p37 = scmp.eq.s32.totalorder %s18, 0
      %p38 = por %p36, %p37
      %p39 = scmp.ne.s32.totalorder %s28, %s31
      %p40 = scmp.eq.s32.totalorder %s23, 1
      %p41 = por %p39, %p40
      %p42 = scmp.ne.s32.totalorder %s31, %s32
      %p43 = scmp.eq.s32.totalorder %s23, 0
      %p44 = por %p42, %p43
      %p45 = scmp.ne.s32.totalorder %s31, %s32
      %p46 = scmp.eq.s32.totalorder %s24, 1
      %p47 = por %p45, %p46
      %p49 = scmp.ne.s32.totalorder %s32, %s48
      %p50 = scmp.eq.s32.totalorder %s24, 0
      %p51 = por %p49, %p50
      %s53 = sadd.s32 %s52, 1
      %p56 = scmp.eq.s32.totalorder %s18, 1
      %p57 = scmp.ne.s32.totalorder %s52, %s54
      %p58 = scmp.eq.s32.totalorder %s18, 0
      %p59 = por %p57, %p58
      %p60 = scmp.ne.s32.totalorder %s52, %s54
      %p61 = scmp.eq.s32.totalorder %s23, 1
      %p62 = por %p60, %p61
      %p63 = scmp.ne.s32.totalorder %s54, %s55
      %p64 = scmp.eq.s32.totalorder %s23, 0
      %p65 = por %p63, %p64
      %p66 = scmp.ne.s32.totalorder %s54, %s55
      %p67 = scmp.eq.s32.totalorder %s24, 1
      %p68 = por %p66, %p67
      %p70 = scmp.ne.s32.totalorder %s55, %s69
      %p71 = scmp.eq.s32.totalorder %s24, 0
      %p72 = por %p70, %p71
      %s74 = sadd.s32 %s73, 1
      %p77 = scmp.eq.s32.totalorder %s18, 1
      %p78 = scmp.ne.s32.totalorder %s73, %s75
      %p79 = scmp.eq.s32.totalorder %s18, 0
      %p80 = por %p78, %p79
      %p81 = scmp.ne.s32.totalorder %s73, %s75
      %p82 = scmp.eq.s32.totalorder %s23, 1
      %p83 = por %p81, %p82
      %p84 = scmp.ne.s32.totalorder %s75, %s76
      %p85 = scmp.eq.s32.totalorder %s23, 0
      %p86 = por %p84, %p85
      %p87 = scmp.ne.s32.totalorder %s75, %s76
      %p88 = scmp.eq.s32.totalorder %s24, 1
      %p89 = por %p87, %p88
      %p91 = scmp.ne.s32.totalorder %s76, %s90
      %p92 = scmp.eq.s32.totalorder %s24, 0
      %p93 = por %p91, %p92
      %s95 = sadd.s32 %s94, 1
      %p98 = scmp.eq.s32.totalorder %s18, 1
      %p99 = scmp.ne.s32.totalorder %s94, %s96
      %p100 = scmp.eq.s32.totalorder %s18, 0
      %p101 = por %p99, %p100
      %p102 = scmp.ne.s32.totalorder %s94, %s96
      %p103 = scmp.eq.s32.totalorder %s23, 1
      %p104 = por %p102, %p103
      %p105 = scmp.ne.s32.totalorder %s96, %s97
      %p106 = scmp.eq.s32.totalorder %s23, 0
      %p107 = por %p105, %p106
      %p108 = scmp.ne.s32.totalorder %s96, %s97
      %p109 = scmp.eq.s32.totalorder %s24, 1
      %p110 = por %p108, %p109
      %p112 = scmp.ne.s32.totalorder %s97, %s111
      %p113 = scmp.eq.s32.totalorder %s24, 0
      %p114 = por %p112, %p113
      %s116 = sadd.s32 %s115, 1
      %p119 = scmp.eq.s32.totalorder %s18, 1
      %p120 = scmp.ne.s32.totalorder %s115, %s117
      %p121 = scmp.eq.s32.totalorder %s18, 0
      %p122 = por %p120, %p121
      %p123 = scmp.ne.s32.totalorder %s115, %s117
      %p124 = scmp.eq.s32.totalorder %s23, 1
      %p125 = por %p123, %p124
      %p126 = scmp.ne.s32.totalorder %s117, %s118
      %p127 = scmp.eq.s32.totalorder %s23, 0
      %p128 = por %p126, %p127
      %p129 = scmp.ne.s32.totalorder %s117, %s118
      %p130 = scmp.eq.s32.totalorder %s24, 1
      %p131 = por %p129, %p130
      %p133 = scmp.ne.s32.totalorder %s118, %s132
      %p134 = scmp.eq.s32.totalorder %s24, 0
      %p135 = por %p133, %p134
      %s137 = sadd.s32 %s136, 1
      %p140 = scmp.eq.s32.totalorder %s18, 1
      %p141 = scmp.ne.s32.totalorder %s136, %s138
      %p142 = scmp.eq.s32.totalorder %s18, 0
      %p143 = por %p141, %p142
      %p144 = scmp.ne.s32.totalorder %s136, %s138
      %p145 = scmp.eq.s32.totalorder %s23, 1
      %p146 = por %p144, %p145
      %p147 = scmp.ne.s32.totalorder %s138, %s139
      %p148 = scmp.eq.s32.totalorder %s23, 0
      %p149 = por %p147, %p148
      %p150 = scmp.ne.s32.totalorder %s138, %s139
      %p151 = scmp.eq.s32.totalorder %s24, 1
      %p152 = por %p150, %p151
      %p154 = scmp.ne.s32.totalorder %s139, %s153
      %p155 = scmp.eq.s32.totalorder %s24, 0
      %p156 = por %p154, %p155
      %s158 = sadd.s32 %s157, 1
      %p161 = scmp.eq.s32.totalorder %s18, 1
      %p162 = scmp.ne.s32.totalorder %s157, %s159
      %p163 = scmp.eq.s32.totalorder %s18, 0
      %p164 = por %p162, %p163
      %p165 = scmp.ne.s32.totalorder %s157, %s159
      %p166 = scmp.eq.s32.totalorder %s23, 1
      %p167 = por %p165, %p166
      %p168 = scmp.ne.s32.totalorder %s159, %s160
      %p169 = scmp.eq.s32.totalorder %s23, 0
      %p170 = por %p168, %p169
      %p171 = scmp.ne.s32.totalorder %s159, %s160
      %p172 = scmp.eq.s32.totalorder %s24, 1
      %p173 = por %p171, %p172
      %p175 = scmp.ne.s32.totalorder %s160, %s174
      %p176 = scmp.eq.s32.totalorder %s24, 0
      %p177 = por %p175, %p176
      %s179 = sadd.s32 %s178, 1
      %p182 = scmp.eq.s32.totalorder %s18, 1
      %p183 = scmp.ne.s32.totalorder %s178, %s180
      %p184 = scmp.eq.s32.totalorder %s18, 0
      %p185 = por %p183, %p184
      %p186 = scmp.ne.s32.totalorder %s178, %s180
      %p187 = scmp.eq.s32.totalorder %s23, 1
      %p188 = por %p186, %p187
      %p189 = scmp.ne.s32.totalorder %s180, %s181
      %p190 = scmp.eq.s32.totalorder %s23, 0
      %p191 = por %p189, %p190
      %p192 = scmp.ne.s32.totalorder %s180, %s181
      %p193 = scmp.eq.s32.totalorder %s24, 1
      %p194 = por %p192, %p193
      %p196 = scmp.ne.s32.totalorder %s181, %s195
      %p197 = scmp.eq.s32.totalorder %s24, 0
      %p198 = por %p196, %p197
      %s200 = sadd.s32 %s199, 1
      %p203 = scmp.eq.s32.totalorder %s18, 1
      %p204 = scmp.ne.s32.totalorder %s199, %s201
      %p205 = scmp.eq.s32.totalorder %s18, 0
      %p206 = por %p204, %p205
      %p207 = scmp.ne.s32.totalorder %s199, %s201
      %p208 = scmp.eq.s32.totalorder %s23, 1
      %p209 = por %p207, %p208
      %p210 = scmp.ne.s32.totalorder %s201, %s202
      %p211 = scmp.eq.s32.totalorder %s23, 0
      %p212 = por %p210, %p211
      %p213 = scmp.ne.s32.totalorder %s201, %s202
      %p214 = scmp.eq.s32.totalorder %s24, 1
      %p215 = por %p213, %p214
      %p217 = scmp.ne.s32.totalorder %s202, %s216
      %p218 = scmp.eq.s32.totalorder %s24, 0
      %p219 = por %p217, %p218
      %s220 = ssub.s32 %s18, %s25
      %p221 = scmp.eq.s32.totalorder %s220, 0
      %s223 = sadd.s32 %s222, 1
      %s224 = scalar_select %p221, %s222, %s223
      %p227 = pneg %p221
      %p228 = scmp.eq.s32.totalorder %s18, 1
      %p229 = por %p227, %p228
      %p230 = scmp.ne.s32.totalorder %s222, %s225
      %p231 = scmp.eq.s32.totalorder %s18, 0
      %p232 = por %p230, %p231
      %p233 = scmp.ne.s32.totalorder %s222, %s225
      %p234 = scmp.eq.s32.totalorder %s23, 1
      %p235 = por %p233, %p234
      %p236 = scmp.ne.s32.totalorder %s225, %s226
      %p237 = scmp.eq.s32.totalorder %s23, 0
      %p238 = por %p236, %p237
      %p239 = scmp.ne.s32.totalorder %s225, %s226
      %p240 = scmp.eq.s32.totalorder %s24, 1
      %p241 = por %p239, %p240
      %p243 = scmp.ne.s32.totalorder %s226, %s242
      %p244 = scmp.eq.s32.totalorder %s24, 0
      %p245 = por %p243, %p244
      %p246 = scmp.le.s32.totalorder 1, %s18
      %p247 = scmp.lt.s32.totalorder %s18, 3
      %p248 = pnand %p246, %p247
      %p249 = pneg %p248
      // Predicated region
      $region9: #{cnet_forward.1} parent=5 // pred_check
        _
      $region10: #{cnet_forward.1} parent=5 // pred_check_branch
        %251 = sbr.rel (%p248) target = $region12
      $region11: #{cnet_forward.1} parent=5 // pred_region
        %s252 = ssub.s32 %s18, 1
        // Predicated region
        $region13: #{cnet_forward.1} parent=11 // pred_check
          %p253 = pneg %p65
        $region14: #{cnet_forward.1} parent=11 // pred_check_branch
          %255 = sbr.rel (%p253) target = $region16
        $region15: #{cnet_forward.1} parent=11 // pred_region
          _
        $region16: #{cnet_forward.1} parent=11 // pred_fallthru
          _
        // Predicated region
        $region17: #{cnet_forward.1} parent=11 // pred_check
          %p256 = pneg %p86
        $region18: #{cnet_forward.1} parent=11 // pred_check_branch
          %258 = sbr.rel (%p256) target = $region20
        $region19: #{cnet_forward.1} parent=11 // pred_region
          _
        $region20: #{cnet_forward.1} parent=11 // pred_fallthru
          _
        // Predicated region
        $region21: #{cnet_forward.1} parent=11 // pred_check
          %p259 = pneg %p107
        $region22: #{cnet_forward.1} parent=11 // pred_check_branch
          %261 = sbr.rel (%p259) target = $region24
        $region23: #{cnet_forward.1} parent=11 // pred_region
          _
        $region24: #{cnet_forward.1} parent=11 // pred_fallthru
          _
        // Predicated region
        $region25: #{cnet_forward.1} parent=11 // pred_check
          %p262 = pneg %p128
        $region26: #{cnet_forward.1} parent=11 // pred_check_branch
          %264 = sbr.rel (%p262) target = $region28
        $region27: #{cnet_forward.1} parent=11 // pred_region
          _
        $region28: #{cnet_forward.1} parent=11 // pred_fallthru
          _
        // Predicated region
        $region29: #{cnet_forward.1} parent=11 // pred_check
          %p265 = pneg %p149
        $region30: #{cnet_forward.1} parent=11 // pred_check_branch
          %267 = sbr.rel (%p265) target = $region32
        $region31: #{cnet_forward.1} parent=11 // pred_region
          _
        $region32: #{cnet_forward.1} parent=11 // pred_fallthru
          _
        // Predicated region
        $region33: #{cnet_forward.1} parent=11 // pred_check
          %p268 = pneg %p170
        $region34: #{cnet_forward.1} parent=11 // pred_check_branch
          %270 = sbr.rel (%p268) target = $region36
        $region35: #{cnet_forward.1} parent=11 // pred_region
          _
        $region36: #{cnet_forward.1} parent=11 // pred_fallthru
          _
        // Predicated region
        $region37: #{cnet_forward.1} parent=11 // pred_check
          %p271 = pneg %p191
        $region38: #{cnet_forward.1} parent=11 // pred_check_branch
          %273 = sbr.rel (%p271) target = $region40
        $region39: #{cnet_forward.1} parent=11 // pred_region
          _
        $region40: #{cnet_forward.1} parent=11 // pred_fallthru
          _
        // Predicated region
        $region41: #{cnet_forward.1} parent=11 // pred_check
          %p274 = pneg %p212
        $region42: #{cnet_forward.1} parent=11 // pred_check_branch
          %276 = sbr.rel (%p274) target = $region44
        $region43: #{cnet_forward.1} parent=11 // pred_region
          _
        $region44: #{cnet_forward.1} parent=11 // pred_fallthru
          _
      $region12: #{cnet_forward.1} parent=5 // pred_fallthru
        _
      %p277 = scmp.lt.s32.totalorder %s18, 2
      // Predicated region
      $region45: #{cnet_forward.1} parent=5 // pred_check
        %p278 = pneg %p277
      $region46: #{cnet_forward.1} parent=5 // pred_check_branch
        %280 = sbr.rel (%p278) target = $region48
      $region47: #{cnet_forward.1} parent=5 // pred_region
        // Predicated region
        $region49: #{cnet_forward.1} parent=47 // pred_check
          %p281 = pneg %p38
        $region50: #{cnet_forward.1} parent=47 // pred_check_branch
          %283 = sbr.rel (%p281) target = $region52
        $region51: #{cnet_forward.1} parent=47 // pred_region
          %p284 = scmp.lt.s32.totalorder %s18, 1
          %s285 = scalar_select %p284, %s18, 1
          %s286 = smul.addr %s285, 4
          %s287 = smul.addr %s286, 8
          %s288 = scalar_lea.vmem %s0, %s287
        $region52: #{cnet_forward.1} parent=47 // pred_fallthru
          _
      $region48: #{cnet_forward.1} parent=5 // pred_fallthru
        _
      %p289 = scmp.le.s32.totalorder 1, %s18
      %p290 = scmp.lt.s32.totalorder %s18, 3
      %p291 = pnand %p289, %p290
      %p292 = pneg %p291
      // Predicated region
      $region53: #{cnet_forward.1} parent=5 // pred_check
        _
      $region54: #{cnet_forward.1} parent=5 // pred_check_branch
        %294 = sbr.rel (%p291) target = $region56
      $region55: #{cnet_forward.1} parent=5 // pred_region
        %s295 = ssub.s32 %s18, 1
        %p296 = scmp.lt.s32.totalorder %s23, 1
        %s297 = scalar_select %p296, %s23, 1
        %s298 = smul.addr %s297, 4
        %s299 = smul.addr %s298, 8
        %s300 = scalar_lea.vmem %s0, %s299
        %p301 = pneg %p44
        %p302 = pneg %p41
        %p303 = pneg %p65
        %p304 = pneg %p62
        %p305 = pneg %p86
        %p306 = pneg %p83
        %p307 = pneg %p107
        %p308 = pneg %p104
        %p309 = pneg %p128
        %p310 = pneg %p125
        %p311 = pneg %p149
        %p312 = pneg %p146
        %p313 = pneg %p170
        %p314 = pneg %p167
        %p315 = pneg %p191
        %p316 = pneg %p188
        %p317 = pneg %p212
        %p318 = pneg %p209
        %p319 = pneg %p238
        %p320 = pneg %p235
        %s321 = sand.u32 %s225, 1
        %s322 = scalar_lea.sflag [#allocation3], %s321
        %s323 = sand.u32 %s225, 1
        %s324 = scalar_lea.vmem [#allocation2], %s323
        %p325 = scmp.lt.s32.totalorder %s23, 1
        %s326 = scalar_select %p325, %s23, 1
        %s327 = smul.addr %s326, 4
        %s328 = smul.addr %s327, 8
        %s329 = scalar_lea.vmem %s0, %s328
        %v330 = vld [vmem:[%s329] sm:$0xff]
        %v331 = vld [vmem:[%s329 + $0x8] sm:$0xff]
        %v332 = vld [vmem:[%s329 + $0x10] sm:$0xff]
        %v333 = vld [vmem:[%s329 + $0x18] sm:$0xf]
        %v334 = vld [vmem:[%s1] sm:$0xff]
        %v335 = vld [vmem:[%s1 + $0x8] sm:$0xff]
        %v336 = vld [vmem:[%s1 + $0x10] sm:$0xff]
        %v337 = vld [vmem:[%s1 + $0x18] sm:$0xff]
        %v338 = vld [vmem:[%s1 + $0x20] sm:$0xff]
        %v339 = vld [vmem:[%s1 + $0x28] sm:$0xff]
        %v340 = vld [vmem:[%s1 + $0x30] sm:$0xff]
        %v341 = vld [vmem:[%s1 + $0x38] sm:$0xff]
        %v342 = vld [vmem:[%s1 + $0x40] sm:$0xff]
        %v343 = vld [vmem:[%s1 + $0x48] sm:$0xff]
        %v344 = vld [vmem:[%s1 + $0x50] sm:$0xf]
        %v345 = vld [vmem:[%s1 + $0x58] sm:$0xf]
        %v346 = vld [vmem:[%s2] sm:$0xff]
        %v347 = vld [vmem:[%s2 + $0x8] sm:$0xff]
        %v348 = vld [vmem:[%s2 + $0x10] sm:$0xff]
        %v349 = vld [vmem:[%s2 + $0x18] sm:$0xff]
        %v350 = vld [vmem:[%s2 + $0x20] sm:$0xff]
        %v351 = vld [vmem:[%s2 + $0x28] sm:$0xff]
        %v352 = vld [vmem:[%s2 + $0x30] sm:$0xff]
        %v353 = vld [vmem:[%s2 + $0x38] sm:$0xff]
        %v354 = vld [vmem:[%s2 + $0x40] sm:$0xff]
        %v355 = vld [vmem:[%s2 + $0x48] sm:$0xff]
        %v356 = vld [vmem:[%s2 + $0x50] sm:$0xf]
        %v357 = vld [vmem:[%s2 + $0x58] sm:$0xf]
        %s358 = scalar_lea.vmem %s1, 96
        %v359 = vld [vmem:[%s358] sm:$0xff]
        %v360 = vld [vmem:[%s358 + $0x8] sm:$0xff]
        %v361 = vld [vmem:[%s358 + $0x10] sm:$0xff]
        %v362 = vld [vmem:[%s358 + $0x18] sm:$0xff]
        %v363 = vld [vmem:[%s358 + $0x20] sm:$0xff]
        %v364 = vld [vmem:[%s358 + $0x28] sm:$0xff]
        %v365 = vld [vmem:[%s358 + $0x30] sm:$0xff]
        %v366 = vld [vmem:[%s358 + $0x38] sm:$0xff]
        %v367 = vld [vmem:[%s358 + $0x40] sm:$0xff]
        %v368 = vld [vmem:[%s358 + $0x48] sm:$0xff]
        %v369 = vld [vmem:[%s358 + $0x50] sm:$0xf]
        %v370 = vld [vmem:[%s358 + $0x58] sm:$0xf]
        %vm375 = vcmask 1046528
        %v376 = vrot.slane %v330, 1
        %v377 = vrot.slane %v331, 1
        %v378 = vsel %vm375, %v376, %v377
        %v379 = vrot.slane %v332, 1
        %v380 = vsel %vm375, %v377, %v379
        %v381 = vrot.slane %v333, 1
        %v382 = vsel %vm375, %v379, %v381
        %vm383 = vcmask 359424
        %v384 = vsel %vm383, %v378, 0
        %v386 = vsel %vm383, %v380, 0
        %v388 = vsel %vm383, %v382, 0
        %vm390 = vcmask 1043456
        %v392 = vsel %vm390, %v369, 0
        %v395 = vsel %vm390, %v370, 0
        %397 = vmatprep.subr.mxu0 0.0
        %398 = vmatpush1.msra.mxu0 0.0
        %399 = vmatprep.subr.mxu0 0.0
        %400 = vmatpush1.msra.mxu0 0.0
        %401 = vmatprep.subr.mxu0 0.0
        %402 = vmatpush1.msra.mxu0 0.0
        %403 = vmatprep.subr.mxu0 0.0
        %404 = vmatpush1.msra.mxu0 0.0
        %405 = vmatprep.subr.mxu0 0.0
        %406 = vmatpush1.msra.mxu0 0.0
        %407 = vmatprep.subr.mxu0 0.0
        %408 = vmatpush1.msra.mxu0 0.0
        %409 = vmatprep.subr.mxu0 0.0
        %410 = vmatpush1.msra.mxu0 0.0
        %411 = vmatprep.subr.mxu0 0.0
        %412 = vmatpush1.msra.mxu0 0.0
        %413 = vmatprep.subr.mxu0 0.0
        %414 = vmatpush1.msra.mxu0 0.0
        %415 = vmatprep.subr.mxu0 0.0
        %416 = vmatpush1.msra.mxu0 0.0
        %417 = vmatprep.subr.mxu0 %v395
        %418 = vmatpush1.msra.mxu0 %v392
        %419 = vmatprep.subr.mxu0 %v368
        %420 = vmatpush1.msra.mxu0 %v367
        %421 = vmatprep.subr.mxu0 %v366
        %422 = vmatpush1.msra.mxu0 %v365
        %423 = vmatprep.subr.mxu0 %v364
        %424 = vmatpush1.msra.mxu0 %v363
        %425 = vmatprep.subr.mxu0 %v362
        %426 = vmatpush1.msra.mxu0 %v361
        %427 = vmatprep.subr.mxu0 %v360
        %428 = vmatpush1.msra.mxu0 %v359
        %429 = vmatprep.subr.mxu0 0.0
        %430 = vmatpush2.msra.mxu0 0.0
        %431 = vmatprep.subr.mxu0 0.0
        %432 = vmatpush2.msra.mxu0 0.0
        %433 = vmatprep.subr.mxu0 0.0
        %434 = vmatpush2.msra.mxu0 0.0
        %435 = vmatprep.subr.mxu0 0.0
        %436 = vmatpush2.msra.mxu0 0.0
        %437 = vmatprep.subr.mxu0 0.0
        %438 = vmatpush2.msra.mxu0 0.0
        %439 = vmatprep.subr.mxu0 0.0
        %440 = vmatpush2.msra.mxu0 0.0
        %441 = vmatprep.subr.mxu0 0.0
        %442 = vmatpush2.msra.mxu0 0.0
        %443 = vmatprep.subr.mxu0 0.0
        %444 = vmatpush2.msra.mxu0 0.0
        %445 = vmatprep.subr.mxu0 0.0
        %446 = vmatpush2.msra.mxu0 0.0
        %447 = vmatprep.subr.mxu0 0.0
        %448 = vmatpush2.msra.mxu0 0.0
        %449 = vmatprep.subr.mxu0 0.0
        %450 = vmatpush2.msra.mxu0 0.0
        %451 = vmatprep.subr.mxu0 0.0
        %452 = vmatpush2.msra.mxu0 0.0
        %453 = vmatprep.subr.mxu0 0.0
        %454 = vmatpush2.msra.mxu0 0.0
        %455 = vmatprep.subr.mxu0 0.0
        %456 = vmatpush2.msra.mxu0 0.0
        %457 = vmatprep.subr.mxu0 0.0
        %458 = vmatpush2.msra.mxu0 0.0
        %459 = vmatprep.subr.mxu0 0.0
        %460 = vmatpush2.msra.mxu0 0.0
        %461 = vmatprep.mubr.f32.mxu0 0.0
        %462 = vmatmul.mubr.f32.gmra.mxu0 %v384
        %v463 = vpop.f32.mrf.mxu0
        %v464 = vadd.f32 0.0, %v463
        %v465 = vpop.f32.mrf.mxu0
        %v466 = vadd.f32 0.0, %v465
        %467 = vmatprep.mubr.f32.mxu0 0.0
        %468 = vmatmul.mubr.f32.gmra.mxu0 %v386
        %v469 = vpop.f32.mrf.mxu0
        %v470 = vadd.f32 0.0, %v469
        %v471 = vpop.f32.mrf.mxu0
        %v472 = vadd.f32 0.0, %v471
        %473 = vmatprep.mubr.f32.mxu0 0.0
        %474 = vmatmul.mubr.f32.gmra.mxu0 %v388
        %v475 = vpop.f32.mrf.mxu0
        %v476 = vadd.f32 0.0, %v475
        %v477 = vpop.f32.mrf.mxu0
        %v478 = vadd.f32 0.0, %v477
        %479 = vdwg.mxu0
        %v480 = vsel %vm383, %v330, 0
        %v482 = vsel %vm383, %v331, 0
        %v484 = vsel %vm383, %v332, 0
        %v487 = vsel %vm390, %v344, 0
        %v490 = vsel %vm390, %v345, 0
        %492 = vmatprep.subr.mxu0 0.0
        %493 = vmatpush1.msra.mxu0 0.0
        %494 = vmatprep.subr.mxu0 0.0
        %495 = vmatpush1.msra.mxu0 0.0
        %496 = vmatprep.subr.mxu0 0.0
        %497 = vmatpush1.msra.mxu0 0.0
        %498 = vmatprep.subr.mxu0 0.0
        %499 = vmatpush1.msra.mxu0 0.0
        %500 = vmatprep.subr.mxu0 0.0
        %501 = vmatpush1.msra.mxu0 0.0
        %502 = vmatprep.subr.mxu0 0.0
        %503 = vmatpush1.msra.mxu0 0.0
        %504 = vmatprep.subr.mxu0 0.0
        %505 = vmatpush1.msra.mxu0 0.0
        %506 = vmatprep.subr.mxu0 0.0
        %507 = vmatpush1.msra.mxu0 0.0
        %508 = vmatprep.subr.mxu0 0.0
        %509 = vmatpush1.msra.mxu0 0.0
        %510 = vmatprep.subr.mxu0 0.0
        %511 = vmatpush1.msra.mxu0 0.0
        %512 = vmatprep.subr.mxu0 %v490
        %513 = vmatpush1.msra.mxu0 %v487
        %514 = vmatprep.subr.mxu0 %v343
        %515 = vmatpush1.msra.mxu0 %v342
        %516 = vmatprep.subr.mxu0 %v341
        %517 = vmatpush1.msra.mxu0 %v340
        %518 = vmatprep.subr.mxu0 %v339
        %519 = vmatpush1.msra.mxu0 %v338
        %520 = vmatprep.subr.mxu0 %v337
        %521 = vmatpush1.msra.mxu0 %v336
        %522 = vmatprep.subr.mxu0 %v335
        %523 = vmatpush1.msra.mxu0 %v334
        %524 = vmatprep.subr.mxu0 0.0
        %525 = vmatpush2.msra.mxu0 0.0
        %526 = vmatprep.subr.mxu0 0.0
        %527 = vmatpush2.msra.mxu0 0.0
        %528 = vmatprep.subr.mxu0 0.0
        %529 = vmatpush2.msra.mxu0 0.0
        %530 = vmatprep.subr.mxu0 0.0
        %531 = vmatpush2.msra.mxu0 0.0
        %532 = vmatprep.subr.mxu0 0.0
        %533 = vmatpush2.msra.mxu0 0.0
        %534 = vmatprep.subr.mxu0 0.0
        %535 = vmatpush2.msra.mxu0 0.0
        %536 = vmatprep.subr.mxu0 0.0
        %537 = vmatpush2.msra.mxu0 0.0
        %538 = vmatprep.subr.mxu0 0.0
        %539 = vmatpush2.msra.mxu0 0.0
        %540 = vmatprep.subr.mxu0 0.0
        %541 = vmatpush2.msra.mxu0 0.0
        %542 = vmatprep.subr.mxu0 0.0
        %543 = vmatpush2.msra.mxu0 0.0
        %544 = vmatprep.subr.mxu0 0.0
        %545 = vmatpush2.msra.mxu0 0.0
        %546 = vmatprep.subr.mxu0 0.0
        %547 = vmatpush2.msra.mxu0 0.0
        %548 = vmatprep.subr.mxu0 0.0
        %549 = vmatpush2.msra.mxu0 0.0
        %550 = vmatprep.subr.mxu0 0.0
        %551 = vmatpush2.msra.mxu0 0.0
        %552 = vmatprep.subr.mxu0 0.0
        %553 = vmatpush2.msra.mxu0 0.0
        %554 = vmatprep.subr.mxu0 0.0
        %555 = vmatpush2.msra.mxu0 0.0
        %556 = vmatprep.mubr.f32.mxu0 0.0
        %557 = vmatmul.mubr.f32.gmra.mxu0 %v480
        %v558 = vpop.f32.mrf.mxu0
        %v559 = vadd.f32 %v464, %v558
        %v560 = vpop.f32.mrf.mxu0
        %v561 = vadd.f32 %v466, %v560
        %562 = vmatprep.mubr.f32.mxu0 0.0
        %563 = vmatmul.mubr.f32.gmra.mxu0 %v482
        %v564 = vpop.f32.mrf.mxu0
        %v565 = vadd.f32 %v470, %v564
        %v566 = vpop.f32.mrf.mxu0
        %v567 = vadd.f32 %v472, %v566
        %568 = vmatprep.mubr.f32.mxu0 0.0
        %569 = vmatmul.mubr.f32.gmra.mxu0 %v484
        %v570 = vpop.f32.mrf.mxu0
        %v571 = vadd.f32 %v476, %v570
        %v572 = vpop.f32.mrf.mxu0
        %v573 = vadd.f32 %v478, %v572
        %574 = vdwg.mxu0
        %s575 = scalar_lea.vmem %s2, 96
        %v576 = vld [vmem:[%s575] sm:$0xff]
        %v577 = vld [vmem:[%s575 + $0x8] sm:$0xff]
        %v578 = vld [vmem:[%s575 + $0x10] sm:$0xff]
        %v579 = vld [vmem:[%s575 + $0x18] sm:$0xff]
        %v580 = vld [vmem:[%s575 + $0x20] sm:$0xff]
        %v581 = vld [vmem:[%s575 + $0x28] sm:$0xff]
        %v582 = vld [vmem:[%s575 + $0x30] sm:$0xff]
        %v583 = vld [vmem:[%s575 + $0x38] sm:$0xff]
        %v584 = vld [vmem:[%s575 + $0x40] sm:$0xff]
        %v585 = vld [vmem:[%s575 + $0x48] sm:$0xff]
        %v586 = vld [vmem:[%s575 + $0x50] sm:$0xf]
        %v587 = vld [vmem:[%s575 + $0x58] sm:$0xf]
        %v589 = vsel %vm390, %v586, 0
        %v592 = vsel %vm390, %v587, 0
        %594 = vmatprep.subr.mxu0 0.0
        %595 = vmatpush1.msra.mxu0 0.0
        %596 = vmatprep.subr.mxu0 0.0
        %597 = vmatpush1.msra.mxu0 0.0
        %598 = vmatprep.subr.mxu0 0.0
        %599 = vmatpush1.msra.mxu0 0.0
        %600 = vmatprep.subr.mxu0 0.0
        %601 = vmatpush1.msra.mxu0 0.0
        %602 = vmatprep.subr.mxu0 0.0
        %603 = vmatpush1.msra.mxu0 0.0
        %604 = vmatprep.subr.mxu0 0.0
        %605 = vmatpush1.msra.mxu0 0.0
        %606 = vmatprep.subr.mxu0 0.0
        %607 = vmatpush1.msra.mxu0 0.0
        %608 = vmatprep.subr.mxu0 0.0
        %609 = vmatpush1.msra.mxu0 0.0
        %610 = vmatprep.subr.mxu0 0.0
        %611 = vmatpush1.msra.mxu0 0.0
        %612 = vmatprep.subr.mxu0 0.0
        %613 = vmatpush1.msra.mxu0 0.0
        %614 = vmatprep.subr.mxu0 %v592
        %615 = vmatpush1.msra.mxu0 %v589
        %616 = vmatprep.subr.mxu0 %v585
        %617 = vmatpush1.msra.mxu0 %v584
        %618 = vmatprep.subr.mxu0 %v583
        %619 = vmatpush1.msra.mxu0 %v582
        %620 = vmatprep.subr.mxu0 %v581
        %621 = vmatpush1.msra.mxu0 %v580
        %622 = vmatprep.subr.mxu0 %v579
        %623 = vmatpush1.msra.mxu0 %v578
        %624 = vmatprep.subr.mxu0 %v577
        %625 = vmatpush1.msra.mxu0 %v576
        %626 = vmatprep.subr.mxu0 0.0
        %627 = vmatpush2.msra.mxu0 0.0
        %628 = vmatprep.subr.mxu0 0.0
        %629 = vmatpush2.msra.mxu0 0.0
        %630 = vmatprep.subr.mxu0 0.0
        %631 = vmatpush2.msra.mxu0 0.0
        %632 = vmatprep.subr.mxu0 0.0
        %633 = vmatpush2.msra.mxu0 0.0
        %634 = vmatprep.subr.mxu0 0.0
        %635 = vmatpush2.msra.mxu0 0.0
        %636 = vmatprep.subr.mxu0 0.0
        %637 = vmatpush2.msra.mxu0 0.0
        %638 = vmatprep.subr.mxu0 0.0
        %639 = vmatpush2.msra.mxu0 0.0
        %640 = vmatprep.subr.mxu0 0.0
        %641 = vmatpush2.msra.mxu0 0.0
        %642 = vmatprep.subr.mxu0 0.0
        %643 = vmatpush2.msra.mxu0 0.0
        %644 = vmatprep.subr.mxu0 0.0
        %645 = vmatpush2.msra.mxu0 0.0
        %646 = vmatprep.subr.mxu0 0.0
        %647 = vmatpush2.msra.mxu0 0.0
        %648 = vmatprep.subr.mxu0 0.0
        %649 = vmatpush2.msra.mxu0 0.0
        %650 = vmatprep.subr.mxu0 0.0
        %651 = vmatpush2.msra.mxu0 0.0
        %652 = vmatprep.subr.mxu0 0.0
        %653 = vmatpush2.msra.mxu0 0.0
        %654 = vmatprep.subr.mxu0 0.0
        %655 = vmatpush2.msra.mxu0 0.0
        %656 = vmatprep.subr.mxu0 0.0
        %657 = vmatpush2.msra.mxu0 0.0
        %658 = vmatprep.mubr.f32.mxu0 0.0
        %659 = vmatmul.mubr.f32.gmra.mxu0 %v384
        %v660 = vpop.f32.mrf.mxu0
        %v661 = vadd.f32 0.0, %v660
        %v662 = vpop.f32.mrf.mxu0
        %v663 = vadd.f32 0.0, %v662
        %664 = vmatprep.mubr.f32.mxu0 0.0
        %665 = vmatmul.mubr.f32.gmra.mxu0 %v386
        %v666 = vpop.f32.mrf.mxu0
        %v667 = vadd.f32 0.0, %v666
        %v668 = vpop.f32.mrf.mxu0
        %v669 = vadd.f32 0.0, %v668
        %670 = vmatprep.mubr.f32.mxu0 0.0
        %671 = vmatmul.mubr.f32.gmra.mxu0 %v388
        %v672 = vpop.f32.mrf.mxu0
        %v673 = vadd.f32 0.0, %v672
        %v674 = vpop.f32.mrf.mxu0
        %v675 = vadd.f32 0.0, %v674
        %676 = vdwg.mxu0
        %v678 = vsel %vm390, %v356, 0
        %v681 = vsel %vm390, %v357, 0
        %683 = vmatprep.subr.mxu0 0.0
        %684 = vmatpush1.msra.mxu0 0.0
        %685 = vmatprep.subr.mxu0 0.0
        %686 = vmatpush1.msra.mxu0 0.0
        %687 = vmatprep.subr.mxu0 0.0
        %688 = vmatpush1.msra.mxu0 0.0
        %689 = vmatprep.subr.mxu0 0.0
        %690 = vmatpush1.msra.mxu0 0.0
        %691 = vmatprep.subr.mxu0 0.0
        %692 = vmatpush1.msra.mxu0 0.0
        %693 = vmatprep.subr.mxu0 0.0
        %694 = vmatpush1.msra.mxu0 0.0
        %695 = vmatprep.subr.mxu0 0.0
        %696 = vmatpush1.msra.mxu0 0.0
        %697 = vmatprep.subr.mxu0 0.0
        %698 = vmatpush1.msra.mxu0 0.0
        %699 = vmatprep.subr.mxu0 0.0
        %700 = vmatpush1.msra.mxu0 0.0
        %701 = vmatprep.subr.mxu0 0.0
        %702 = vmatpush1.msra.mxu0 0.0
        %703 = vmatprep.subr.mxu0 %v681
        %704 = vmatpush1.msra.mxu0 %v678
        %705 = vmatprep.subr.mxu0 %v355
        %706 = vmatpush1.msra.mxu0 %v354
        %707 = vmatprep.subr.mxu0 %v353
        %708 = vmatpush1.msra.mxu0 %v352
        %709 = vmatprep.subr.mxu0 %v351
        %710 = vmatpush1.msra.mxu0 %v350
        %711 = vmatprep.subr.mxu0 %v349
        %712 = vmatpush1.msra.mxu0 %v348
        %713 = vmatprep.subr.mxu0 %v347
        %714 = vmatpush1.msra.mxu0 %v346
        %715 = vmatprep.subr.mxu0 0.0
        %716 = vmatpush2.msra.mxu0 0.0
        %717 = vmatprep.subr.mxu0 0.0
        %718 = vmatpush2.msra.mxu0 0.0
        %719 = vmatprep.subr.mxu0 0.0
        %720 = vmatpush2.msra.mxu0 0.0
        %721 = vmatprep.subr.mxu0 0.0
        %722 = vmatpush2.msra.mxu0 0.0
        %723 = vmatprep.subr.mxu0 0.0
        %724 = vmatpush2.msra.mxu0 0.0
        %725 = vmatprep.subr.mxu0 0.0
        %726 = vmatpush2.msra.mxu0 0.0
        %727 = vmatprep.subr.mxu0 0.0
        %728 = vmatpush2.msra.mxu0 0.0
        %729 = vmatprep.subr.mxu0 0.0
        %730 = vmatpush2.msra.mxu0 0.0
        %731 = vmatprep.subr.mxu0 0.0
        %732 = vmatpush2.msra.mxu0 0.0
        %733 = vmatprep.subr.mxu0 0.0
        %734 = vmatpush2.msra.mxu0 0.0
        %735 = vmatprep.subr.mxu0 0.0
        %736 = vmatpush2.msra.mxu0 0.0
        %737 = vmatprep.subr.mxu0 0.0
        %738 = vmatpush2.msra.mxu0 0.0
        %739 = vmatprep.subr.mxu0 0.0
        %740 = vmatpush2.msra.mxu0 0.0
        %741 = vmatprep.subr.mxu0 0.0
        %742 = vmatpush2.msra.mxu0 0.0
        %743 = vmatprep.subr.mxu0 0.0
        %744 = vmatpush2.msra.mxu0 0.0
        %745 = vmatprep.subr.mxu0 0.0
        %746 = vmatpush2.msra.mxu0 0.0
        %747 = vmatprep.mubr.f32.mxu0 0.0
        %748 = vmatmul.mubr.f32.gmra.mxu0 %v480
        %v749 = vpop.f32.mrf.mxu0
        %v750 = vadd.f32 %v661, %v749
        %v751 = vpop.f32.mrf.mxu0
        %v752 = vadd.f32 %v663, %v751
        %753 = vmatprep.mubr.f32.mxu0 0.0
        %754 = vmatmul.mubr.f32.gmra.mxu0 %v482
        %v755 = vpop.f32.mrf.mxu0
        %v756 = vadd.f32 %v667, %v755
        %v757 = vpop.f32.mrf.mxu0
        %v758 = vadd.f32 %v669, %v757
        %759 = vmatprep.mubr.f32.mxu0 0.0
        %760 = vmatmul.mubr.f32.gmra.mxu0 %v484
        %v761 = vpop.f32.mrf.mxu0
        %v762 = vadd.f32 %v673, %v761
        %v763 = vpop.f32.mrf.mxu0
        %v764 = vadd.f32 %v675, %v763
        %765 = vdwg.mxu0
        %s766 = scalar_lea.vmem %s1, 192
        %v767 = vld [vmem:[%s766] sm:$0xff]
        %v768 = vld [vmem:[%s766 + $0x8] sm:$0xff]
        %v769 = vld [vmem:[%s766 + $0x10] sm:$0xff]
        %v770 = vld [vmem:[%s766 + $0x18] sm:$0xff]
        %v771 = vld [vmem:[%s766 + $0x20] sm:$0xff]
        %v772 = vld [vmem:[%s766 + $0x28] sm:$0xff]
        %v773 = vld [vmem:[%s766 + $0x30] sm:$0xff]
        %v774 = vld [vmem:[%s766 + $0x38] sm:$0xff]
        %v775 = vld [vmem:[%s766 + $0x40] sm:$0xff]
        %v776 = vld [vmem:[%s766 + $0x48] sm:$0xff]
        %v777 = vld [vmem:[%s766 + $0x50] sm:$0xf]
        %v778 = vld [vmem:[%s766 + $0x58] sm:$0xf]
        %vm779 = vcmask 1045504
        %v780 = vrot.slane %v330, 2
        %v781 = vrot.slane %v331, 2
        %v782 = vsel %vm779, %v780, %v781
        %v783 = vrot.slane %v332, 2
        %v784 = vsel %vm779, %v781, %v783
        %v785 = vrot.slane %v333, 2
        %v786 = vsel %vm779, %v783, %v785
        %v787 = vsel %vm383, %v782, 0
        %v789 = vsel %vm383, %v784, 0
        %v791 = vsel %vm383, %v786, 0
        %v794 = vsel %vm390, %v777, 0
        %v797 = vsel %vm390, %v778, 0
        %799 = vmatprep.subr.mxu0 0.0
        %800 = vmatpush1.msra.mxu0 0.0
        %801 = vmatprep.subr.mxu0 0.0
        %802 = vmatpush1.msra.mxu0 0.0
        %803 = vmatprep.subr.mxu0 0.0
        %804 = vmatpush1.msra.mxu0 0.0
        %805 = vmatprep.subr.mxu0 0.0
        %806 = vmatpush1.msra.mxu0 0.0
        %807 = vmatprep.subr.mxu0 0.0
        %808 = vmatpush1.msra.mxu0 0.0
        %809 = vmatprep.subr.mxu0 0.0
        %810 = vmatpush1.msra.mxu0 0.0
        %811 = vmatprep.subr.mxu0 0.0
        %812 = vmatpush1.msra.mxu0 0.0
        %813 = vmatprep.subr.mxu0 0.0
        %814 = vmatpush1.msra.mxu0 0.0
        %815 = vmatprep.subr.mxu0 0.0
        %816 = vmatpush1.msra.mxu0 0.0
        %817 = vmatprep.subr.mxu0 0.0
        %818 = vmatpush1.msra.mxu0 0.0
        %819 = vmatprep.subr.mxu0 %v797
        %820 = vmatpush1.msra.mxu0 %v794
        %821 = vmatprep.subr.mxu0 %v776
        %822 = vmatpush1.msra.mxu0 %v775
        %823 = vmatprep.subr.mxu0 %v774
        %824 = vmatpush1.msra.mxu0 %v773
        %825 = vmatprep.subr.mxu0 %v772
        %826 = vmatpush1.msra.mxu0 %v771
        %827 = vmatprep.subr.mxu0 %v770
        %828 = vmatpush1.msra.mxu0 %v769
        %829 = vmatprep.subr.mxu0 %v768
        %830 = vmatpush1.msra.mxu0 %v767
        %831 = vmatprep.subr.mxu0 0.0
        %832 = vmatpush2.msra.mxu0 0.0
        %833 = vmatprep.subr.mxu0 0.0
        %834 = vmatpush2.msra.mxu0 0.0
        %835 = vmatprep.subr.mxu0 0.0
        %836 = vmatpush2.msra.mxu0 0.0
        %837 = vmatprep.subr.mxu0 0.0
        %838 = vmatpush2.msra.mxu0 0.0
        %839 = vmatprep.subr.mxu0 0.0
        %840 = vmatpush2.msra.mxu0 0.0
        %841 = vmatprep.subr.mxu0 0.0
        %842 = vmatpush2.msra.mxu0 0.0
        %843 = vmatprep.subr.mxu0 0.0
        %844 = vmatpush2.msra.mxu0 0.0
        %845 = vmatprep.subr.mxu0 0.0
        %846 = vmatpush2.msra.mxu0 0.0
        %847 = vmatprep.subr.mxu0 0.0
        %848 = vmatpush2.msra.mxu0 0.0
        %849 = vmatprep.subr.mxu0 0.0
        %850 = vmatpush2.msra.mxu0 0.0
        %851 = vmatprep.subr.mxu0 0.0
        %852 = vmatpush2.msra.mxu0 0.0
        %853 = vmatprep.subr.mxu0 0.0
        %854 = vmatpush2.msra.mxu0 0.0
        %855 = vmatprep.subr.mxu0 0.0
        %856 = vmatpush2.msra.mxu0 0.0
        %857 = vmatprep.subr.mxu0 0.0
        %858 = vmatpush2.msra.mxu0 0.0
        %859 = vmatprep.subr.mxu0 0.0
        %860 = vmatpush2.msra.mxu0 0.0
        %861 = vmatprep.subr.mxu0 0.0
        %862 = vmatpush2.msra.mxu0 0.0
        %863 = vmatprep.mubr.f32.mxu0 0.0
        %864 = vmatmul.mubr.f32.gmra.mxu0 %v787
        %v865 = vpop.f32.mrf.mxu0
        %v866 = vadd.f32 0.0, %v865
        %v867 = vpop.f32.mrf.mxu0
        %v868 = vadd.f32 0.0, %v867
        %869 = vmatprep.mubr.f32.mxu0 0.0
        %870 = vmatmul.mubr.f32.gmra.mxu0 %v789
        %v871 = vpop.f32.mrf.mxu0
        %v872 = vadd.f32 0.0, %v871
        %v873 = vpop.f32.mrf.mxu0
        %v874 = vadd.f32 0.0, %v873
        %875 = vmatprep.mubr.f32.mxu0 0.0
        %876 = vmatmul.mubr.f32.gmra.mxu0 %v791
        %v877 = vpop.f32.mrf.mxu0
        %v878 = vadd.f32 0.0, %v877
        %v879 = vpop.f32.mrf.mxu0
        %v880 = vadd.f32 0.0, %v879
        %881 = vdwg.mxu0
        %v882 = vadd.f32 %v559, %v866
        %v883 = vadd.f32 %v561, %v868
        %v884 = vadd.f32 %v565, %v872
        %v885 = vadd.f32 %v567, %v874
        %v886 = vadd.f32 %v571, %v878
        %v887 = vadd.f32 %v573, %v880
        %s888 = scalar_lea.vmem %s2, 192
        %v889 = vld [vmem:[%s888] sm:$0xff]
        %v890 = vld [vmem:[%s888 + $0x8] sm:$0xff]
        %v891 = vld [vmem:[%s888 + $0x10] sm:$0xff]
        %v892 = vld [vmem:[%s888 + $0x18] sm:$0xff]
        %v893 = vld [vmem:[%s888 + $0x20] sm:$0xff]
        %v894 = vld [vmem:[%s888 + $0x28] sm:$0xff]
        %v895 = vld [vmem:[%s888 + $0x30] sm:$0xff]
        %v896 = vld [vmem:[%s888 + $0x38] sm:$0xff]
        %v897 = vld [vmem:[%s888 + $0x40] sm:$0xff]
        %v898 = vld [vmem:[%s888 + $0x48] sm:$0xff]
        %v899 = vld [vmem:[%s888 + $0x50] sm:$0xf]
        %v900 = vld [vmem:[%s888 + $0x58] sm:$0xf]
        %v902 = vsel %vm390, %v899, 0
        %v905 = vsel %vm390, %v900, 0
        %907 = vmatprep.subr.mxu0 0.0
        %908 = vmatpush1.msra.mxu0 0.0
        %909 = vmatprep.subr.mxu0 0.0
        %910 = vmatpush1.msra.mxu0 0.0
        %911 = vmatprep.subr.mxu0 0.0
        %912 = vmatpush1.msra.mxu0 0.0
        %913 = vmatprep.subr.mxu0 0.0
        %914 = vmatpush1.msra.mxu0 0.0
        %915 = vmatprep.subr.mxu0 0.0
        %916 = vmatpush1.msra.mxu0 0.0
        %917 = vmatprep.subr.mxu0 0.0
        %918 = vmatpush1.msra.mxu0 0.0
        %919 = vmatprep.subr.mxu0 0.0
        %920 = vmatpush1.msra.mxu0 0.0
        %921 = vmatprep.subr.mxu0 0.0
        %922 = vmatpush1.msra.mxu0 0.0
        %923 = vmatprep.subr.mxu0 0.0
        %924 = vmatpush1.msra.mxu0 0.0
        %925 = vmatprep.subr.mxu0 0.0
        %926 = vmatpush1.msra.mxu0 0.0
        %927 = vmatprep.subr.mxu0 %v905
        %928 = vmatpush1.msra.mxu0 %v902
        %929 = vmatprep.subr.mxu0 %v898
        %930 = vmatpush1.msra.mxu0 %v897
        %931 = vmatprep.subr.mxu0 %v896
        %932 = vmatpush1.msra.mxu0 %v895
        %933 = vmatprep.subr.mxu0 %v894
        %934 = vmatpush1.msra.mxu0 %v893
        %935 = vmatprep.subr.mxu0 %v892
        %936 = vmatpush1.msra.mxu0 %v891
        %937 = vmatprep.subr.mxu0 %v890
        %938 = vmatpush1.msra.mxu0 %v889
        %939 = vmatprep.subr.mxu0 0.0
        %940 = vmatpush2.msra.mxu0 0.0
        %941 = vmatprep.subr.mxu0 0.0
        %942 = vmatpush2.msra.mxu0 0.0
        %943 = vmatprep.subr.mxu0 0.0
        %944 = vmatpush2.msra.mxu0 0.0
        %945 = vmatprep.subr.mxu0 0.0
        %946 = vmatpush2.msra.mxu0 0.0
        %947 = vmatprep.subr.mxu0 0.0
        %948 = vmatpush2.msra.mxu0 0.0
        %949 = vmatprep.subr.mxu0 0.0
        %950 = vmatpush2.msra.mxu0 0.0
        %951 = vmatprep.subr.mxu0 0.0
        %952 = vmatpush2.msra.mxu0 0.0
        %953 = vmatprep.subr.mxu0 0.0
        %954 = vmatpush2.msra.mxu0 0.0
        %955 = vmatprep.subr.mxu0 0.0
        %956 = vmatpush2.msra.mxu0 0.0
        %957 = vmatprep.subr.mxu0 0.0
        %958 = vmatpush2.msra.mxu0 0.0
        %959 = vmatprep.subr.mxu0 0.0
        %960 = vmatpush2.msra.mxu0 0.0
        %961 = vmatprep.subr.mxu0 0.0
        %962 = vmatpush2.msra.mxu0 0.0
        %963 = vmatprep.subr.mxu0 0.0
        %964 = vmatpush2.msra.mxu0 0.0
        %965 = vmatprep.subr.mxu0 0.0
        %966 = vmatpush2.msra.mxu0 0.0
        %967 = vmatprep.subr.mxu0 0.0
        %968 = vmatpush2.msra.mxu0 0.0
        %969 = vmatprep.subr.mxu0 0.0
        %970 = vmatpush2.msra.mxu0 0.0
        %971 = vmatprep.mubr.f32.mxu0 0.0
        %972 = vmatmul.mubr.f32.gmra.mxu0 %v787
        %v973 = vpop.f32.mrf.mxu0
        %v974 = vadd.f32 0.0, %v973
        %v975 = vpop.f32.mrf.mxu0
        %v976 = vadd.f32 0.0, %v975
        %977 = vmatprep.mubr.f32.mxu0 0.0
        %978 = vmatmul.mubr.f32.gmra.mxu0 %v789
        %v979 = vpop.f32.mrf.mxu0
        %v980 = vadd.f32 0.0, %v979
        %v981 = vpop.f32.mrf.mxu0
        %v982 = vadd.f32 0.0, %v981
        %983 = vmatprep.mubr.f32.mxu0 0.0
        %984 = vmatmul.mubr.f32.gmra.mxu0 %v791
        %v985 = vpop.f32.mrf.mxu0
        %v986 = vadd.f32 0.0, %v985
        %v987 = vpop.f32.mrf.mxu0
        %v988 = vadd.f32 0.0, %v987
        %989 = vdwg.mxu0
        %v990 = vadd.f32 %v750, %v974
        %v991 = vadd.f32 %v752, %v976
        %v992 = vadd.f32 %v756, %v980
        %v993 = vadd.f32 %v758, %v982
        %v994 = vadd.f32 %v762, %v986
        %v995 = vadd.f32 %v764, %v988
        %s996 = scalar_lea.vmem %s1, 288
        %v997 = vld [vmem:[%s996] sm:$0xff]
        %v998 = vld [vmem:[%s996 + $0x8] sm:$0xff]
        %v999 = vld [vmem:[%s996 + $0x10] sm:$0xff]
        %v1000 = vld [vmem:[%s996 + $0x18] sm:$0xff]
        %v1001 = vld [vmem:[%s996 + $0x20] sm:$0xff]
        %v1002 = vld [vmem:[%s996 + $0x28] sm:$0xff]
        %v1003 = vld [vmem:[%s996 + $0x30] sm:$0xff]
        %v1004 = vld [vmem:[%s996 + $0x38] sm:$0xff]
        %v1005 = vld [vmem:[%s996 + $0x40] sm:$0xff]
        %v1006 = vld [vmem:[%s996 + $0x48] sm:$0xff]
        %v1007 = vld [vmem:[%s996 + $0x50] sm:$0xf]
        %v1008 = vld [vmem:[%s996 + $0x58] sm:$0xf]
        %vm1009 = vcmask 1044480
        %v1010 = vrot.slane %v330, 3
        %v1011 = vrot.slane %v331, 3
        %v1012 = vsel %vm1009, %v1010, %v1011
        %v1013 = vrot.slane %v332, 3
        %v1014 = vsel %vm1009, %v1011, %v1013
        %v1015 = vrot.slane %v333, 3
        %v1016 = vsel %vm1009, %v1013, %v1015
        %v1017 = vsel %vm383, %v1012, 0
        %v1019 = vsel %vm383, %v1014, 0
        %v1021 = vsel %vm383, %v1016, 0
        %v1024 = vsel %vm390, %v1007, 0
        %v1027 = vsel %vm390, %v1008, 0
        %1029 = vmatprep.subr.mxu0 0.0
        %1030 = vmatpush1.msra.mxu0 0.0
        %1031 = vmatprep.subr.mxu0 0.0
        %1032 = vmatpush1.msra.mxu0 0.0
        %1033 = vmatprep.subr.mxu0 0.0
        %1034 = vmatpush1.msra.mxu0 0.0
        %1035 = vmatprep.subr.mxu0 0.0
        %1036 = vmatpush1.msra.mxu0 0.0
        %1037 = vmatprep.subr.mxu0 0.0
        %1038 = vmatpush1.msra.mxu0 0.0
        %1039 = vmatprep.subr.mxu0 0.0
        %1040 = vmatpush1.msra.mxu0 0.0
        %1041 = vmatprep.subr.mxu0 0.0
        %1042 = vmatpush1.msra.mxu0 0.0
        %1043 = vmatprep.subr.mxu0 0.0
        %1044 = vmatpush1.msra.mxu0 0.0
        %1045 = vmatprep.subr.mxu0 0.0
        %1046 = vmatpush1.msra.mxu0 0.0
        %1047 = vmatprep.subr.mxu0 0.0
        %1048 = vmatpush1.msra.mxu0 0.0
        %1049 = vmatprep.subr.mxu0 %v1027
        %1050 = vmatpush1.msra.mxu0 %v1024
        %1051 = vmatprep.subr.mxu0 %v1006
        %1052 = vmatpush1.msra.mxu0 %v1005
        %1053 = vmatprep.subr.mxu0 %v1004
        %1054 = vmatpush1.msra.mxu0 %v1003
        %1055 = vmatprep.subr.mxu0 %v1002
        %1056 = vmatpush1.msra.mxu0 %v1001
        %1057 = vmatprep.subr.mxu0 %v1000
        %1058 = vmatpush1.msra.mxu0 %v999
        %1059 = vmatprep.subr.mxu0 %v998
        %1060 = vmatpush1.msra.mxu0 %v997
        %1061 = vmatprep.subr.mxu0 0.0
        %1062 = vmatpush2.msra.mxu0 0.0
        %1063 = vmatprep.subr.mxu0 0.0
        %1064 = vmatpush2.msra.mxu0 0.0
        %1065 = vmatprep.subr.mxu0 0.0
        %1066 = vmatpush2.msra.mxu0 0.0
        %1067 = vmatprep.subr.mxu0 0.0
        %1068 = vmatpush2.msra.mxu0 0.0
        %1069 = vmatprep.subr.mxu0 0.0
        %1070 = vmatpush2.msra.mxu0 0.0
        %1071 = vmatprep.subr.mxu0 0.0
        %1072 = vmatpush2.msra.mxu0 0.0
        %1073 = vmatprep.subr.mxu0 0.0
        %1074 = vmatpush2.msra.mxu0 0.0
        %1075 = vmatprep.subr.mxu0 0.0
        %1076 = vmatpush2.msra.mxu0 0.0
        %1077 = vmatprep.subr.mxu0 0.0
        %1078 = vmatpush2.msra.mxu0 0.0
        %1079 = vmatprep.subr.mxu0 0.0
        %1080 = vmatpush2.msra.mxu0 0.0
        %1081 = vmatprep.subr.mxu0 0.0
        %1082 = vmatpush2.msra.mxu0 0.0
        %1083 = vmatprep.subr.mxu0 0.0
        %1084 = vmatpush2.msra.mxu0 0.0
        %1085 = vmatprep.subr.mxu0 0.0
        %1086 = vmatpush2.msra.mxu0 0.0
        %1087 = vmatprep.subr.mxu0 0.0
        %1088 = vmatpush2.msra.mxu0 0.0
        %1089 = vmatprep.subr.mxu0 0.0
        %1090 = vmatpush2.msra.mxu0 0.0
        %1091 = vmatprep.subr.mxu0 0.0
        %1092 = vmatpush2.msra.mxu0 0.0
        %1093 = vmatprep.mubr.f32.mxu0 0.0
        %1094 = vmatmul.mubr.f32.gmra.mxu0 %v1017
        %v1095 = vpop.f32.mrf.mxu0
        %v1096 = vadd.f32 0.0, %v1095
        %v1097 = vpop.f32.mrf.mxu0
        %v1098 = vadd.f32 0.0, %v1097
        %1099 = vmatprep.mubr.f32.mxu0 0.0
        %1100 = vmatmul.mubr.f32.gmra.mxu0 %v1019
        %v1101 = vpop.f32.mrf.mxu0
        %v1102 = vadd.f32 0.0, %v1101
        %v1103 = vpop.f32.mrf.mxu0
        %v1104 = vadd.f32 0.0, %v1103
        %1105 = vmatprep.mubr.f32.mxu0 0.0
        %1106 = vmatmul.mubr.f32.gmra.mxu0 %v1021
        %v1107 = vpop.f32.mrf.mxu0
        %v1108 = vadd.f32 0.0, %v1107
        %v1109 = vpop.f32.mrf.mxu0
        %v1110 = vadd.f32 0.0, %v1109
        %1111 = vdwg.mxu0
        %v1112 = vadd.f32 %v882, %v1096
        %v1113 = vadd.f32 %v883, %v1098
        %v1114 = vadd.f32 %v884, %v1102
        %v1115 = vadd.f32 %v885, %v1104
        %v1116 = vadd.f32 %v886, %v1108
        %v1117 = vadd.f32 %v887, %v1110
        %s1118 = scalar_lea.vmem %s2, 288
        %v1119 = vld [vmem:[%s1118] sm:$0xff]
        %v1120 = vld [vmem:[%s1118 + $0x8] sm:$0xff]
        %v1121 = vld [vmem:[%s1118 + $0x10] sm:$0xff]
        %v1122 = vld [vmem:[%s1118 + $0x18] sm:$0xff]
        %v1123 = vld [vmem:[%s1118 + $0x20] sm:$0xff]
        %v1124 = vld [vmem:[%s1118 + $0x28] sm:$0xff]
        %v1125 = vld [vmem:[%s1118 + $0x30] sm:$0xff]
        %v1126 = vld [vmem:[%s1118 + $0x38] sm:$0xff]
        %v1127 = vld [vmem:[%s1118 + $0x40] sm:$0xff]
        %v1128 = vld [vmem:[%s1118 + $0x48] sm:$0xff]
        %v1129 = vld [vmem:[%s1118 + $0x50] sm:$0xf]
        %v1130 = vld [vmem:[%s1118 + $0x58] sm:$0xf]
        %v1132 = vsel %vm390, %v1129, 0
        %v1135 = vsel %vm390, %v1130, 0
        %1137 = vmatprep.subr.mxu0 0.0
        %1138 = vmatpush1.msra.mxu0 0.0
        %1139 = vmatprep.subr.mxu0 0.0
        %1140 = vmatpush1.msra.mxu0 0.0
        %1141 = vmatprep.subr.mxu0 0.0
        %1142 = vmatpush1.msra.mxu0 0.0
        %1143 = vmatprep.subr.mxu0 0.0
        %1144 = vmatpush1.msra.mxu0 0.0
        %1145 = vmatprep.subr.mxu0 0.0
        %1146 = vmatpush1.msra.mxu0 0.0
        %1147 = vmatprep.subr.mxu0 0.0
        %1148 = vmatpush1.msra.mxu0 0.0
        %1149 = vmatprep.subr.mxu0 0.0
        %1150 = vmatpush1.msra.mxu0 0.0
        %1151 = vmatprep.subr.mxu0 0.0
        %1152 = vmatpush1.msra.mxu0 0.0
        %1153 = vmatprep.subr.mxu0 0.0
        %1154 = vmatpush1.msra.mxu0 0.0
        %1155 = vmatprep.subr.mxu0 0.0
        %1156 = vmatpush1.msra.mxu0 0.0
        %1157 = vmatprep.subr.mxu0 %v1135
        %1158 = vmatpush1.msra.mxu0 %v1132
        %1159 = vmatprep.subr.mxu0 %v1128
        %1160 = vmatpush1.msra.mxu0 %v1127
        %1161 = vmatprep.subr.mxu0 %v1126
        %1162 = vmatpush1.msra.mxu0 %v1125
        %1163 = vmatprep.subr.mxu0 %v1124
        %1164 = vmatpush1.msra.mxu0 %v1123
        %1165 = vmatprep.subr.mxu0 %v1122
        %1166 = vmatpush1.msra.mxu0 %v1121
        %1167 = vmatprep.subr.mxu0 %v1120
        %1168 = vmatpush1.msra.mxu0 %v1119
        %1169 = vmatprep.subr.mxu0 0.0
        %1170 = vmatpush2.msra.mxu0 0.0
        %1171 = vmatprep.subr.mxu0 0.0
        %1172 = vmatpush2.msra.mxu0 0.0
        %1173 = vmatprep.subr.mxu0 0.0
        %1174 = vmatpush2.msra.mxu0 0.0
        %1175 = vmatprep.subr.mxu0 0.0
        %1176 = vmatpush2.msra.mxu0 0.0
        %1177 = vmatprep.subr.mxu0 0.0
        %1178 = vmatpush2.msra.mxu0 0.0
        %1179 = vmatprep.subr.mxu0 0.0
        %1180 = vmatpush2.msra.mxu0 0.0
        %1181 = vmatprep.subr.mxu0 0.0
        %1182 = vmatpush2.msra.mxu0 0.0
        %1183 = vmatprep.subr.mxu0 0.0
        %1184 = vmatpush2.msra.mxu0 0.0
        %1185 = vmatprep.subr.mxu0 0.0
        %1186 = vmatpush2.msra.mxu0 0.0
        %1187 = vmatprep.subr.mxu0 0.0
        %1188 = vmatpush2.msra.mxu0 0.0
        %1189 = vmatprep.subr.mxu0 0.0
        %1190 = vmatpush2.msra.mxu0 0.0
        %1191 = vmatprep.subr.mxu0 0.0
        %1192 = vmatpush2.msra.mxu0 0.0
        %1193 = vmatprep.subr.mxu0 0.0
        %1194 = vmatpush2.msra.mxu0 0.0
        %1195 = vmatprep.subr.mxu0 0.0
        %1196 = vmatpush2.msra.mxu0 0.0
        %1197 = vmatprep.subr.mxu0 0.0
        %1198 = vmatpush2.msra.mxu0 0.0
        %1199 = vmatprep.subr.mxu0 0.0
        %1200 = vmatpush2.msra.mxu0 0.0
        %1201 = vmatprep.mubr.f32.mxu0 0.0
        %1202 = vmatmul.mubr.f32.gmra.mxu0 %v1017
        %v1203 = vpop.f32.mrf.mxu0
        %v1204 = vadd.f32 0.0, %v1203
        %v1205 = vpop.f32.mrf.mxu0
        %v1206 = vadd.f32 0.0, %v1205
        %1207 = vmatprep.mubr.f32.mxu0 0.0
        %1208 = vmatmul.mubr.f32.gmra.mxu0 %v1019
        %v1209 = vpop.f32.mrf.mxu0
        %v1210 = vadd.f32 0.0, %v1209
        %v1211 = vpop.f32.mrf.mxu0
        %v1212 = vadd.f32 0.0, %v1211
        %1213 = vmatprep.mubr.f32.mxu0 0.0
        %1214 = vmatmul.mubr.f32.gmra.mxu0 %v1021
        %v1215 = vpop.f32.mrf.mxu0
        %v1216 = vadd.f32 0.0, %v1215
        %v1217 = vpop.f32.mrf.mxu0
        %v1218 = vadd.f32 0.0, %v1217
        %1219 = vdwg.mxu0
        %v1220 = vadd.f32 %v990, %v1204
        %v1221 = vadd.f32 %v991, %v1206
        %v1222 = vadd.f32 %v992, %v1210
        %v1223 = vadd.f32 %v993, %v1212
        %v1224 = vadd.f32 %v994, %v1216
        %v1225 = vadd.f32 %v995, %v1218
        %s1226 = scalar_lea.vmem %s1, 384
        %v1227 = vld [vmem:[%s1226] sm:$0xff]
        %v1228 = vld [vmem:[%s1226 + $0x8] sm:$0xff]
        %v1229 = vld [vmem:[%s1226 + $0x10] sm:$0xff]
        %v1230 = vld [vmem:[%s1226 + $0x18] sm:$0xff]
        %v1231 = vld [vmem:[%s1226 + $0x20] sm:$0xff]
        %v1232 = vld [vmem:[%s1226 + $0x28] sm:$0xff]
        %v1233 = vld [vmem:[%s1226 + $0x30] sm:$0xff]
        %v1234 = vld [vmem:[%s1226 + $0x38] sm:$0xff]
        %v1235 = vld [vmem:[%s1226 + $0x40] sm:$0xff]
        %v1236 = vld [vmem:[%s1226 + $0x48] sm:$0xff]
        %v1237 = vld [vmem:[%s1226 + $0x50] sm:$0xf]
        %v1238 = vld [vmem:[%s1226 + $0x58] sm:$0xf]
        %v1239 = vrot.slane %v330, 4
        %v1240 = vrot.slane %v331, 4
        %v1241 = vsel %vm390, %v1239, %v1240
        %v1242 = vrot.slane %v332, 4
        %v1243 = vsel %vm390, %v1240, %v1242
        %v1244 = vrot.slane %v333, 4
        %v1245 = vsel %vm390, %v1242, %v1244
        %v1246 = vsel %vm383, %v1241, 0
        %v1248 = vsel %vm383, %v1243, 0
        %v1250 = vsel %vm383, %v1245, 0
        %v1253 = vsel %vm390, %v1237, 0
        %v1256 = vsel %vm390, %v1238, 0
        %1258 = vmatprep.subr.mxu0 0.0
        %1259 = vmatpush1.msra.mxu0 0.0
        %1260 = vmatprep.subr.mxu0 0.0
        %1261 = vmatpush1.msra.mxu0 0.0
        %1262 = vmatprep.subr.mxu0 0.0
        %1263 = vmatpush1.msra.mxu0 0.0
        %1264 = vmatprep.subr.mxu0 0.0
        %1265 = vmatpush1.msra.mxu0 0.0
        %1266 = vmatprep.subr.mxu0 0.0
        %1267 = vmatpush1.msra.mxu0 0.0
        %1268 = vmatprep.subr.mxu0 0.0
        %1269 = vmatpush1.msra.mxu0 0.0
        %1270 = vmatprep.subr.mxu0 0.0
        %1271 = vmatpush1.msra.mxu0 0.0
        %1272 = vmatprep.subr.mxu0 0.0
        %1273 = vmatpush1.msra.mxu0 0.0
        %1274 = vmatprep.subr.mxu0 0.0
        %1275 = vmatpush1.msra.mxu0 0.0
        %1276 = vmatprep.subr.mxu0 0.0
        %1277 = vmatpush1.msra.mxu0 0.0
        %1278 = vmatprep.subr.mxu0 %v1256
        %1279 = vmatpush1.msra.mxu0 %v1253
        %1280 = vmatprep.subr.mxu0 %v1236
        %1281 = vmatpush1.msra.mxu0 %v1235
        %1282 = vmatprep.subr.mxu0 %v1234
        %1283 = vmatpush1.msra.mxu0 %v1233
        %1284 = vmatprep.subr.mxu0 %v1232
        %1285 = vmatpush1.msra.mxu0 %v1231
        %1286 = vmatprep.subr.mxu0 %v1230
        %1287 = vmatpush1.msra.mxu0 %v1229
        %1288 = vmatprep.subr.mxu0 %v1228
        %1289 = vmatpush1.msra.mxu0 %v1227
        %1290 = vmatprep.subr.mxu0 0.0
        %1291 = vmatpush2.msra.mxu0 0.0
        %1292 = vmatprep.subr.mxu0 0.0
        %1293 = vmatpush2.msra.mxu0 0.0
        %1294 = vmatprep.subr.mxu0 0.0
        %1295 = vmatpush2.msra.mxu0 0.0
        %1296 = vmatprep.subr.mxu0 0.0
        %1297 = vmatpush2.msra.mxu0 0.0
        %1298 = vmatprep.subr.mxu0 0.0
        %1299 = vmatpush2.msra.mxu0 0.0
        %1300 = vmatprep.subr.mxu0 0.0
        %1301 = vmatpush2.msra.mxu0 0.0
        %1302 = vmatprep.subr.mxu0 0.0
        %1303 = vmatpush2.msra.mxu0 0.0
        %1304 = vmatprep.subr.mxu0 0.0
        %1305 = vmatpush2.msra.mxu0 0.0
        %1306 = vmatprep.subr.mxu0 0.0
        %1307 = vmatpush2.msra.mxu0 0.0
        %1308 = vmatprep.subr.mxu0 0.0
        %1309 = vmatpush2.msra.mxu0 0.0
        %1310 = vmatprep.subr.mxu0 0.0
        %1311 = vmatpush2.msra.mxu0 0.0
        %1312 = vmatprep.subr.mxu0 0.0
        %1313 = vmatpush2.msra.mxu0 0.0
        %1314 = vmatprep.subr.mxu0 0.0
        %1315 = vmatpush2.msra.mxu0 0.0
        %1316 = vmatprep.subr.mxu0 0.0
        %1317 = vmatpush2.msra.mxu0 0.0
        %1318 = vmatprep.subr.mxu0 0.0
        %1319 = vmatpush2.msra.mxu0 0.0
        %1320 = vmatprep.subr.mxu0 0.0
        %1321 = vmatpush2.msra.mxu0 0.0
        %1322 = vmatprep.mubr.f32.mxu0 0.0
        %1323 = vmatmul.mubr.f32.gmra.mxu0 %v1246
        %v1324 = vpop.f32.mrf.mxu0
        %v1325 = vadd.f32 0.0, %v1324
        %v1326 = vpop.f32.mrf.mxu0
        %v1327 = vadd.f32 0.0, %v1326
        %1328 = vmatprep.mubr.f32.mxu0 0.0
        %1329 = vmatmul.mubr.f32.gmra.mxu0 %v1248
        %v1330 = vpop.f32.mrf.mxu0
        %v1331 = vadd.f32 0.0, %v1330
        %v1332 = vpop.f32.mrf.mxu0
        %v1333 = vadd.f32 0.0, %v1332
        %1334 = vmatprep.mubr.f32.mxu0 0.0
        %1335 = vmatmul.mubr.f32.gmra.mxu0 %v1250
        %v1336 = vpop.f32.mrf.mxu0
        %v1337 = vadd.f32 0.0, %v1336
        %v1338 = vpop.f32.mrf.mxu0
        %v1339 = vadd.f32 0.0, %v1338
        %1340 = vdwg.mxu0
        %v1341 = vadd.f32 %v1112, %v1325
        %v1342 = vadd.f32 %v1113, %v1327
        %v1343 = vadd.f32 %v1114, %v1331
        %v1344 = vadd.f32 %v1115, %v1333
        %v1345 = vadd.f32 %v1116, %v1337
        %v1346 = vadd.f32 %v1117, %v1339
        %s1347 = scalar_lea.vmem %s2, 384
        %v1348 = vld [vmem:[%s1347] sm:$0xff]
        %v1349 = vld [vmem:[%s1347 + $0x8] sm:$0xff]
        %v1350 = vld [vmem:[%s1347 + $0x10] sm:$0xff]
        %v1351 = vld [vmem:[%s1347 + $0x18] sm:$0xff]
        %v1352 = vld [vmem:[%s1347 + $0x20] sm:$0xff]
        %v1353 = vld [vmem:[%s1347 + $0x28] sm:$0xff]
        %v1354 = vld [vmem:[%s1347 + $0x30] sm:$0xff]
        %v1355 = vld [vmem:[%s1347 + $0x38] sm:$0xff]
        %v1356 = vld [vmem:[%s1347 + $0x40] sm:$0xff]
        %v1357 = vld [vmem:[%s1347 + $0x48] sm:$0xff]
        %v1358 = vld [vmem:[%s1347 + $0x50] sm:$0xf]
        %v1359 = vld [vmem:[%s1347 + $0x58] sm:$0xf]
        %v1361 = vsel %vm390, %v1358, 0
        %v1364 = vsel %vm390, %v1359, 0
        %1366 = vmatprep.subr.mxu0 0.0
        %1367 = vmatpush1.msra.mxu0 0.0
        %1368 = vmatprep.subr.mxu0 0.0
        %1369 = vmatpush1.msra.mxu0 0.0
        %1370 = vmatprep.subr.mxu0 0.0
        %1371 = vmatpush1.msra.mxu0 0.0
        %1372 = vmatprep.subr.mxu0 0.0
        %1373 = vmatpush1.msra.mxu0 0.0
        %1374 = vmatprep.subr.mxu0 0.0
        %1375 = vmatpush1.msra.mxu0 0.0
        %1376 = vmatprep.subr.mxu0 0.0
        %1377 = vmatpush1.msra.mxu0 0.0
        %1378 = vmatprep.subr.mxu0 0.0
        %1379 = vmatpush1.msra.mxu0 0.0
        %1380 = vmatprep.subr.mxu0 0.0
        %1381 = vmatpush1.msra.mxu0 0.0
        %1382 = vmatprep.subr.mxu0 0.0
        %1383 = vmatpush1.msra.mxu0 0.0
        %1384 = vmatprep.subr.mxu0 0.0
        %1385 = vmatpush1.msra.mxu0 0.0
        %1386 = vmatprep.subr.mxu0 %v1364
        %1387 = vmatpush1.msra.mxu0 %v1361
        %1388 = vmatprep.subr.mxu0 %v1357
        %1389 = vmatpush1.msra.mxu0 %v1356
        %1390 = vmatprep.subr.mxu0 %v1355
        %1391 = vmatpush1.msra.mxu0 %v1354
        %1392 = vmatprep.subr.mxu0 %v1353
        %1393 = vmatpush1.msra.mxu0 %v1352
        %1394 = vmatprep.subr.mxu0 %v1351
        %1395 = vmatpush1.msra.mxu0 %v1350
        %1396 = vmatprep.subr.mxu0 %v1349
        %1397 = vmatpush1.msra.mxu0 %v1348
        %1398 = vmatprep.subr.mxu0 0.0
        %1399 = vmatpush2.msra.mxu0 0.0
        %1400 = vmatprep.subr.mxu0 0.0
        %1401 = vmatpush2.msra.mxu0 0.0
        %1402 = vmatprep.subr.mxu0 0.0
        %1403 = vmatpush2.msra.mxu0 0.0
        %1404 = vmatprep.subr.mxu0 0.0
        %1405 = vmatpush2.msra.mxu0 0.0
        %1406 = vmatprep.subr.mxu0 0.0
        %1407 = vmatpush2.msra.mxu0 0.0
        %1408 = vmatprep.subr.mxu0 0.0
        %1409 = vmatpush2.msra.mxu0 0.0
        %1410 = vmatprep.subr.mxu0 0.0
        %1411 = vmatpush2.msra.mxu0 0.0
        %1412 = vmatprep.subr.mxu0 0.0
        %1413 = vmatpush2.msra.mxu0 0.0
        %1414 = vmatprep.subr.mxu0 0.0
        %1415 = vmatpush2.msra.mxu0 0.0
        %1416 = vmatprep.subr.mxu0 0.0
        %1417 = vmatpush2.msra.mxu0 0.0
        %1418 = vmatprep.subr.mxu0 0.0
        %1419 = vmatpush2.msra.mxu0 0.0
        %1420 = vmatprep.subr.mxu0 0.0
        %1421 = vmatpush2.msra.mxu0 0.0
        %1422 = vmatprep.subr.mxu0 0.0
        %1423 = vmatpush2.msra.mxu0 0.0
        %1424 = vmatprep.subr.mxu0 0.0
        %1425 = vmatpush2.msra.mxu0 0.0
        %1426 = vmatprep.subr.mxu0 0.0
        %1427 = vmatpush2.msra.mxu0 0.0
        %1428 = vmatprep.subr.mxu0 0.0
        %1429 = vmatpush2.msra.mxu0 0.0
        %1430 = vmatprep.mubr.f32.mxu0 0.0
        %1431 = vmatmul.mubr.f32.gmra.mxu0 %v1246
        %v1432 = vpop.f32.mrf.mxu0
        %v1433 = vadd.f32 0.0, %v1432
        %v1434 = vpop.f32.mrf.mxu0
        %v1435 = vadd.f32 0.0, %v1434
        %1436 = vmatprep.mubr.f32.mxu0 0.0
        %1437 = vmatmul.mubr.f32.gmra.mxu0 %v1248
        %v1438 = vpop.f32.mrf.mxu0
        %v1439 = vadd.f32 0.0, %v1438
        %v1440 = vpop.f32.mrf.mxu0
        %v1441 = vadd.f32 0.0, %v1440
        %1442 = vmatprep.mubr.f32.mxu0 0.0
        %1443 = vmatmul.mubr.f32.gmra.mxu0 %v1250
        %v1444 = vpop.f32.mrf.mxu0
        %v1445 = vadd.f32 0.0, %v1444
        %v1446 = vpop.f32.mrf.mxu0
        %v1447 = vadd.f32 0.0, %v1446
        %1448 = vdwg.mxu0
        %v1449 = vadd.f32 %v1220, %v1433
        %v1450 = vadd.f32 %v1221, %v1435
        %v1451 = vadd.f32 %v1222, %v1439
        %v1452 = vadd.f32 %v1223, %v1441
        %v1453 = vadd.f32 %v1224, %v1445
        %v1454 = vadd.f32 %v1225, %v1447
        %v1455 = vmax.f32 %v1341, %v1449
        %v1456 = vmax.f32 %v1342, %v1450
        %v1457 = vmax.f32 %v1343, %v1451
        %v1458 = vmax.f32 %v1344, %v1452
        %v1459 = vmax.f32 %v1345, %v1453
        %v1460 = vmax.f32 %v1346, %v1454
        %v1461 = vld [vmem:[%s3] sm:$0x3]
        %v1463 = vlaneseq
        %v1464 = vshrl.u32 %v1463, 7
        %v1465 = vsub.s32 0, %v1464
        %v1466 = vrot.slane %v1461, %v1465
        %v1467 = vlaneseq
        %v1468 = vshrl.u32 %v1467, 7
        %v1469 = vsub.s32 1, %v1468
        %v1470 = vrot.slane %v1461, %v1469
        %v1473 = vadd.f32 %v1455, %v1466
        %v1474 = vadd.f32 %v1456, %v1470
        %v1475 = vadd.f32 %v1457, %v1466
        %v1476 = vadd.f32 %v1458, %v1470
        %v1477 = vadd.f32 %v1459, %v1466
        %v1478 = vadd.f32 %v1460, %v1470
        %v1485 = vrot.slane %v1473, 1
        %v1486 = vrot.slane %v1475, 1
        %v1487 = vsel %vm375, %v1485, %v1486
        %v1488 = vrot.slane %v1474, 1
        %v1489 = vrot.slane %v1476, 1
        %v1490 = vsel %vm375, %v1488, %v1489
        %v1491 = vrot.slane %v1477, 1
        %v1492 = vsel %vm375, %v1486, %v1491
        %v1493 = vrot.slane %v1478, 1
        %v1494 = vsel %vm375, %v1489, %v1493
        %v1501 = vmax.f32 %v1473, %v1487
        %v1502 = vmax.f32 %v1474, %v1490
        %v1503 = vmax.f32 %v1475, %v1492
        %v1504 = vmax.f32 %v1476, %v1494
        %v1505 = vmax.f32 %v1477, %v1491
        %v1506 = vmax.f32 %v1478, %v1493
        %v1509 = vrot.slane %v1501, 1
        %v1510 = vrot.slane %v1502, 1
        %v1513 = vrot.slane %v1501, 2
        %v1514 = vrot.slane %v1502, 2
        %v1517 = vrot.slane %v1501, 3
        %v1518 = vrot.slane %v1502, 3
        %v1523 = vrot.slane %v1503, 4
        %v1524 = vrot.slane %v1504, 4
        %v1527 = vrot.slane %v1503, 5
        %v1528 = vrot.slane %v1504, 5
        %v1531 = vrot.slane %v1503, 6
        %v1532 = vrot.slane %v1504, 6
        %v1535 = vrot.slane %v1503, 7
        %v1536 = vrot.slane %v1504, 7
        %v1541 = vrot.slane %v1505, 1
        %v1542 = vrot.slane %v1506, 1
        %v1545 = vrot.slane %v1505, 2
        %v1546 = vrot.slane %v1506, 2
        %v1549 = vrot.slane %v1505, 3
        %v1550 = vrot.slane %v1506, 3
        %vm1553 = vcmask 1040384
        %v1554 = vsel %vm1553, %v1501, %v1509
        %v1555 = vsel %vm1553, %v1502, %v1510
        %vm1556 = vcmask 1041408
        %v1557 = vsel %vm1556, %v1554, %v1513
        %v1558 = vsel %vm1556, %v1555, %v1514
        %vm1559 = vcmask 1042432
        %v1560 = vsel %vm1559, %v1557, %v1517
        %v1561 = vsel %vm1559, %v1558, %v1518
        %v1562 = vsel %vm390, %v1560, %v1523
        %v1563 = vsel %vm390, %v1561, %v1524
        %v1564 = vsel %vm1009, %v1562, %v1527
        %v1565 = vsel %vm1009, %v1563, %v1528
        %v1566 = vsel %vm779, %v1564, %v1531
        %v1567 = vsel %vm779, %v1565, %v1532
        %v1568 = vsel %vm375, %v1566, %v1535
        %v1569 = vsel %vm375, %v1567, %v1536
        %v1570 = vsel %vm1553, %v1505, %v1541
        %v1571 = vsel %vm1553, %v1506, %v1542
        %v1572 = vsel %vm1556, %v1570, %v1545
        %v1573 = vsel %vm1556, %v1571, %v1546
        %v1574 = vsel %vm1559, %v1572, %v1549
        %v1575 = vsel %vm1559, %v1573, %v1550
        %v1576 = vmax.f32 %v1568, 0.0
        %v1577 = vmax.f32 %v1569, 0.0
        %v1578 = vmax.f32 %v1574, 0.0
        %v1579 = vmax.f32 %v1575, 0.0
        %v1580 = vld [vmem:[%s4] sm:$0xff]
        %v1581 = vld [vmem:[%s4 + $0x8] sm:$0xff]
        %v1582 = vld [vmem:[%s4 + $0x10] sm:$0xff]
        %v1583 = vld [vmem:[%s4 + $0x18] sm:$0xff]
        %v1584 = vld [vmem:[%s4 + $0x20] sm:$0xff]
        %v1585 = vld [vmem:[%s4 + $0x28] sm:$0xff]
        %v1586 = vld [vmem:[%s4 + $0x30] sm:$0xff]
        %v1587 = vld [vmem:[%s4 + $0x38] sm:$0xff]
        %v1588 = vld [vmem:[%s4 + $0x40] sm:$0xff]
        %v1589 = vld [vmem:[%s4 + $0x48] sm:$0xff]
        %v1590 = vld [vmem:[%s4 + $0x50] sm:$0xff]
        %v1591 = vld [vmem:[%s4 + $0x58] sm:$0xff]
        %v1592 = vld [vmem:[%s4 + $0x60] sm:$0xff]
        %v1593 = vld [vmem:[%s4 + $0x68] sm:$0xff]
        %v1594 = vld [vmem:[%s4 + $0x70] sm:$0xff]
        %v1595 = vld [vmem:[%s4 + $0x78] sm:$0xff]
        %v1596 = vld [vmem:[%s4 + $0x80] sm:$0xff]
        %v1597 = vld [vmem:[%s4 + $0x88] sm:$0xff]
        %v1598 = vld [vmem:[%s4 + $0x90] sm:$0xff]
        %v1599 = vld [vmem:[%s4 + $0x98] sm:$0xff]
        %v1600 = vld [vmem:[%s4 + $0xa0] sm:$0xff]
        %v1601 = vld [vmem:[%s4 + $0xa8] sm:$0xff]
        %v1602 = vld [vmem:[%s4 + $0xb0] sm:$0xff]
        %v1603 = vld [vmem:[%s4 + $0xb8] sm:$0xff]
        %v1604 = vld [vmem:[%s4 + $0xc0] sm:$0xff]
        %v1605 = vld [vmem:[%s5] sm:$0xff]
        %v1606 = vld [vmem:[%s5 + $0x8] sm:$0xff]
        %v1607 = vld [vmem:[%s5 + $0x10] sm:$0xff]
        %v1608 = vld [vmem:[%s5 + $0x18] sm:$0xff]
        %v1609 = vld [vmem:[%s5 + $0x20] sm:$0xff]
        %v1610 = vld [vmem:[%s5 + $0x28] sm:$0xff]
        %v1611 = vld [vmem:[%s5 + $0x30] sm:$0xff]
        %v1612 = vld [vmem:[%s5 + $0x38] sm:$0xff]
        %v1613 = vld [vmem:[%s5 + $0x40] sm:$0xff]
        %v1614 = vld [vmem:[%s5 + $0x48] sm:$0xff]
        %v1615 = vld [vmem:[%s5 + $0x50] sm:$0xff]
        %v1616 = vld [vmem:[%s5 + $0x58] sm:$0xff]
        %v1617 = vld [vmem:[%s5 + $0x60] sm:$0xff]
        %v1618 = vld [vmem:[%s5 + $0x68] sm:$0xff]
        %v1619 = vld [vmem:[%s5 + $0x70] sm:$0xff]
        %v1620 = vld [vmem:[%s5 + $0x78] sm:$0xff]
        %v1621 = vld [vmem:[%s5 + $0x80] sm:$0xff]
        %v1622 = vld [vmem:[%s5 + $0x88] sm:$0xff]
        %v1623 = vld [vmem:[%s5 + $0x90] sm:$0xff]
        %v1624 = vld [vmem:[%s5 + $0x98] sm:$0xff]
        %v1625 = vld [vmem:[%s5 + $0xa0] sm:$0xff]
        %v1626 = vld [vmem:[%s5 + $0xa8] sm:$0xff]
        %v1627 = vld [vmem:[%s5 + $0xb0] sm:$0xff]
        %v1628 = vld [vmem:[%s5 + $0xb8] sm:$0xff]
        %v1629 = vld [vmem:[%s5 + $0xc0] sm:$0xff]
        %s1630 = scalar_lea.vmem %s4, 200
        %v1631 = vld [vmem:[%s1630] sm:$0xff]
        %v1632 = vld [vmem:[%s1630 + $0x8] sm:$0xff]
        %v1633 = vld [vmem:[%s1630 + $0x10] sm:$0xff]
        %v1634 = vld [vmem:[%s1630 + $0x18] sm:$0xff]
        %v1635 = vld [vmem:[%s1630 + $0x20] sm:$0xff]
        %v1636 = vld [vmem:[%s1630 + $0x28] sm:$0xff]
        %v1637 = vld [vmem:[%s1630 + $0x30] sm:$0xff]
        %v1638 = vld [vmem:[%s1630 + $0x38] sm:$0xff]
        %v1639 = vld [vmem:[%s1630 + $0x40] sm:$0xff]
        %v1640 = vld [vmem:[%s1630 + $0x48] sm:$0xff]
        %v1641 = vld [vmem:[%s1630 + $0x50] sm:$0xff]
        %v1642 = vld [vmem:[%s1630 + $0x58] sm:$0xff]
        %v1643 = vld [vmem:[%s1630 + $0x60] sm:$0xff]
        %v1644 = vld [vmem:[%s1630 + $0x68] sm:$0xff]
        %v1645 = vld [vmem:[%s1630 + $0x70] sm:$0xff]
        %v1646 = vld [vmem:[%s1630 + $0x78] sm:$0xff]
        %v1647 = vld [vmem:[%s1630 + $0x80] sm:$0xff]
        %v1648 = vld [vmem:[%s1630 + $0x88] sm:$0xff]
        %v1649 = vld [vmem:[%s1630 + $0x90] sm:$0xff]
        %v1650 = vld [vmem:[%s1630 + $0x98] sm:$0xff]
        %v1651 = vld [vmem:[%s1630 + $0xa0] sm:$0xff]
        %v1652 = vld [vmem:[%s1630 + $0xa8] sm:$0xff]
        %v1653 = vld [vmem:[%s1630 + $0xb0] sm:$0xff]
        %v1654 = vld [vmem:[%s1630 + $0xb8] sm:$0xff]
        %v1655 = vld [vmem:[%s1630 + $0xc0] sm:$0xff]
        %v1660 = vrot.slane %v1576, 1
        %v1661 = vrot.slane %v1578, 1
        %v1662 = vsel %vm375, %v1660, %v1661
        %v1663 = vrot.slane %v1577, 1
        %v1664 = vrot.slane %v1579, 1
        %v1665 = vsel %vm375, %v1663, %v1664
        %vm1667 = vcmask 588800
        %v1668 = vsel %vm1667, %v1665, 0
        %1670 = vmatprep.subr.mxu0 0.0
        %1671 = vmatpush1.msra.mxu0 %v1646
        %1672 = vmatprep.subr.mxu0 0.0
        %1673 = vmatpush1.msra.mxu0 %v1645
        %1674 = vmatprep.subr.mxu0 0.0
        %1675 = vmatpush1.msra.mxu0 %v1644
        %1676 = vmatprep.subr.mxu0 0.0
        %1677 = vmatpush1.msra.mxu0 %v1643
        %1678 = vmatprep.subr.mxu0 0.0
        %1679 = vmatpush1.msra.mxu0 %v1642
        %1680 = vmatprep.subr.mxu0 0.0
        %1681 = vmatpush1.msra.mxu0 %v1641
        %1682 = vmatprep.subr.mxu0 0.0
        %1683 = vmatpush1.msra.mxu0 %v1640
        %1684 = vmatprep.subr.mxu0 0.0
        %1685 = vmatpush1.msra.mxu0 %v1639
        %1686 = vmatprep.subr.mxu0 0.0
        %1687 = vmatpush1.msra.mxu0 %v1638
        %1688 = vmatprep.subr.mxu0 0.0
        %1689 = vmatpush1.msra.mxu0 %v1637
        %1690 = vmatprep.subr.mxu0 0.0
        %1691 = vmatpush1.msra.mxu0 %v1636
        %1692 = vmatprep.subr.mxu0 0.0
        %1693 = vmatpush1.msra.mxu0 %v1635
        %1694 = vmatprep.subr.mxu0 0.0
        %1695 = vmatpush1.msra.mxu0 %v1634
        %1696 = vmatprep.subr.mxu0 0.0
        %1697 = vmatpush1.msra.mxu0 %v1633
        %1698 = vmatprep.subr.mxu0 0.0
        %1699 = vmatpush1.msra.mxu0 %v1632
        %1700 = vmatprep.subr.mxu0 0.0
        %1701 = vmatpush1.msra.mxu0 %v1631
        %1702 = vmatprep.subr.mxu0 0.0
        %1703 = vmatpush2.msra.mxu0 0.0
        %1704 = vmatprep.subr.mxu0 0.0
        %1705 = vmatpush2.msra.mxu0 0.0
        %1706 = vmatprep.subr.mxu0 0.0
        %1707 = vmatpush2.msra.mxu0 0.0
        %1708 = vmatprep.subr.mxu0 0.0
        %1709 = vmatpush2.msra.mxu0 0.0
        %1710 = vmatprep.subr.mxu0 0.0
        %1711 = vmatpush2.msra.mxu0 0.0
        %1712 = vmatprep.subr.mxu0 0.0
        %1713 = vmatpush2.msra.mxu0 0.0
        %1714 = vmatprep.subr.mxu0 0.0
        %1715 = vmatpush2.msra.mxu0 0.0
        %1716 = vmatprep.subr.mxu0 0.0
        %1717 = vmatpush2.msra.mxu0 %v1655
        %1718 = vmatprep.subr.mxu0 0.0
        %1719 = vmatpush2.msra.mxu0 %v1654
        %1720 = vmatprep.subr.mxu0 0.0
        %1721 = vmatpush2.msra.mxu0 %v1653
        %1722 = vmatprep.subr.mxu0 0.0
        %1723 = vmatpush2.msra.mxu0 %v1652
        %1724 = vmatprep.subr.mxu0 0.0
        %1725 = vmatpush2.msra.mxu0 %v1651
        %1726 = vmatprep.subr.mxu0 0.0
        %1727 = vmatpush2.msra.mxu0 %v1650
        %1728 = vmatprep.subr.mxu0 0.0
        %1729 = vmatpush2.msra.mxu0 %v1649
        %1730 = vmatprep.subr.mxu0 0.0
        %1731 = vmatpush2.msra.mxu0 %v1648
        %1732 = vmatprep.subr.mxu0 0.0
        %1733 = vmatpush2.msra.mxu0 %v1647
        %1734 = vmatprep.mubr.f32.mxu0 %v1668
        %1735 = vmatmul.mubr.f32.gmra.mxu0 %v1662
        %v1736 = vpop.f32.mrf.mxu0
        %v1737 = vadd.f32 0.0, %v1736
        %v1738 = vpop.f32.mrf.mxu0
        %1739 = vdwg.mxu0
        %v1740 = vsel %vm1667, %v1577, 0
        %1742 = vmatprep.subr.mxu0 0.0
        %1743 = vmatpush1.msra.mxu0 %v1595
        %1744 = vmatprep.subr.mxu0 0.0
        %1745 = vmatpush1.msra.mxu0 %v1594
        %1746 = vmatprep.subr.mxu0 0.0
        %1747 = vmatpush1.msra.mxu0 %v1593
        %1748 = vmatprep.subr.mxu0 0.0
        %1749 = vmatpush1.msra.mxu0 %v1592
        %1750 = vmatprep.subr.mxu0 0.0
        %1751 = vmatpush1.msra.mxu0 %v1591
        %1752 = vmatprep.subr.mxu0 0.0
        %1753 = vmatpush1.msra.mxu0 %v1590
        %1754 = vmatprep.subr.mxu0 0.0
        %1755 = vmatpush1.msra.mxu0 %v1589
        %1756 = vmatprep.subr.mxu0 0.0
        %1757 = vmatpush1.msra.mxu0 %v1588
        %1758 = vmatprep.subr.mxu0 0.0
        %1759 = vmatpush1.msra.mxu0 %v1587
        %1760 = vmatprep.subr.mxu0 0.0
        %1761 = vmatpush1.msra.mxu0 %v1586
        %1762 = vmatprep.subr.mxu0 0.0
        %1763 = vmatpush1.msra.mxu0 %v1585
        %1764 = vmatprep.subr.mxu0 0.0
        %1765 = vmatpush1.msra.mxu0 %v1584
        %1766 = vmatprep.subr.mxu0 0.0
        %1767 = vmatpush1.msra.mxu0 %v1583
        %1768 = vmatprep.subr.mxu0 0.0
        %1769 = vmatpush1.msra.mxu0 %v1582
        %1770 = vmatprep.subr.mxu0 0.0
        %1771 = vmatpush1.msra.mxu0 %v1581
        %1772 = vmatprep.subr.mxu0 0.0
        %1773 = vmatpush1.msra.mxu0 %v1580
        %1774 = vmatprep.subr.mxu0 0.0
        %1775 = vmatpush2.msra.mxu0 0.0
        %1776 = vmatprep.subr.mxu0 0.0
        %1777 = vmatpush2.msra.mxu0 0.0
        %1778 = vmatprep.subr.mxu0 0.0
        %1779 = vmatpush2.msra.mxu0 0.0
        %1780 = vmatprep.subr.mxu0 0.0
        %1781 = vmatpush2.msra.mxu0 0.0
        %1782 = vmatprep.subr.mxu0 0.0
        %1783 = vmatpush2.msra.mxu0 0.0
        %1784 = vmatprep.subr.mxu0 0.0
        %1785 = vmatpush2.msra.mxu0 0.0
        %1786 = vmatprep.subr.mxu0 0.0
        %1787 = vmatpush2.msra.mxu0 0.0
        %1788 = vmatprep.subr.mxu0 0.0
        %1789 = vmatpush2.msra.mxu0 %v1604
        %1790 = vmatprep.subr.mxu0 0.0
        %1791 = vmatpush2.msra.mxu0 %v1603
        %1792 = vmatprep.subr.mxu0 0.0
        %1793 = vmatpush2.msra.mxu0 %v1602
        %1794 = vmatprep.subr.mxu0 0.0
        %1795 = vmatpush2.msra.mxu0 %v1601
        %1796 = vmatprep.subr.mxu0 0.0
        %1797 = vmatpush2.msra.mxu0 %v1600
        %1798 = vmatprep.subr.mxu0 0.0
        %1799 = vmatpush2.msra.mxu0 %v1599
        %1800 = vmatprep.subr.mxu0 0.0
        %1801 = vmatpush2.msra.mxu0 %v1598
        %1802 = vmatprep.subr.mxu0 0.0
        %1803 = vmatpush2.msra.mxu0 %v1597
        %1804 = vmatprep.subr.mxu0 0.0
        %1805 = vmatpush2.msra.mxu0 %v1596
        %1806 = vmatprep.mubr.f32.mxu0 %v1740
        %1807 = vmatmul.mubr.f32.gmra.mxu0 %v1576
        %v1808 = vpop.f32.mrf.mxu0
        %v1809 = vadd.f32 %v1737, %v1808
        %v1810 = vpop.f32.mrf.mxu0
        %1811 = vdwg.mxu0
        %s1812 = scalar_lea.vmem %s5, 200
        %v1813 = vld [vmem:[%s1812] sm:$0xff]
        %v1814 = vld [vmem:[%s1812 + $0x8] sm:$0xff]
        %v1815 = vld [vmem:[%s1812 + $0x10] sm:$0xff]
        %v1816 = vld [vmem:[%s1812 + $0x18] sm:$0xff]
        %v1817 = vld [vmem:[%s1812 + $0x20] sm:$0xff]
        %v1818 = vld [vmem:[%s1812 + $0x28] sm:$0xff]
        %v1819 = vld [vmem:[%s1812 + $0x30] sm:$0xff]
        %v1820 = vld [vmem:[%s1812 + $0x38] sm:$0xff]
        %v1821 = vld [vmem:[%s1812 + $0x40] sm:$0xff]
        %v1822 = vld [vmem:[%s1812 + $0x48] sm:$0xff]
        %v1823 = vld [vmem:[%s1812 + $0x50] sm:$0xff]
        %v1824 = vld [vmem:[%s1812 + $0x58] sm:$0xff]
        %v1825 = vld [vmem:[%s1812 + $0x60] sm:$0xff]
        %v1826 = vld [vmem:[%s1812 + $0x68] sm:$0xff]
        %v1827 = vld [vmem:[%s1812 + $0x70] sm:$0xff]
        %v1828 = vld [vmem:[%s1812 + $0x78] sm:$0xff]
        %v1829 = vld [vmem:[%s1812 + $0x80] sm:$0xff]
        %v1830 = vld [vmem:[%s1812 + $0x88] sm:$0xff]
        %v1831 = vld [vmem:[%s1812 + $0x90] sm:$0xff]
        %v1832 = vld [vmem:[%s1812 + $0x98] sm:$0xff]
        %v1833 = vld [vmem:[%s1812 + $0xa0] sm:$0xff]
        %v1834 = vld [vmem:[%s1812 + $0xa8] sm:$0xff]
        %v1835 = vld [vmem:[%s1812 + $0xb0] sm:$0xff]
        %v1836 = vld [vmem:[%s1812 + $0xb8] sm:$0xff]
        %v1837 = vld [vmem:[%s1812 + $0xc0] sm:$0xff]
        %1838 = vmatprep.subr.mxu0 0.0
        %1839 = vmatpush1.msra.mxu0 %v1828
        %1840 = vmatprep.subr.mxu0 0.0
        %1841 = vmatpush1.msra.mxu0 %v1827
        %1842 = vmatprep.subr.mxu0 0.0
        %1843 = vmatpush1.msra.mxu0 %v1826
        %1844 = vmatprep.subr.mxu0 0.0
        %1845 = vmatpush1.msra.mxu0 %v1825
        %1846 = vmatprep.subr.mxu0 0.0
        %1847 = vmatpush1.msra.mxu0 %v1824
        %1848 = vmatprep.subr.mxu0 0.0
        %1849 = vmatpush1.msra.mxu0 %v1823
        %1850 = vmatprep.subr.mxu0 0.0
        %1851 = vmatpush1.msra.mxu0 %v1822
        %1852 = vmatprep.subr.mxu0 0.0
        %1853 = vmatpush1.msra.mxu0 %v1821
        %1854 = vmatprep.subr.mxu0 0.0
        %1855 = vmatpush1.msra.mxu0 %v1820
        %1856 = vmatprep.subr.mxu0 0.0
        %1857 = vmatpush1.msra.mxu0 %v1819
        %1858 = vmatprep.subr.mxu0 0.0
        %1859 = vmatpush1.msra.mxu0 %v1818
        %1860 = vmatprep.subr.mxu0 0.0
        %1861 = vmatpush1.msra.mxu0 %v1817
        %1862 = vmatprep.subr.mxu0 0.0
        %1863 = vmatpush1.msra.mxu0 %v1816
        %1864 = vmatprep.subr.mxu0 0.0
        %1865 = vmatpush1.msra.mxu0 %v1815
        %1866 = vmatprep.subr.mxu0 0.0
        %1867 = vmatpush1.msra.mxu0 %v1814
        %1868 = vmatprep.subr.mxu0 0.0
        %1869 = vmatpush1.msra.mxu0 %v1813
        %1870 = vmatprep.subr.mxu0 0.0
        %1871 = vmatpush2.msra.mxu0 0.0
        %1872 = vmatprep.subr.mxu0 0.0
        %1873 = vmatpush2.msra.mxu0 0.0
        %1874 = vmatprep.subr.mxu0 0.0
        %1875 = vmatpush2.msra.mxu0 0.0
        %1876 = vmatprep.subr.mxu0 0.0
        %1877 = vmatpush2.msra.mxu0 0.0
        %1878 = vmatprep.subr.mxu0 0.0
        %1879 = vmatpush2.msra.mxu0 0.0
        %1880 = vmatprep.subr.mxu0 0.0
        %1881 = vmatpush2.msra.mxu0 0.0
        %1882 = vmatprep.subr.mxu0 0.0
        %1883 = vmatpush2.msra.mxu0 0.0
        %1884 = vmatprep.subr.mxu0 0.0
        %1885 = vmatpush2.msra.mxu0 %v1837
        %1886 = vmatprep.subr.mxu0 0.0
        %1887 = vmatpush2.msra.mxu0 %v1836
        %1888 = vmatprep.subr.mxu0 0.0
        %1889 = vmatpush2.msra.mxu0 %v1835
        %1890 = vmatprep.subr.mxu0 0.0
        %1891 = vmatpush2.msra.mxu0 %v1834
        %1892 = vmatprep.subr.mxu0 0.0
        %1893 = vmatpush2.msra.mxu0 %v1833
        %1894 = vmatprep.subr.mxu0 0.0
        %1895 = vmatpush2.msra.mxu0 %v1832
        %1896 = vmatprep.subr.mxu0 0.0
        %1897 = vmatpush2.msra.mxu0 %v1831
        %1898 = vmatprep.subr.mxu0 0.0
        %1899 = vmatpush2.msra.mxu0 %v1830
        %1900 = vmatprep.subr.mxu0 0.0
        %1901 = vmatpush2.msra.mxu0 %v1829
        %1902 = vmatprep.mubr.f32.mxu0 %v1668
        %1903 = vmatmul.mubr.f32.gmra.mxu0 %v1662
        %v1904 = vpop.f32.mrf.mxu0
        %v1905 = vadd.f32 0.0, %v1904
        %v1906 = vpop.f32.mrf.mxu0
        %1907 = vdwg.mxu0
        %1908 = vmatprep.subr.mxu0 0.0
        %1909 = vmatpush1.msra.mxu0 %v1620
        %1910 = vmatprep.subr.mxu0 0.0
        %1911 = vmatpush1.msra.mxu0 %v1619
        %1912 = vmatprep.subr.mxu0 0.0
        %1913 = vmatpush1.msra.mxu0 %v1618
        %1914 = vmatprep.subr.mxu0 0.0
        %1915 = vmatpush1.msra.mxu0 %v1617
        %1916 = vmatprep.subr.mxu0 0.0
        %1917 = vmatpush1.msra.mxu0 %v1616
        %1918 = vmatprep.subr.mxu0 0.0
        %1919 = vmatpush1.msra.mxu0 %v1615
        %1920 = vmatprep.subr.mxu0 0.0
        %1921 = vmatpush1.msra.mxu0 %v1614
        %1922 = vmatprep.subr.mxu0 0.0
        %1923 = vmatpush1.msra.mxu0 %v1613
        %1924 = vmatprep.subr.mxu0 0.0
        %1925 = vmatpush1.msra.mxu0 %v1612
        %1926 = vmatprep.subr.mxu0 0.0
        %1927 = vmatpush1.msra.mxu0 %v1611
        %1928 = vmatprep.subr.mxu0 0.0
        %1929 = vmatpush1.msra.mxu0 %v1610
        %1930 = vmatprep.subr.mxu0 0.0
        %1931 = vmatpush1.msra.mxu0 %v1609
        %1932 = vmatprep.subr.mxu0 0.0
        %1933 = vmatpush1.msra.mxu0 %v1608
        %1934 = vmatprep.subr.mxu0 0.0
        %1935 = vmatpush1.msra.mxu0 %v1607
        %1936 = vmatprep.subr.mxu0 0.0
        %1937 = vmatpush1.msra.mxu0 %v1606
        %1938 = vmatprep.subr.mxu0 0.0
        %1939 = vmatpush1.msra.mxu0 %v1605
        %1940 = vmatprep.subr.mxu0 0.0
        %1941 = vmatpush2.msra.mxu0 0.0
        %1942 = vmatprep.subr.mxu0 0.0
        %1943 = vmatpush2.msra.mxu0 0.0
        %1944 = vmatprep.subr.mxu0 0.0
        %1945 = vmatpush2.msra.mxu0 0.0
        %1946 = vmatprep.subr.mxu0 0.0
        %1947 = vmatpush2.msra.mxu0 0.0
        %1948 = vmatprep.subr.mxu0 0.0
        %1949 = vmatpush2.msra.mxu0 0.0
        %1950 = vmatprep.subr.mxu0 0.0
        %1951 = vmatpush2.msra.mxu0 0.0
        %1952 = vmatprep.subr.mxu0 0.0
        %1953 = vmatpush2.msra.mxu0 0.0
        %1954 = vmatprep.subr.mxu0 0.0
        %1955 = vmatpush2.msra.mxu0 %v1629
        %1956 = vmatprep.subr.mxu0 0.0
        %1957 = vmatpush2.msra.mxu0 %v1628
        %1958 = vmatprep.subr.mxu0 0.0
        %1959 = vmatpush2.msra.mxu0 %v1627
        %1960 = vmatprep.subr.mxu0 0.0
        %1961 = vmatpush2.msra.mxu0 %v1626
        %1962 = vmatprep.subr.mxu0 0.0
        %1963 = vmatpush2.msra.mxu0 %v1625
        %1964 = vmatprep.subr.mxu0 0.0
        %1965 = vmatpush2.msra.mxu0 %v1624
        %1966 = vmatprep.subr.mxu0 0.0
        %1967 = vmatpush2.msra.mxu0 %v1623
        %1968 = vmatprep.subr.mxu0 0.0
        %1969 = vmatpush2.msra.mxu0 %v1622
        %1970 = vmatprep.subr.mxu0 0.0
        %1971 = vmatpush2.msra.mxu0 %v1621
        %1972 = vmatprep.mubr.f32.mxu0 %v1740
        %1973 = vmatmul.mubr.f32.gmra.mxu0 %v1576
        %v1974 = vpop.f32.mrf.mxu0
        %v1975 = vadd.f32 %v1905, %v1974
        %v1976 = vpop.f32.mrf.mxu0
        %1977 = vdwg.mxu0
        %s1978 = scalar_lea.vmem %s4, 400
        %v1979 = vld [vmem:[%s1978] sm:$0xff]
        %v1980 = vld [vmem:[%s1978 + $0x8] sm:$0xff]
        %v1981 = vld [vmem:[%s1978 + $0x10] sm:$0xff]
        %v1982 = vld [vmem:[%s1978 + $0x18] sm:$0xff]
        %v1983 = vld [vmem:[%s1978 + $0x20] sm:$0xff]
        %v1984 = vld [vmem:[%s1978 + $0x28] sm:$0xff]
        %v1985 = vld [vmem:[%s1978 + $0x30] sm:$0xff]
        %v1986 = vld [vmem:[%s1978 + $0x38] sm:$0xff]
        %v1987 = vld [vmem:[%s1978 + $0x40] sm:$0xff]
        %v1988 = vld [vmem:[%s1978 + $0x48] sm:$0xff]
        %v1989 = vld [vmem:[%s1978 + $0x50] sm:$0xff]
        %v1990 = vld [vmem:[%s1978 + $0x58] sm:$0xff]
        %v1991 = vld [vmem:[%s1978 + $0x60] sm:$0xff]
        %v1992 = vld [vmem:[%s1978 + $0x68] sm:$0xff]
        %v1993 = vld [vmem:[%s1978 + $0x70] sm:$0xff]
        %v1994 = vld [vmem:[%s1978 + $0x78] sm:$0xff]
        %v1995 = vld [vmem:[%s1978 + $0x80] sm:$0xff]
        %v1996 = vld [vmem:[%s1978 + $0x88] sm:$0xff]
        %v1997 = vld [vmem:[%s1978 + $0x90] sm:$0xff]
        %v1998 = vld [vmem:[%s1978 + $0x98] sm:$0xff]
        %v1999 = vld [vmem:[%s1978 + $0xa0] sm:$0xff]
        %v2000 = vld [vmem:[%s1978 + $0xa8] sm:$0xff]
        %v2001 = vld [vmem:[%s1978 + $0xb0] sm:$0xff]
        %v2002 = vld [vmem:[%s1978 + $0xb8] sm:$0xff]
        %v2003 = vld [vmem:[%s1978 + $0xc0] sm:$0xff]
        %v2004 = vrot.slane %v1576, 2
        %v2005 = vrot.slane %v1578, 2
        %v2006 = vsel %vm779, %v2004, %v2005
        %v2007 = vrot.slane %v1577, 2
        %v2008 = vrot.slane %v1579, 2
        %v2009 = vsel %vm779, %v2007, %v2008
        %v2011 = vsel %vm1667, %v2009, 0
        %2013 = vmatprep.subr.mxu0 0.0
        %2014 = vmatpush1.msra.mxu0 %v1994
        %2015 = vmatprep.subr.mxu0 0.0
        %2016 = vmatpush1.msra.mxu0 %v1993
        %2017 = vmatprep.subr.mxu0 0.0
        %2018 = vmatpush1.msra.mxu0 %v1992
        %2019 = vmatprep.subr.mxu0 0.0
        %2020 = vmatpush1.msra.mxu0 %v1991
        %2021 = vmatprep.subr.mxu0 0.0
        %2022 = vmatpush1.msra.mxu0 %v1990
        %2023 = vmatprep.subr.mxu0 0.0
        %2024 = vmatpush1.msra.mxu0 %v1989
        %2025 = vmatprep.subr.mxu0 0.0
        %2026 = vmatpush1.msra.mxu0 %v1988
        %2027 = vmatprep.subr.mxu0 0.0
        %2028 = vmatpush1.msra.mxu0 %v1987
        %2029 = vmatprep.subr.mxu0 0.0
        %2030 = vmatpush1.msra.mxu0 %v1986
        %2031 = vmatprep.subr.mxu0 0.0
        %2032 = vmatpush1.msra.mxu0 %v1985
        %2033 = vmatprep.subr.mxu0 0.0
        %2034 = vmatpush1.msra.mxu0 %v1984
        %2035 = vmatprep.subr.mxu0 0.0
        %2036 = vmatpush1.msra.mxu0 %v1983
        %2037 = vmatprep.subr.mxu0 0.0
        %2038 = vmatpush1.msra.mxu0 %v1982
        %2039 = vmatprep.subr.mxu0 0.0
        %2040 = vmatpush1.msra.mxu0 %v1981
        %2041 = vmatprep.subr.mxu0 0.0
        %2042 = vmatpush1.msra.mxu0 %v1980
        %2043 = vmatprep.subr.mxu0 0.0
        %2044 = vmatpush1.msra.mxu0 %v1979
        %2045 = vmatprep.subr.mxu0 0.0
        %2046 = vmatpush2.msra.mxu0 0.0
        %2047 = vmatprep.subr.mxu0 0.0
        %2048 = vmatpush2.msra.mxu0 0.0
        %2049 = vmatprep.subr.mxu0 0.0
        %2050 = vmatpush2.msra.mxu0 0.0
        %2051 = vmatprep.subr.mxu0 0.0
        %2052 = vmatpush2.msra.mxu0 0.0
        %2053 = vmatprep.subr.mxu0 0.0
        %2054 = vmatpush2.msra.mxu0 0.0
        %2055 = vmatprep.subr.mxu0 0.0
        %2056 = vmatpush2.msra.mxu0 0.0
        %2057 = vmatprep.subr.mxu0 0.0
        %2058 = vmatpush2.msra.mxu0 0.0
        %2059 = vmatprep.subr.mxu0 0.0
        %2060 = vmatpush2.msra.mxu0 %v2003
        %2061 = vmatprep.subr.mxu0 0.0
        %2062 = vmatpush2.msra.mxu0 %v2002
        %2063 = vmatprep.subr.mxu0 0.0
        %2064 = vmatpush2.msra.mxu0 %v2001
        %2065 = vmatprep.subr.mxu0 0.0
        %2066 = vmatpush2.msra.mxu0 %v2000
        %2067 = vmatprep.subr.mxu0 0.0
        %2068 = vmatpush2.msra.mxu0 %v1999
        %2069 = vmatprep.subr.mxu0 0.0
        %2070 = vmatpush2.msra.mxu0 %v1998
        %2071 = vmatprep.subr.mxu0 0.0
        %2072 = vmatpush2.msra.mxu0 %v1997
        %2073 = vmatprep.subr.mxu0 0.0
        %2074 = vmatpush2.msra.mxu0 %v1996
        %2075 = vmatprep.subr.mxu0 0.0
        %2076 = vmatpush2.msra.mxu0 %v1995
        %2077 = vmatprep.mubr.f32.mxu0 %v2011
        %2078 = vmatmul.mubr.f32.gmra.mxu0 %v2006
        %v2079 = vpop.f32.mrf.mxu0
        %v2080 = vadd.f32 0.0, %v2079
        %v2081 = vpop.f32.mrf.mxu0
        %2082 = vdwg.mxu0
        %v2083 = vadd.f32 %v1809, %v2080
        %s2084 = scalar_lea.vmem %s5, 400
        %v2085 = vld [vmem:[%s2084] sm:$0xff]
        %v2086 = vld [vmem:[%s2084 + $0x8] sm:$0xff]
        %v2087 = vld [vmem:[%s2084 + $0x10] sm:$0xff]
        %v2088 = vld [vmem:[%s2084 + $0x18] sm:$0xff]
        %v2089 = vld [vmem:[%s2084 + $0x20] sm:$0xff]
        %v2090 = vld [vmem:[%s2084 + $0x28] sm:$0xff]
        %v2091 = vld [vmem:[%s2084 + $0x30] sm:$0xff]
        %v2092 = vld [vmem:[%s2084 + $0x38] sm:$0xff]
        %v2093 = vld [vmem:[%s2084 + $0x40] sm:$0xff]
        %v2094 = vld [vmem:[%s2084 + $0x48] sm:$0xff]
        %v2095 = vld [vmem:[%s2084 + $0x50] sm:$0xff]
        %v2096 = vld [vmem:[%s2084 + $0x58] sm:$0xff]
        %v2097 = vld [vmem:[%s2084 + $0x60] sm:$0xff]
        %v2098 = vld [vmem:[%s2084 + $0x68] sm:$0xff]
        %v2099 = vld [vmem:[%s2084 + $0x70] sm:$0xff]
        %v2100 = vld [vmem:[%s2084 + $0x78] sm:$0xff]
        %v2101 = vld [vmem:[%s2084 + $0x80] sm:$0xff]
        %v2102 = vld [vmem:[%s2084 + $0x88] sm:$0xff]
        %v2103 = vld [vmem:[%s2084 + $0x90] sm:$0xff]
        %v2104 = vld [vmem:[%s2084 + $0x98] sm:$0xff]
        %v2105 = vld [vmem:[%s2084 + $0xa0] sm:$0xff]
        %v2106 = vld [vmem:[%s2084 + $0xa8] sm:$0xff]
        %v2107 = vld [vmem:[%s2084 + $0xb0] sm:$0xff]
        %v2108 = vld [vmem:[%s2084 + $0xb8] sm:$0xff]
        %v2109 = vld [vmem:[%s2084 + $0xc0] sm:$0xff]
        %2110 = vmatprep.subr.mxu0 0.0
        %2111 = vmatpush1.msra.mxu0 %v2100
        %2112 = vmatprep.subr.mxu0 0.0
        %2113 = vmatpush1.msra.mxu0 %v2099
        %2114 = vmatprep.subr.mxu0 0.0
        %2115 = vmatpush1.msra.mxu0 %v2098
        %2116 = vmatprep.subr.mxu0 0.0
        %2117 = vmatpush1.msra.mxu0 %v2097
        %2118 = vmatprep.subr.mxu0 0.0
        %2119 = vmatpush1.msra.mxu0 %v2096
        %2120 = vmatprep.subr.mxu0 0.0
        %2121 = vmatpush1.msra.mxu0 %v2095
        %2122 = vmatprep.subr.mxu0 0.0
        %2123 = vmatpush1.msra.mxu0 %v2094
        %2124 = vmatprep.subr.mxu0 0.0
        %2125 = vmatpush1.msra.mxu0 %v2093
        %2126 = vmatprep.subr.mxu0 0.0
        %2127 = vmatpush1.msra.mxu0 %v2092
        %2128 = vmatprep.subr.mxu0 0.0
        %2129 = vmatpush1.msra.mxu0 %v2091
        %2130 = vmatprep.subr.mxu0 0.0
        %2131 = vmatpush1.msra.mxu0 %v2090
        %2132 = vmatprep.subr.mxu0 0.0
        %2133 = vmatpush1.msra.mxu0 %v2089
        %2134 = vmatprep.subr.mxu0 0.0
        %2135 = vmatpush1.msra.mxu0 %v2088
        %2136 = vmatprep.subr.mxu0 0.0
        %2137 = vmatpush1.msra.mxu0 %v2087
        %2138 = vmatprep.subr.mxu0 0.0
        %2139 = vmatpush1.msra.mxu0 %v2086
        %2140 = vmatprep.subr.mxu0 0.0
        %2141 = vmatpush1.msra.mxu0 %v2085
        %2142 = vmatprep.subr.mxu0 0.0
        %2143 = vmatpush2.msra.mxu0 0.0
        %2144 = vmatprep.subr.mxu0 0.0
        %2145 = vmatpush2.msra.mxu0 0.0
        %2146 = vmatprep.subr.mxu0 0.0
        %2147 = vmatpush2.msra.mxu0 0.0
        %2148 = vmatprep.subr.mxu0 0.0
        %2149 = vmatpush2.msra.mxu0 0.0
        %2150 = vmatprep.subr.mxu0 0.0
        %2151 = vmatpush2.msra.mxu0 0.0
        %2152 = vmatprep.subr.mxu0 0.0
        %2153 = vmatpush2.msra.mxu0 0.0
        %2154 = vmatprep.subr.mxu0 0.0
        %2155 = vmatpush2.msra.mxu0 0.0
        %2156 = vmatprep.subr.mxu0 0.0
        %2157 = vmatpush2.msra.mxu0 %v2109
        %2158 = vmatprep.subr.mxu0 0.0
        %2159 = vmatpush2.msra.mxu0 %v2108
        %2160 = vmatprep.subr.mxu0 0.0
        %2161 = vmatpush2.msra.mxu0 %v2107
        %2162 = vmatprep.subr.mxu0 0.0
        %2163 = vmatpush2.msra.mxu0 %v2106
        %2164 = vmatprep.subr.mxu0 0.0
        %2165 = vmatpush2.msra.mxu0 %v2105
        %2166 = vmatprep.subr.mxu0 0.0
        %2167 = vmatpush2.msra.mxu0 %v2104
        %2168 = vmatprep.subr.mxu0 0.0
        %2169 = vmatpush2.msra.mxu0 %v2103
        %2170 = vmatprep.subr.mxu0 0.0
        %2171 = vmatpush2.msra.mxu0 %v2102
        %2172 = vmatprep.subr.mxu0 0.0
        %2173 = vmatpush2.msra.mxu0 %v2101
        %2174 = vmatprep.mubr.f32.mxu0 %v2011
        %2175 = vmatmul.mubr.f32.gmra.mxu0 %v2006
        %v2176 = vpop.f32.mrf.mxu0
        %v2177 = vadd.f32 0.0, %v2176
        %v2178 = vpop.f32.mrf.mxu0
        %2179 = vdwg.mxu0
        %v2180 = vadd.f32 %v1975, %v2177
        %s2181 = scalar_lea.vmem %s4, 600
        %v2182 = vld [vmem:[%s2181] sm:$0xff]
        %v2183 = vld [vmem:[%s2181 + $0x8] sm:$0xff]
        %v2184 = vld [vmem:[%s2181 + $0x10] sm:$0xff]
        %v2185 = vld [vmem:[%s2181 + $0x18] sm:$0xff]
        %v2186 = vld [vmem:[%s2181 + $0x20] sm:$0xff]
        %v2187 = vld [vmem:[%s2181 + $0x28] sm:$0xff]
        %v2188 = vld [vmem:[%s2181 + $0x30] sm:$0xff]
        %v2189 = vld [vmem:[%s2181 + $0x38] sm:$0xff]
        %v2190 = vld [vmem:[%s2181 + $0x40] sm:$0xff]
        %v2191 = vld [vmem:[%s2181 + $0x48] sm:$0xff]
        %v2192 = vld [vmem:[%s2181 + $0x50] sm:$0xff]
        %v2193 = vld [vmem:[%s2181 + $0x58] sm:$0xff]
        %v2194 = vld [vmem:[%s2181 + $0x60] sm:$0xff]
        %v2195 = vld [vmem:[%s2181 + $0x68] sm:$0xff]
        %v2196 = vld [vmem:[%s2181 + $0x70] sm:$0xff]
        %v2197 = vld [vmem:[%s2181 + $0x78] sm:$0xff]
        %v2198 = vld [vmem:[%s2181 + $0x80] sm:$0xff]
        %v2199 = vld [vmem:[%s2181 + $0x88] sm:$0xff]
        %v2200 = vld [vmem:[%s2181 + $0x90] sm:$0xff]
        %v2201 = vld [vmem:[%s2181 + $0x98] sm:$0xff]
        %v2202 = vld [vmem:[%s2181 + $0xa0] sm:$0xff]
        %v2203 = vld [vmem:[%s2181 + $0xa8] sm:$0xff]
        %v2204 = vld [vmem:[%s2181 + $0xb0] sm:$0xff]
        %v2205 = vld [vmem:[%s2181 + $0xb8] sm:$0xff]
        %v2206 = vld [vmem:[%s2181 + $0xc0] sm:$0xff]
        %v2207 = vrot.slane %v1576, 3
        %v2208 = vrot.slane %v1578, 3
        %v2209 = vsel %vm1009, %v2207, %v2208
        %v2210 = vrot.slane %v1577, 3
        %v2211 = vrot.slane %v1579, 3
        %v2212 = vsel %vm1009, %v2210, %v2211
        %v2214 = vsel %vm1667, %v2212, 0
        %2216 = vmatprep.subr.mxu0 0.0
        %2217 = vmatpush1.msra.mxu0 %v2197
        %2218 = vmatprep.subr.mxu0 0.0
        %2219 = vmatpush1.msra.mxu0 %v2196
        %2220 = vmatprep.subr.mxu0 0.0
        %2221 = vmatpush1.msra.mxu0 %v2195
        %2222 = vmatprep.subr.mxu0 0.0
        %2223 = vmatpush1.msra.mxu0 %v2194
        %2224 = vmatprep.subr.mxu0 0.0
        %2225 = vmatpush1.msra.mxu0 %v2193
        %2226 = vmatprep.subr.mxu0 0.0
        %2227 = vmatpush1.msra.mxu0 %v2192
        %2228 = vmatprep.subr.mxu0 0.0
        %2229 = vmatpush1.msra.mxu0 %v2191
        %2230 = vmatprep.subr.mxu0 0.0
        %2231 = vmatpush1.msra.mxu0 %v2190
        %2232 = vmatprep.subr.mxu0 0.0
        %2233 = vmatpush1.msra.mxu0 %v2189
        %2234 = vmatprep.subr.mxu0 0.0
        %2235 = vmatpush1.msra.mxu0 %v2188
        %2236 = vmatprep.subr.mxu0 0.0
        %2237 = vmatpush1.msra.mxu0 %v2187
        %2238 = vmatprep.subr.mxu0 0.0
        %2239 = vmatpush1.msra.mxu0 %v2186
        %2240 = vmatprep.subr.mxu0 0.0
        %2241 = vmatpush1.msra.mxu0 %v2185
        %2242 = vmatprep.subr.mxu0 0.0
        %2243 = vmatpush1.msra.mxu0 %v2184
        %2244 = vmatprep.subr.mxu0 0.0
        %2245 = vmatpush1.msra.mxu0 %v2183
        %2246 = vmatprep.subr.mxu0 0.0
        %2247 = vmatpush1.msra.mxu0 %v2182
        %2248 = vmatprep.subr.mxu0 0.0
        %2249 = vmatpush2.msra.mxu0 0.0
        %2250 = vmatprep.subr.mxu0 0.0
        %2251 = vmatpush2.msra.mxu0 0.0
        %2252 = vmatprep.subr.mxu0 0.0
        %2253 = vmatpush2.msra.mxu0 0.0
        %2254 = vmatprep.subr.mxu0 0.0
        %2255 = vmatpush2.msra.mxu0 0.0
        %2256 = vmatprep.subr.mxu0 0.0
        %2257 = vmatpush2.msra.mxu0 0.0
        %2258 = vmatprep.subr.mxu0 0.0
        %2259 = vmatpush2.msra.mxu0 0.0
        %2260 = vmatprep.subr.mxu0 0.0
        %2261 = vmatpush2.msra.mxu0 0.0
        %2262 = vmatprep.subr.mxu0 0.0
        %2263 = vmatpush2.msra.mxu0 %v2206
        %2264 = vmatprep.subr.mxu0 0.0
        %2265 = vmatpush2.msra.mxu0 %v2205
        %2266 = vmatprep.subr.mxu0 0.0
        %2267 = vmatpush2.msra.mxu0 %v2204
        %2268 = vmatprep.subr.mxu0 0.0
        %2269 = vmatpush2.msra.mxu0 %v2203
        %2270 = vmatprep.subr.mxu0 0.0
        %2271 = vmatpush2.msra.mxu0 %v2202
        %2272 = vmatprep.subr.mxu0 0.0
        %2273 = vmatpush2.msra.mxu0 %v2201
        %2274 = vmatprep.subr.mxu0 0.0
        %2275 = vmatpush2.msra.mxu0 %v2200
        %2276 = vmatprep.subr.mxu0 0.0
        %2277 = vmatpush2.msra.mxu0 %v2199
        %2278 = vmatprep.subr.mxu0 0.0
        %2279 = vmatpush2.msra.mxu0 %v2198
        %2280 = vmatprep.mubr.f32.mxu0 %v2214
        %2281 = vmatmul.mubr.f32.gmra.mxu0 %v2209
        %v2282 = vpop.f32.mrf.mxu0
        %v2283 = vadd.f32 0.0, %v2282
        %v2284 = vpop.f32.mrf.mxu0
        %2285 = vdwg.mxu0
        %v2286 = vadd.f32 %v2083, %v2283
        %s2287 = scalar_lea.vmem %s5, 600
        %v2288 = vld [vmem:[%s2287] sm:$0xff]
        %v2289 = vld [vmem:[%s2287 + $0x8] sm:$0xff]
        %v2290 = vld [vmem:[%s2287 + $0x10] sm:$0xff]
        %v2291 = vld [vmem:[%s2287 + $0x18] sm:$0xff]
        %v2292 = vld [vmem:[%s2287 + $0x20] sm:$0xff]
        %v2293 = vld [vmem:[%s2287 + $0x28] sm:$0xff]
        %v2294 = vld [vmem:[%s2287 + $0x30] sm:$0xff]
        %v2295 = vld [vmem:[%s2287 + $0x38] sm:$0xff]
        %v2296 = vld [vmem:[%s2287 + $0x40] sm:$0xff]
        %v2297 = vld [vmem:[%s2287 + $0x48] sm:$0xff]
        %v2298 = vld [vmem:[%s2287 + $0x50] sm:$0xff]
        %v2299 = vld [vmem:[%s2287 + $0x58] sm:$0xff]
        %v2300 = vld [vmem:[%s2287 + $0x60] sm:$0xff]
        %v2301 = vld [vmem:[%s2287 + $0x68] sm:$0xff]
        %v2302 = vld [vmem:[%s2287 + $0x70] sm:$0xff]
        %v2303 = vld [vmem:[%s2287 + $0x78] sm:$0xff]
        %v2304 = vld [vmem:[%s2287 + $0x80] sm:$0xff]
        %v2305 = vld [vmem:[%s2287 + $0x88] sm:$0xff]
        %v2306 = vld [vmem:[%s2287 + $0x90] sm:$0xff]
        %v2307 = vld [vmem:[%s2287 + $0x98] sm:$0xff]
        %v2308 = vld [vmem:[%s2287 + $0xa0] sm:$0xff]
        %v2309 = vld [vmem:[%s2287 + $0xa8] sm:$0xff]
        %v2310 = vld [vmem:[%s2287 + $0xb0] sm:$0xff]
        %v2311 = vld [vmem:[%s2287 + $0xb8] sm:$0xff]
        %v2312 = vld [vmem:[%s2287 + $0xc0] sm:$0xff]
        %2313 = vmatprep.subr.mxu0 0.0
        %2314 = vmatpush1.msra.mxu0 %v2303
        %2315 = vmatprep.subr.mxu0 0.0
        %2316 = vmatpush1.msra.mxu0 %v2302
        %2317 = vmatprep.subr.mxu0 0.0
        %2318 = vmatpush1.msra.mxu0 %v2301
        %2319 = vmatprep.subr.mxu0 0.0
        %2320 = vmatpush1.msra.mxu0 %v2300
        %2321 = vmatprep.subr.mxu0 0.0
        %2322 = vmatpush1.msra.mxu0 %v2299
        %2323 = vmatprep.subr.mxu0 0.0
        %2324 = vmatpush1.msra.mxu0 %v2298
        %2325 = vmatprep.subr.mxu0 0.0
        %2326 = vmatpush1.msra.mxu0 %v2297
        %2327 = vmatprep.subr.mxu0 0.0
        %2328 = vmatpush1.msra.mxu0 %v2296
        %2329 = vmatprep.subr.mxu0 0.0
        %2330 = vmatpush1.msra.mxu0 %v2295
        %2331 = vmatprep.subr.mxu0 0.0
        %2332 = vmatpush1.msra.mxu0 %v2294
        %2333 = vmatprep.subr.mxu0 0.0
        %2334 = vmatpush1.msra.mxu0 %v2293
        %2335 = vmatprep.subr.mxu0 0.0
        %2336 = vmatpush1.msra.mxu0 %v2292
        %2337 = vmatprep.subr.mxu0 0.0
        %2338 = vmatpush1.msra.mxu0 %v2291
        %2339 = vmatprep.subr.mxu0 0.0
        %2340 = vmatpush1.msra.mxu0 %v2290
        %2341 = vmatprep.subr.mxu0 0.0
        %2342 = vmatpush1.msra.mxu0 %v2289
        %2343 = vmatprep.subr.mxu0 0.0
        %2344 = vmatpush1.msra.mxu0 %v2288
        %2345 = vmatprep.subr.mxu0 0.0
        %2346 = vmatpush2.msra.mxu0 0.0
        %2347 = vmatprep.subr.mxu0 0.0
        %2348 = vmatpush2.msra.mxu0 0.0
        %2349 = vmatprep.subr.mxu0 0.0
        %2350 = vmatpush2.msra.mxu0 0.0
        %2351 = vmatprep.subr.mxu0 0.0
        %2352 = vmatpush2.msra.mxu0 0.0
        %2353 = vmatprep.subr.mxu0 0.0
        %2354 = vmatpush2.msra.mxu0 0.0
        %2355 = vmatprep.subr.mxu0 0.0
        %2356 = vmatpush2.msra.mxu0 0.0
        %2357 = vmatprep.subr.mxu0 0.0
        %2358 = vmatpush2.msra.mxu0 0.0
        %2359 = vmatprep.subr.mxu0 0.0
        %2360 = vmatpush2.msra.mxu0 %v2312
        %2361 = vmatprep.subr.mxu0 0.0
        %2362 = vmatpush2.msra.mxu0 %v2311
        %2363 = vmatprep.subr.mxu0 0.0
        %2364 = vmatpush2.msra.mxu0 %v2310
        %2365 = vmatprep.subr.mxu0 0.0
        %2366 = vmatpush2.msra.mxu0 %v2309
        %2367 = vmatprep.subr.mxu0 0.0
        %2368 = vmatpush2.msra.mxu0 %v2308
        %2369 = vmatprep.subr.mxu0 0.0
        %2370 = vmatpush2.msra.mxu0 %v2307
        %2371 = vmatprep.subr.mxu0 0.0
        %2372 = vmatpush2.msra.mxu0 %v2306
        %2373 = vmatprep.subr.mxu0 0.0
        %2374 = vmatpush2.msra.mxu0 %v2305
        %2375 = vmatprep.subr.mxu0 0.0
        %2376 = vmatpush2.msra.mxu0 %v2304
        %2377 = vmatprep.mubr.f32.mxu0 %v2214
        %2378 = vmatmul.mubr.f32.gmra.mxu0 %v2209
        %v2379 = vpop.f32.mrf.mxu0
        %v2380 = vadd.f32 0.0, %v2379
        %v2381 = vpop.f32.mrf.mxu0
        %2382 = vdwg.mxu0
        %v2383 = vadd.f32 %v2180, %v2380
        %s2384 = scalar_lea.vmem %s4, 800
        %v2385 = vld [vmem:[%s2384] sm:$0xff]
        %v2386 = vld [vmem:[%s2384 + $0x8] sm:$0xff]
        %v2387 = vld [vmem:[%s2384 + $0x10] sm:$0xff]
        %v2388 = vld [vmem:[%s2384 + $0x18] sm:$0xff]
        %v2389 = vld [vmem:[%s2384 + $0x20] sm:$0xff]
        %v2390 = vld [vmem:[%s2384 + $0x28] sm:$0xff]
        %v2391 = vld [vmem:[%s2384 + $0x30] sm:$0xff]
        %v2392 = vld [vmem:[%s2384 + $0x38] sm:$0xff]
        %v2393 = vld [vmem:[%s2384 + $0x40] sm:$0xff]
        %v2394 = vld [vmem:[%s2384 + $0x48] sm:$0xff]
        %v2395 = vld [vmem:[%s2384 + $0x50] sm:$0xff]
        %v2396 = vld [vmem:[%s2384 + $0x58] sm:$0xff]
        %v2397 = vld [vmem:[%s2384 + $0x60] sm:$0xff]
        %v2398 = vld [vmem:[%s2384 + $0x68] sm:$0xff]
        %v2399 = vld [vmem:[%s2384 + $0x70] sm:$0xff]
        %v2400 = vld [vmem:[%s2384 + $0x78] sm:$0xff]
        %v2401 = vld [vmem:[%s2384 + $0x80] sm:$0xff]
        %v2402 = vld [vmem:[%s2384 + $0x88] sm:$0xff]
        %v2403 = vld [vmem:[%s2384 + $0x90] sm:$0xff]
        %v2404 = vld [vmem:[%s2384 + $0x98] sm:$0xff]
        %v2405 = vld [vmem:[%s2384 + $0xa0] sm:$0xff]
        %v2406 = vld [vmem:[%s2384 + $0xa8] sm:$0xff]
        %v2407 = vld [vmem:[%s2384 + $0xb0] sm:$0xff]
        %v2408 = vld [vmem:[%s2384 + $0xb8] sm:$0xff]
        %v2409 = vld [vmem:[%s2384 + $0xc0] sm:$0xff]
        %v2410 = vrot.slane %v1576, 4
        %v2411 = vrot.slane %v1578, 4
        %v2412 = vsel %vm390, %v2410, %v2411
        %v2413 = vrot.slane %v1577, 4
        %v2414 = vrot.slane %v1579, 4
        %v2415 = vsel %vm390, %v2413, %v2414
        %v2417 = vsel %vm1667, %v2415, 0
        %2419 = vmatprep.subr.mxu0 0.0
        %2420 = vmatpush1.msra.mxu0 %v2400
        %2421 = vmatprep.subr.mxu0 0.0
        %2422 = vmatpush1.msra.mxu0 %v2399
        %2423 = vmatprep.subr.mxu0 0.0
        %2424 = vmatpush1.msra.mxu0 %v2398
        %2425 = vmatprep.subr.mxu0 0.0
        %2426 = vmatpush1.msra.mxu0 %v2397
        %2427 = vmatprep.subr.mxu0 0.0
        %2428 = vmatpush1.msra.mxu0 %v2396
        %2429 = vmatprep.subr.mxu0 0.0
        %2430 = vmatpush1.msra.mxu0 %v2395
        %2431 = vmatprep.subr.mxu0 0.0
        %2432 = vmatpush1.msra.mxu0 %v2394
        %2433 = vmatprep.subr.mxu0 0.0
        %2434 = vmatpush1.msra.mxu0 %v2393
        %2435 = vmatprep.subr.mxu0 0.0
        %2436 = vmatpush1.msra.mxu0 %v2392
        %2437 = vmatprep.subr.mxu0 0.0
        %2438 = vmatpush1.msra.mxu0 %v2391
        %2439 = vmatprep.subr.mxu0 0.0
        %2440 = vmatpush1.msra.mxu0 %v2390
        %2441 = vmatprep.subr.mxu0 0.0
        %2442 = vmatpush1.msra.mxu0 %v2389
        %2443 = vmatprep.subr.mxu0 0.0
        %2444 = vmatpush1.msra.mxu0 %v2388
        %2445 = vmatprep.subr.mxu0 0.0
        %2446 = vmatpush1.msra.mxu0 %v2387
        %2447 = vmatprep.subr.mxu0 0.0
        %2448 = vmatpush1.msra.mxu0 %v2386
        %2449 = vmatprep.subr.mxu0 0.0
        %2450 = vmatpush1.msra.mxu0 %v2385
        %2451 = vmatprep.subr.mxu0 0.0
        %2452 = vmatpush2.msra.mxu0 0.0
        %2453 = vmatprep.subr.mxu0 0.0
        %2454 = vmatpush2.msra.mxu0 0.0
        %2455 = vmatprep.subr.mxu0 0.0
        %2456 = vmatpush2.msra.mxu0 0.0
        %2457 = vmatprep.subr.mxu0 0.0
        %2458 = vmatpush2.msra.mxu0 0.0
        %2459 = vmatprep.subr.mxu0 0.0
        %2460 = vmatpush2.msra.mxu0 0.0
        %2461 = vmatprep.subr.mxu0 0.0
        %2462 = vmatpush2.msra.mxu0 0.0
        %2463 = vmatprep.subr.mxu0 0.0
        %2464 = vmatpush2.msra.mxu0 0.0
        %2465 = vmatprep.subr.mxu0 0.0
        %2466 = vmatpush2.msra.mxu0 %v2409
        %2467 = vmatprep.subr.mxu0 0.0
        %2468 = vmatpush2.msra.mxu0 %v2408
        %2469 = vmatprep.subr.mxu0 0.0
        %2470 = vmatpush2.msra.mxu0 %v2407
        %2471 = vmatprep.subr.mxu0 0.0
        %2472 = vmatpush2.msra.mxu0 %v2406
        %2473 = vmatprep.subr.mxu0 0.0
        %2474 = vmatpush2.msra.mxu0 %v2405
        %2475 = vmatprep.subr.mxu0 0.0
        %2476 = vmatpush2.msra.mxu0 %v2404
        %2477 = vmatprep.subr.mxu0 0.0
        %2478 = vmatpush2.msra.mxu0 %v2403
        %2479 = vmatprep.subr.mxu0 0.0
        %2480 = vmatpush2.msra.mxu0 %v2402
        %2481 = vmatprep.subr.mxu0 0.0
        %2482 = vmatpush2.msra.mxu0 %v2401
        %2483 = vmatprep.mubr.f32.mxu0 %v2417
        %2484 = vmatmul.mubr.f32.gmra.mxu0 %v2412
        %v2485 = vpop.f32.mrf.mxu0
        %v2486 = vadd.f32 0.0, %v2485
        %v2487 = vpop.f32.mrf.mxu0
        %2488 = vdwg.mxu0
        %v2489 = vadd.f32 %v2286, %v2486
        %s2490 = scalar_lea.vmem %s5, 800
        %v2491 = vld [vmem:[%s2490] sm:$0xff]
        %v2492 = vld [vmem:[%s2490 + $0x8] sm:$0xff]
        %v2493 = vld [vmem:[%s2490 + $0x10] sm:$0xff]
        %v2494 = vld [vmem:[%s2490 + $0x18] sm:$0xff]
        %v2495 = vld [vmem:[%s2490 + $0x20] sm:$0xff]
        %v2496 = vld [vmem:[%s2490 + $0x28] sm:$0xff]
        %v2497 = vld [vmem:[%s2490 + $0x30] sm:$0xff]
        %v2498 = vld [vmem:[%s2490 + $0x38] sm:$0xff]
        %v2499 = vld [vmem:[%s2490 + $0x40] sm:$0xff]
        %v2500 = vld [vmem:[%s2490 + $0x48] sm:$0xff]
        %v2501 = vld [vmem:[%s2490 + $0x50] sm:$0xff]
        %v2502 = vld [vmem:[%s2490 + $0x58] sm:$0xff]
        %v2503 = vld [vmem:[%s2490 + $0x60] sm:$0xff]
        %v2504 = vld [vmem:[%s2490 + $0x68] sm:$0xff]
        %v2505 = vld [vmem:[%s2490 + $0x70] sm:$0xff]
        %v2506 = vld [vmem:[%s2490 + $0x78] sm:$0xff]
        %v2507 = vld [vmem:[%s2490 + $0x80] sm:$0xff]
        %v2508 = vld [vmem:[%s2490 + $0x88] sm:$0xff]
        %v2509 = vld [vmem:[%s2490 + $0x90] sm:$0xff]
        %v2510 = vld [vmem:[%s2490 + $0x98] sm:$0xff]
        %v2511 = vld [vmem:[%s2490 + $0xa0] sm:$0xff]
        %v2512 = vld [vmem:[%s2490 + $0xa8] sm:$0xff]
        %v2513 = vld [vmem:[%s2490 + $0xb0] sm:$0xff]
        %v2514 = vld [vmem:[%s2490 + $0xb8] sm:$0xff]
        %v2515 = vld [vmem:[%s2490 + $0xc0] sm:$0xff]
        %2516 = vmatprep.subr.mxu0 0.0
        %2517 = vmatpush1.msra.mxu0 %v2506
        %2518 = vmatprep.subr.mxu0 0.0
        %2519 = vmatpush1.msra.mxu0 %v2505
        %2520 = vmatprep.subr.mxu0 0.0
        %2521 = vmatpush1.msra.mxu0 %v2504
        %2522 = vmatprep.subr.mxu0 0.0
        %2523 = vmatpush1.msra.mxu0 %v2503
        %2524 = vmatprep.subr.mxu0 0.0
        %2525 = vmatpush1.msra.mxu0 %v2502
        %2526 = vmatprep.subr.mxu0 0.0
        %2527 = vmatpush1.msra.mxu0 %v2501
        %2528 = vmatprep.subr.mxu0 0.0
        %2529 = vmatpush1.msra.mxu0 %v2500
        %2530 = vmatprep.subr.mxu0 0.0
        %2531 = vmatpush1.msra.mxu0 %v2499
        %2532 = vmatprep.subr.mxu0 0.0
        %2533 = vmatpush1.msra.mxu0 %v2498
        %2534 = vmatprep.subr.mxu0 0.0
        %2535 = vmatpush1.msra.mxu0 %v2497
        %2536 = vmatprep.subr.mxu0 0.0
        %2537 = vmatpush1.msra.mxu0 %v2496
        %2538 = vmatprep.subr.mxu0 0.0
        %2539 = vmatpush1.msra.mxu0 %v2495
        %2540 = vmatprep.subr.mxu0 0.0
        %2541 = vmatpush1.msra.mxu0 %v2494
        %2542 = vmatprep.subr.mxu0 0.0
        %2543 = vmatpush1.msra.mxu0 %v2493
        %2544 = vmatprep.subr.mxu0 0.0
        %2545 = vmatpush1.msra.mxu0 %v2492
        %2546 = vmatprep.subr.mxu0 0.0
        %2547 = vmatpush1.msra.mxu0 %v2491
        %2548 = vmatprep.subr.mxu0 0.0
        %2549 = vmatpush2.msra.mxu0 0.0
        %2550 = vmatprep.subr.mxu0 0.0
        %2551 = vmatpush2.msra.mxu0 0.0
        %2552 = vmatprep.subr.mxu0 0.0
        %2553 = vmatpush2.msra.mxu0 0.0
        %2554 = vmatprep.subr.mxu0 0.0
        %2555 = vmatpush2.msra.mxu0 0.0
        %2556 = vmatprep.subr.mxu0 0.0
        %2557 = vmatpush2.msra.mxu0 0.0
        %2558 = vmatprep.subr.mxu0 0.0
        %2559 = vmatpush2.msra.mxu0 0.0
        %2560 = vmatprep.subr.mxu0 0.0
        %2561 = vmatpush2.msra.mxu0 0.0
        %2562 = vmatprep.subr.mxu0 0.0
        %2563 = vmatpush2.msra.mxu0 %v2515
        %2564 = vmatprep.subr.mxu0 0.0
        %2565 = vmatpush2.msra.mxu0 %v2514
        %2566 = vmatprep.subr.mxu0 0.0
        %2567 = vmatpush2.msra.mxu0 %v2513
        %2568 = vmatprep.subr.mxu0 0.0
        %2569 = vmatpush2.msra.mxu0 %v2512
        %2570 = vmatprep.subr.mxu0 0.0
        %2571 = vmatpush2.msra.mxu0 %v2511
        %2572 = vmatprep.subr.mxu0 0.0
        %2573 = vmatpush2.msra.mxu0 %v2510
        %2574 = vmatprep.subr.mxu0 0.0
        %2575 = vmatpush2.msra.mxu0 %v2509
        %2576 = vmatprep.subr.mxu0 0.0
        %2577 = vmatpush2.msra.mxu0 %v2508
        %2578 = vmatprep.subr.mxu0 0.0
        %2579 = vmatpush2.msra.mxu0 %v2507
        %2580 = vmatprep.mubr.f32.mxu0 %v2417
        %2581 = vmatmul.mubr.f32.gmra.mxu0 %v2412
        %v2582 = vpop.f32.mrf.mxu0
        %v2583 = vadd.f32 0.0, %v2582
        %v2584 = vpop.f32.mrf.mxu0
        %2585 = vdwg.mxu0
        %v2586 = vadd.f32 %v2383, %v2583
        %v2587 = vmax.f32 %v2489, %v2586
        %v2588 = vld [vmem:[%s6] sm:$0x1]
        %v2590 = vlaneseq
        %v2591 = vshrl.u32 %v2590, 7
        %v2592 = vsub.s32 0, %v2591
        %v2593 = vrot.slane %v2588, %v2592
        %v2595 = vadd.f32 %v2587, %v2593
        %v2597 = vrot.slane %v2595, 1
        %v2599 = vmax.f32 %v2595, %v2597
        %v2601 = vrot.slane %v2599, 1
        %v2603 = vrot.slane %v2599, 2
        %v2605 = vrot.slane %v2599, 3
        %v2607 = vsel %vm1553, %v2599, %v2601
        %v2608 = vsel %vm1556, %v2607, %v2603
        %v2609 = vsel %vm1559, %v2608, %v2605
        %v2610 = vmax.f32 %v2609, 0.0
        %v2611 = vld [vmem:[%s8] sm:$0x1]
        %v2612 = vld [vmem:[%s7] sm:$0xff]
        %v2613 = vld [vmem:[%s7 + $0x8] sm:$0xff]
        %v2614 = vld [vmem:[%s7 + $0x10] sm:$0xff]
        %v2615 = vld [vmem:[%s7 + $0x18] sm:$0xff]
        %v2616 = vld [vmem:[%s7 + $0x20] sm:$0xff]
        %v2617 = vld [vmem:[%s7 + $0x28] sm:$0xff]
        %v2618 = vld [vmem:[%s7 + $0x30] sm:$0xff]
        %v2619 = vld [vmem:[%s7 + $0x38] sm:$0xff]
        %v2620 = vld [vmem:[%s7 + $0x40] sm:$0xff]
        %v2621 = vld [vmem:[%s7 + $0x48] sm:$0xff]
        %vm2622 = vcmask 654336
        %v2624 = vsel %vm2622, %v2610, 0
        %2626 = vmatprep.subr.mxu0 0.0
        %2627 = vmatpush1.msra.mxu0 0.0
        %2628 = vmatprep.subr.mxu0 0.0
        %2629 = vmatpush1.msra.mxu0 0.0
        %2630 = vmatprep.subr.mxu0 0.0
        %2631 = vmatpush1.msra.mxu0 0.0
        %2632 = vmatprep.subr.mxu0 0.0
        %2633 = vmatpush1.msra.mxu0 0.0
        %2634 = vmatprep.subr.mxu0 0.0
        %2635 = vmatpush1.msra.mxu0 0.0
        %2636 = vmatprep.subr.mxu0 0.0
        %2637 = vmatpush1.msra.mxu0 0.0
        %2638 = vmatprep.subr.mxu0 0.0
        %2639 = vmatpush1.msra.mxu0 %v2621
        %2640 = vmatprep.subr.mxu0 0.0
        %2641 = vmatpush1.msra.mxu0 %v2620
        %2642 = vmatprep.subr.mxu0 0.0
        %2643 = vmatpush1.msra.mxu0 %v2619
        %2644 = vmatprep.subr.mxu0 0.0
        %2645 = vmatpush1.msra.mxu0 %v2618
        %2646 = vmatprep.subr.mxu0 0.0
        %2647 = vmatpush1.msra.mxu0 %v2617
        %2648 = vmatprep.subr.mxu0 0.0
        %2649 = vmatpush1.msra.mxu0 %v2616
        %2650 = vmatprep.subr.mxu0 0.0
        %2651 = vmatpush1.msra.mxu0 %v2615
        %2652 = vmatprep.subr.mxu0 0.0
        %2653 = vmatpush1.msra.mxu0 %v2614
        %2654 = vmatprep.subr.mxu0 0.0
        %2655 = vmatpush1.msra.mxu0 %v2613
        %2656 = vmatprep.subr.mxu0 0.0
        %2657 = vmatpush1.msra.mxu0 %v2612
        %2658 = vmatprep.subr.mxu0 0.0
        %2659 = vmatpush2.msra.mxu0 0.0
        %2660 = vmatprep.subr.mxu0 0.0
        %2661 = vmatpush2.msra.mxu0 0.0
        %2662 = vmatprep.subr.mxu0 0.0
        %2663 = vmatpush2.msra.mxu0 0.0
        %2664 = vmatprep.subr.mxu0 0.0
        %2665 = vmatpush2.msra.mxu0 0.0
        %2666 = vmatprep.subr.mxu0 0.0
        %2667 = vmatpush2.msra.mxu0 0.0
        %2668 = vmatprep.subr.mxu0 0.0
        %2669 = vmatpush2.msra.mxu0 0.0
        %2670 = vmatprep.subr.mxu0 0.0
        %2671 = vmatpush2.msra.mxu0 0.0
        %2672 = vmatprep.subr.mxu0 0.0
        %2673 = vmatpush2.msra.mxu0 0.0
        %2674 = vmatprep.subr.mxu0 0.0
        %2675 = vmatpush2.msra.mxu0 0.0
        %2676 = vmatprep.subr.mxu0 0.0
        %2677 = vmatpush2.msra.mxu0 0.0
        %2678 = vmatprep.subr.mxu0 0.0
        %2679 = vmatpush2.msra.mxu0 0.0
        %2680 = vmatprep.subr.mxu0 0.0
        %2681 = vmatpush2.msra.mxu0 0.0
        %2682 = vmatprep.subr.mxu0 0.0
        %2683 = vmatpush2.msra.mxu0 0.0
        %2684 = vmatprep.subr.mxu0 0.0
        %2685 = vmatpush2.msra.mxu0 0.0
        %2686 = vmatprep.subr.mxu0 0.0
        %2687 = vmatpush2.msra.mxu0 0.0
        %2688 = vmatprep.subr.mxu0 0.0
        %2689 = vmatpush2.msra.mxu0 0.0
        %2690 = vmatprep.mubr.f32.mxu0 0.0
        %2691 = vmatmul.mubr.f32.gmra.mxu0 %v2624
        %v2692 = vpop.f32.mrf.mxu0
        %v2693 = vadd.f32 0.0, %v2692
        %v2694 = vpop.f32.mrf.mxu0
        %2695 = vdwg.mxu0
        %v2696 = vadd.f32 %v2611, %v2693
        %s2697 = scalar_lea.vmem %s7, 80
        %v2698 = vld [vmem:[%s2697] sm:$0xff]
        %v2699 = vld [vmem:[%s2697 + $0x8] sm:$0xff]
        %v2700 = vld [vmem:[%s2697 + $0x10] sm:$0xff]
        %v2701 = vld [vmem:[%s2697 + $0x18] sm:$0xff]
        %v2702 = vld [vmem:[%s2697 + $0x20] sm:$0xff]
        %v2703 = vld [vmem:[%s2697 + $0x28] sm:$0xff]
        %v2704 = vld [vmem:[%s2697 + $0x30] sm:$0xff]
        %v2705 = vld [vmem:[%s2697 + $0x38] sm:$0xff]
        %v2706 = vld [vmem:[%s2697 + $0x40] sm:$0xff]
        %v2707 = vld [vmem:[%s2697 + $0x48] sm:$0xff]
        %v2708 = vrot.slane %v2610, 1
        %v2709 = vsel %vm2622, %v2708, 0
        %2711 = vmatprep.subr.mxu0 0.0
        %2712 = vmatpush1.msra.mxu0 0.0
        %2713 = vmatprep.subr.mxu0 0.0
        %2714 = vmatpush1.msra.mxu0 0.0
        %2715 = vmatprep.subr.mxu0 0.0
        %2716 = vmatpush1.msra.mxu0 0.0
        %2717 = vmatprep.subr.mxu0 0.0
        %2718 = vmatpush1.msra.mxu0 0.0
        %2719 = vmatprep.subr.mxu0 0.0
        %2720 = vmatpush1.msra.mxu0 0.0
        %2721 = vmatprep.subr.mxu0 0.0
        %2722 = vmatpush1.msra.mxu0 0.0
        %2723 = vmatprep.subr.mxu0 0.0
        %2724 = vmatpush1.msra.mxu0 %v2707
        %2725 = vmatprep.subr.mxu0 0.0
        %2726 = vmatpush1.msra.mxu0 %v2706
        %2727 = vmatprep.subr.mxu0 0.0
        %2728 = vmatpush1.msra.mxu0 %v2705
        %2729 = vmatprep.subr.mxu0 0.0
        %2730 = vmatpush1.msra.mxu0 %v2704
        %2731 = vmatprep.subr.mxu0 0.0
        %2732 = vmatpush1.msra.mxu0 %v2703
        %2733 = vmatprep.subr.mxu0 0.0
        %2734 = vmatpush1.msra.mxu0 %v2702
        %2735 = vmatprep.subr.mxu0 0.0
        %2736 = vmatpush1.msra.mxu0 %v2701
        %2737 = vmatprep.subr.mxu0 0.0
        %2738 = vmatpush1.msra.mxu0 %v2700
        %2739 = vmatprep.subr.mxu0 0.0
        %2740 = vmatpush1.msra.mxu0 %v2699
        %2741 = vmatprep.subr.mxu0 0.0
        %2742 = vmatpush1.msra.mxu0 %v2698
        %2743 = vmatprep.subr.mxu0 0.0
        %2744 = vmatpush2.msra.mxu0 0.0
        %2745 = vmatprep.subr.mxu0 0.0
        %2746 = vmatpush2.msra.mxu0 0.0
        %2747 = vmatprep.subr.mxu0 0.0
        %2748 = vmatpush2.msra.mxu0 0.0
        %2749 = vmatprep.subr.mxu0 0.0
        %2750 = vmatpush2.msra.mxu0 0.0
        %2751 = vmatprep.subr.mxu0 0.0
        %2752 = vmatpush2.msra.mxu0 0.0
        %2753 = vmatprep.subr.mxu0 0.0
        %2754 = vmatpush2.msra.mxu0 0.0
        %2755 = vmatprep.subr.mxu0 0.0
        %2756 = vmatpush2.msra.mxu0 0.0
        %2757 = vmatprep.subr.mxu0 0.0
        %2758 = vmatpush2.msra.mxu0 0.0
        %2759 = vmatprep.subr.mxu0 0.0
        %2760 = vmatpush2.msra.mxu0 0.0
        %2761 = vmatprep.subr.mxu0 0.0
        %2762 = vmatpush2.msra.mxu0 0.0
        %2763 = vmatprep.subr.mxu0 0.0
        %2764 = vmatpush2.msra.mxu0 0.0
        %2765 = vmatprep.subr.mxu0 0.0
        %2766 = vmatpush2.msra.mxu0 0.0
        %2767 = vmatprep.subr.mxu0 0.0
        %2768 = vmatpush2.msra.mxu0 0.0
        %2769 = vmatprep.subr.mxu0 0.0
        %2770 = vmatpush2.msra.mxu0 0.0
        %2771 = vmatprep.subr.mxu0 0.0
        %2772 = vmatpush2.msra.mxu0 0.0
        %2773 = vmatprep.subr.mxu0 0.0
        %2774 = vmatpush2.msra.mxu0 0.0
        %2775 = vmatprep.mubr.f32.mxu0 0.0
        %2776 = vmatmul.mubr.f32.gmra.mxu0 %v2709
        %v2777 = vpop.f32.mrf.mxu0
        %v2778 = vadd.f32 0.0, %v2777
        %v2779 = vpop.f32.mrf.mxu0
        %2780 = vdwg.mxu0
        %v2781 = vadd.f32 %v2696, %v2778
        %s2782 = scalar_lea.vmem %s7, 160
        %v2783 = vld [vmem:[%s2782] sm:$0xff]
        %v2784 = vld [vmem:[%s2782 + $0x8] sm:$0xff]
        %v2785 = vld [vmem:[%s2782 + $0x10] sm:$0xff]
        %v2786 = vld [vmem:[%s2782 + $0x18] sm:$0xff]
        %v2787 = vld [vmem:[%s2782 + $0x20] sm:$0xff]
        %v2788 = vld [vmem:[%s2782 + $0x28] sm:$0xff]
        %v2789 = vld [vmem:[%s2782 + $0x30] sm:$0xff]
        %v2790 = vld [vmem:[%s2782 + $0x38] sm:$0xff]
        %v2791 = vld [vmem:[%s2782 + $0x40] sm:$0xff]
        %v2792 = vld [vmem:[%s2782 + $0x48] sm:$0xff]
        %v2793 = vrot.slane %v2610, 2
        %v2794 = vsel %vm2622, %v2793, 0
        %2796 = vmatprep.subr.mxu0 0.0
        %2797 = vmatpush1.msra.mxu0 0.0
        %2798 = vmatprep.subr.mxu0 0.0
        %2799 = vmatpush1.msra.mxu0 0.0
        %2800 = vmatprep.subr.mxu0 0.0
        %2801 = vmatpush1.msra.mxu0 0.0
        %2802 = vmatprep.subr.mxu0 0.0
        %2803 = vmatpush1.msra.mxu0 0.0
        %2804 = vmatprep.subr.mxu0 0.0
        %2805 = vmatpush1.msra.mxu0 0.0
        %2806 = vmatprep.subr.mxu0 0.0
        %2807 = vmatpush1.msra.mxu0 0.0
        %2808 = vmatprep.subr.mxu0 0.0
        %2809 = vmatpush1.msra.mxu0 %v2792
        %2810 = vmatprep.subr.mxu0 0.0
        %2811 = vmatpush1.msra.mxu0 %v2791
        %2812 = vmatprep.subr.mxu0 0.0
        %2813 = vmatpush1.msra.mxu0 %v2790
        %2814 = vmatprep.subr.mxu0 0.0
        %2815 = vmatpush1.msra.mxu0 %v2789
        %2816 = vmatprep.subr.mxu0 0.0
        %2817 = vmatpush1.msra.mxu0 %v2788
        %2818 = vmatprep.subr.mxu0 0.0
        %2819 = vmatpush1.msra.mxu0 %v2787
        %2820 = vmatprep.subr.mxu0 0.0
        %2821 = vmatpush1.msra.mxu0 %v2786
        %2822 = vmatprep.subr.mxu0 0.0
        %2823 = vmatpush1.msra.mxu0 %v2785
        %2824 = vmatprep.subr.mxu0 0.0
        %2825 = vmatpush1.msra.mxu0 %v2784
        %2826 = vmatprep.subr.mxu0 0.0
        %2827 = vmatpush1.msra.mxu0 %v2783
        %2828 = vmatprep.subr.mxu0 0.0
        %2829 = vmatpush2.msra.mxu0 0.0
        %2830 = vmatprep.subr.mxu0 0.0
        %2831 = vmatpush2.msra.mxu0 0.0
        %2832 = vmatprep.subr.mxu0 0.0
        %2833 = vmatpush2.msra.mxu0 0.0
        %2834 = vmatprep.subr.mxu0 0.0
        %2835 = vmatpush2.msra.mxu0 0.0
        %2836 = vmatprep.subr.mxu0 0.0
        %2837 = vmatpush2.msra.mxu0 0.0
        %2838 = vmatprep.subr.mxu0 0.0
        %2839 = vmatpush2.msra.mxu0 0.0
        %2840 = vmatprep.subr.mxu0 0.0
        %2841 = vmatpush2.msra.mxu0 0.0
        %2842 = vmatprep.subr.mxu0 0.0
        %2843 = vmatpush2.msra.mxu0 0.0
        %2844 = vmatprep.subr.mxu0 0.0
        %2845 = vmatpush2.msra.mxu0 0.0
        %2846 = vmatprep.subr.mxu0 0.0
        %2847 = vmatpush2.msra.mxu0 0.0
        %2848 = vmatprep.subr.mxu0 0.0
        %2849 = vmatpush2.msra.mxu0 0.0
        %2850 = vmatprep.subr.mxu0 0.0
        %2851 = vmatpush2.msra.mxu0 0.0
        %2852 = vmatprep.subr.mxu0 0.0
        %2853 = vmatpush2.msra.mxu0 0.0
        %2854 = vmatprep.subr.mxu0 0.0
        %2855 = vmatpush2.msra.mxu0 0.0
        %2856 = vmatprep.subr.mxu0 0.0
        %2857 = vmatpush2.msra.mxu0 0.0
        %2858 = vmatprep.subr.mxu0 0.0
        %2859 = vmatpush2.msra.mxu0 0.0
        %2860 = vmatprep.mubr.f32.mxu0 0.0
        %2861 = vmatmul.mubr.f32.gmra.mxu0 %v2794
        %v2862 = vpop.f32.mrf.mxu0
        %v2863 = vadd.f32 0.0, %v2862
        %v2864 = vpop.f32.mrf.mxu0
        %2865 = vdwg.mxu0
        %v2866 = vadd.f32 %v2781, %v2863
        %s2867 = scalar_lea.vmem %s7, 240
        %v2868 = vld [vmem:[%s2867] sm:$0xff]
        %v2869 = vld [vmem:[%s2867 + $0x8] sm:$0xff]
        %v2870 = vld [vmem:[%s2867 + $0x10] sm:$0xff]
        %v2871 = vld [vmem:[%s2867 + $0x18] sm:$0xff]
        %v2872 = vld [vmem:[%s2867 + $0x20] sm:$0xff]
        %v2873 = vld [vmem:[%s2867 + $0x28] sm:$0xff]
        %v2874 = vld [vmem:[%s2867 + $0x30] sm:$0xff]
        %v2875 = vld [vmem:[%s2867 + $0x38] sm:$0xff]
        %v2876 = vld [vmem:[%s2867 + $0x40] sm:$0xff]
        %v2877 = vld [vmem:[%s2867 + $0x48] sm:$0xff]
        %v2878 = vrot.slane %v2610, 3
        %v2879 = vsel %vm2622, %v2878, 0
        %2881 = vmatprep.subr.mxu0 0.0
        %2882 = vmatpush1.msra.mxu0 0.0
        %2883 = vmatprep.subr.mxu0 0.0
        %2884 = vmatpush1.msra.mxu0 0.0
        %2885 = vmatprep.subr.mxu0 0.0
        %2886 = vmatpush1.msra.mxu0 0.0
        %2887 = vmatprep.subr.mxu0 0.0
        %2888 = vmatpush1.msra.mxu0 0.0
        %2889 = vmatprep.subr.mxu0 0.0
        %2890 = vmatpush1.msra.mxu0 0.0
        %2891 = vmatprep.subr.mxu0 0.0
        %2892 = vmatpush1.msra.mxu0 0.0
        %2893 = vmatprep.subr.mxu0 0.0
        %2894 = vmatpush1.msra.mxu0 %v2877
        %2895 = vmatprep.subr.mxu0 0.0
        %2896 = vmatpush1.msra.mxu0 %v2876
        %2897 = vmatprep.subr.mxu0 0.0
        %2898 = vmatpush1.msra.mxu0 %v2875
        %2899 = vmatprep.subr.mxu0 0.0
        %2900 = vmatpush1.msra.mxu0 %v2874
        %2901 = vmatprep.subr.mxu0 0.0
        %2902 = vmatpush1.msra.mxu0 %v2873
        %2903 = vmatprep.subr.mxu0 0.0
        %2904 = vmatpush1.msra.mxu0 %v2872
        %2905 = vmatprep.subr.mxu0 0.0
        %2906 = vmatpush1.msra.mxu0 %v2871
        %2907 = vmatprep.subr.mxu0 0.0
        %2908 = vmatpush1.msra.mxu0 %v2870
        %2909 = vmatprep.subr.mxu0 0.0
        %2910 = vmatpush1.msra.mxu0 %v2869
        %2911 = vmatprep.subr.mxu0 0.0
        %2912 = vmatpush1.msra.mxu0 %v2868
        %2913 = vmatprep.subr.mxu0 0.0
        %2914 = vmatpush2.msra.mxu0 0.0
        %2915 = vmatprep.subr.mxu0 0.0
        %2916 = vmatpush2.msra.mxu0 0.0
        %2917 = vmatprep.subr.mxu0 0.0
        %2918 = vmatpush2.msra.mxu0 0.0
        %2919 = vmatprep.subr.mxu0 0.0
        %2920 = vmatpush2.msra.mxu0 0.0
        %2921 = vmatprep.subr.mxu0 0.0
        %2922 = vmatpush2.msra.mxu0 0.0
        %2923 = vmatprep.subr.mxu0 0.0
        %2924 = vmatpush2.msra.mxu0 0.0
        %2925 = vmatprep.subr.mxu0 0.0
        %2926 = vmatpush2.msra.mxu0 0.0
        %2927 = vmatprep.subr.mxu0 0.0
        %2928 = vmatpush2.msra.mxu0 0.0
        %2929 = vmatprep.subr.mxu0 0.0
        %2930 = vmatpush2.msra.mxu0 0.0
        %2931 = vmatprep.subr.mxu0 0.0
        %2932 = vmatpush2.msra.mxu0 0.0
        %2933 = vmatprep.subr.mxu0 0.0
        %2934 = vmatpush2.msra.mxu0 0.0
        %2935 = vmatprep.subr.mxu0 0.0
        %2936 = vmatpush2.msra.mxu0 0.0
        %2937 = vmatprep.subr.mxu0 0.0
        %2938 = vmatpush2.msra.mxu0 0.0
        %2939 = vmatprep.subr.mxu0 0.0
        %2940 = vmatpush2.msra.mxu0 0.0
        %2941 = vmatprep.subr.mxu0 0.0
        %2942 = vmatpush2.msra.mxu0 0.0
        %2943 = vmatprep.subr.mxu0 0.0
        %2944 = vmatpush2.msra.mxu0 0.0
        %2945 = vmatprep.mubr.f32.mxu0 0.0
        %2946 = vmatmul.mubr.f32.gmra.mxu0 %v2879
        %v2947 = vpop.f32.mrf.mxu0
        %v2948 = vadd.f32 0.0, %v2947
        %v2949 = vpop.f32.mrf.mxu0
        %2950 = vdwg.mxu0
        %v2951 = vadd.f32 %v2866, %v2948
        %vm2952 = vcmask 73728
        %2953 = vst.msk [vmem:[%s324] sm:$0x1] %vm2952, %v2951
        %s2954 = sand.u32 %s225, 1
        %s2955 = scalar_lea.sflag [#allocation3], %s2954
        %s2956 = sand.u32 %s225, 1
        %s2957 = scalar_lea.vmem [#allocation2], %s2956
        // Predicated region
        $region57: #{cnet_forward.1} parent=55 // pred_check
          %p2958 = pneg %p235
        $region58: #{cnet_forward.1} parent=55 // pred_check_branch
          %2960 = sbr.rel (%p2958) target = $region60
        $region59: #{cnet_forward.1} parent=55 // pred_region
          %s2962 = ssub.s32 16, 16
          %2963 = vsyncadd %s2955, %s2962
          %s2964 = smul.addr %s23, 16
          %s2965 = scalar_lea.hbm %s9, %s2964
          %s2967 = sshll.u32 %s2957, 4
          %s2968 = int_to_ptr.vmem [resolvable:$true] %s2967
          %2970 = dma.vmem_to_hbm [thread:$0]  %s2968, 16, %s2965, %s2955
        $region60: #{cnet_forward.1} parent=55 // pred_fallthru
          _
      $region56: #{cnet_forward.1} parent=5 // pred_fallthru
        _
      %p2971 = scmp.le.s32.totalorder 2, %s18
      // Predicated region
      $region61: #{cnet_forward.1} parent=5 // pred_check
        %p2972 = pneg %p2971
      $region62: #{cnet_forward.1} parent=5 // pred_check_branch
        %2974 = sbr.rel (%p2972) target = $region64
      $region63: #{cnet_forward.1} parent=5 // pred_region
        %s2975 = ssub.s32 %s18, 2
        // Predicated region
        $region65: #{cnet_forward.1} parent=63 // pred_check
          %p2976 = pneg %p241
        $region66: #{cnet_forward.1} parent=63 // pred_check_branch
          %2978 = sbr.rel (%p2976) target = $region68
        $region67: #{cnet_forward.1} parent=63 // pred_region
          %s2979 = sand.u32 %s226, 1
          %s2980 = scalar_lea.sflag [#allocation3], %s2979
          %s2981 = sand.u32 %s226, 1
          %s2982 = scalar_lea.vmem [#allocation2], %s2981
          %2983 = dma.done %s2980, 16
        $region68: #{cnet_forward.1} parent=63 // pred_fallthru
          _
      $region64: #{cnet_forward.1} parent=5 // pred_fallthru
        _
    $region6: #{cnet_forward.1} parent=1 // loop_footer
      %s22 = sadd.s32 1, %s18
    $region7: #{cnet_forward.1} parent=1 // loop_footer_branch
      %17 = sbr.rel target = $region3
    $region8: #{cnet_forward.1} parent=1 // loop_exit
      _
    %2984 = vsyncpa [#allocation3], 1
    %s2985 = scalar_lea.sflag [#allocation3], 1
    %2986 = vsyncpa %s2985, 1

</llo_original>
